<compile_context>
chip_gen: v7x
topology: tpu7x:2x2x1
jax: 0.10.0
libtpu: 0.0.40
codegen_flags: <defaults>
</compile_context>

<pallas_src>
import jax
import jax.numpy as jnp
from jax.experimental import pallas as pl
from jax.experimental.pallas import tpu as pltpu


def _mlp_kernel(x_ref, w1_ref, b1_ref, w2_ref, b2_ref, o_ref):
    # fc1 on the MXU in f32 (exact parity with the f32 PyTorch model).
    h = jnp.dot(x_ref[...], w1_ref[...], preferred_element_type=jnp.float32)
    # bias + ReLU in f32 on the VPU.
    h = jnp.maximum(h + b1_ref[...], 0.0)
    # fc2 (H -> 1): VPU multiply + XLU lane reduction; w2 passed as a (1, H) row.
    z = jnp.sum(h * w2_ref[...], axis=-1) + b2_ref[0, 0]          # (TB,)
    # exact sigmoid: exp on the EUP + exact divide (kernel is DMA/overhead bound).
    s = 1.0 / (1.0 + jnp.exp(-z))                                 # (TB,)
    # lane-dense store: batch rows sit on the lane axis of the (1, TB) block.
    o_ref[...] = s.reshape(1, -1).astype(o_ref.dtype)


def _choose_batch_tile(batch, requested):
    """Batch tile: multiple of 128 (lane-dense output), <= lane-aligned batch,
    and small enough that the grid has >= 2 steps when the batch allows it
    (v7x has 2 TensorCores sharing the 'parallel' grid axis)."""
    padded_b = pl.cdiv(batch, 128) * 128
    blk = min(requested, padded_b)
    if padded_b >= 256:
        blk = min(blk, pl.cdiv(padded_b, 2))
    blk = max(128, (blk // 128) * 128)
    return blk


def neural_net_forward(x, w1, b1, w2, b2, *, block_b=2048):
    """sigmoid(relu(x @ w1 + b1) @ w2 + b2).

    x: (B, F) f32; w1: (F, H); b1: (1, H); w2: (H, 1); b2: (1, 1).
    Returns (B, 1) f32.
    """
    B, F = x.shape
    H = w1.shape[1]

    blk = _choose_batch_tile(B, block_b)
    grid_b = pl.cdiv(B, blk)

    x = x.astype(jnp.float32)
    w1 = w1.astype(jnp.float32)
    b1_row = b1.reshape(1, H).astype(jnp.float32)
    w2_row = w2.reshape(1, H).astype(jnp.float32)
    b2_s = b2.reshape(1, 1).astype(jnp.float32)

    cost = pl.CostEstimate(
        flops=2 * B * H * (F + 1),
        transcendentals=B,                                   # exp per row
        bytes_accessed=(B * F * 4                            # x (f32 stream)
                        + B * 4                              # out (f32)
                        + F * H * 4 + 2 * H * 4 + 4),        # weights/biases
    )

    out_row = pl.pallas_call(
        _mlp_kernel,
        out_shape=jax.ShapeDtypeStruct((1, B), jnp.float32),
        grid=(grid_b,),
        in_specs=[
            # x: one batch tile per grid step (pipelined / double-buffered);
            # the final partial tile is handled by Pallas' block masking.
            pl.BlockSpec((blk, F), lambda i: (i, 0)),
            # Weights / biases: constant index_map -> stay resident in VMEM.
            pl.BlockSpec((F, H), lambda i: (0, 0)),
            pl.BlockSpec((1, H), lambda i: (0, 0)),
            pl.BlockSpec((1, H), lambda i: (0, 0)),
            # b2: scalar kept in SMEM (no padded VMEM tile / extra DMA buffers).
            pl.BlockSpec(memory_space=pltpu.SMEM),
        ],
        # Lane-dense output: (1, B) with one (1, TB) row per grid step.
        out_specs=pl.BlockSpec((1, blk), lambda i: (0, i)),
        compiler_params=pltpu.CompilerParams(
            dimension_semantics=("parallel",),
        ),
        cost_estimate=cost,
    )(x, w1, b1_row, w2_row, b2_s)

    # (1, B) -> (B, 1).
    return out_row.reshape(B, 1)


def init_params(key, input_size, hidden_size, output_size):
    """Deterministic init matching nn.Linear's U(-1/sqrt(fan_in), 1/sqrt(fan_in))."""
    k1, k2, k3, k4 = jax.random.split(key, 4)
    lim1 = 1.0 / jnp.sqrt(jnp.float32(input_size))
    lim2 = 1.0 / jnp.sqrt(jnp.float32(hidden_size))
    w1 = jax.random.uniform(k1, (input_size, hidden_size), jnp.float32, -lim1, lim1)
    b1 = jax.random.uniform(k2, (1, hidden_size), jnp.float32, -lim1, lim1)
    w2 = jax.random.uniform(k3, (hidden_size, output_size), jnp.float32, -lim2, lim2)
    b2 = jax.random.uniform(k4, (1, output_size), jnp.float32, -lim2, lim2)
    return w1, b1, w2, b2


if __name__ == "__main__":
    # Breast-cancer dataset has 30 features; hidden_size=64, output_size=1.
    # Batch of 500 with a 256-row tile -> 2 grid steps + a ragged final tile.
    batch, input_size, hidden_size, output_size = 500, 30, 64, 1

    key = jax.random.PRNGKey(0)
    kx, kp = jax.random.split(key)
    x = jax.random.normal(kx, (batch, input_size), dtype=jnp.float32)
    w1, b1, w2, b2 = init_params(kp, input_size, hidden_size, output_size)

    out = neural_net_forward(x, w1, b1, w2, b2, block_b=256)
    out = jax.block_until_ready(out)

    # Reference in plain f32 JAX (matches the f32 PyTorch forward).
    h_ref = jnp.maximum(x @ w1 + b1, 0.0)
    ref = jax.nn.sigmoid(h_ref @ w2 + b2)

    assert out.shape == (batch, output_size)
    assert jnp.allclose(out, ref, atol=5e-3, rtol=5e-3), float(
        jnp.max(jnp.abs(out - ref))
    )

    print("KERNEL_OK")
</pallas_src>

<mosaic_0001>
module attributes {stable_mosaic.version = 11 : i64} {
  func.func @_mlp_kernel(%arg0: i32, %arg1: memref<256x30xf32, #tpu.memory_space<vmem>>, %arg2: memref<30x64xf32, #tpu.memory_space<vmem>>, %arg3: memref<1x64xf32, #tpu.memory_space<vmem>>, %arg4: memref<1x64xf32, #tpu.memory_space<vmem>>, %arg5: memref<1x1xf32, #tpu.memory_space<smem>>, %arg6: memref<1x256xf32, #tpu.memory_space<vmem>>) attributes {dimension_semantics = [#tpu.dimension_semantics<parallel>], iteration_bounds = array<i64: 2>, scalar_prefetch = 0 : i64, scratch_operands = 0 : i64, tpu.core_type = #tpu.core_type<tc>, window_params = [{transform_indices = @transform_0, window_bounds = array<i64: 256, 30>}, {pipeline_mode = #tpu.pipeline_mode<synchronous>, transform_indices = @transform_1, window_bounds = array<i64: 30, 64>}, {pipeline_mode = #tpu.pipeline_mode<synchronous>, transform_indices = @transform_2, window_bounds = array<i64: 1, 64>}, {pipeline_mode = #tpu.pipeline_mode<synchronous>, transform_indices = @transform_3, window_bounds = array<i64: 1, 64>}, {transform_indices = @transform_4, window_bounds = array<i64: 1, 1>}, {transform_indices = @transform_5, window_bounds = array<i64: 1, 256>}]} {
    %c0 = arith.constant 0 : index
    %c0_0 = arith.constant 0 : index
    %0 = vector.load %arg1[%c0, %c0_0] : memref<256x30xf32, #tpu.memory_space<vmem>>, vector<256x30xf32>
    %c0_1 = arith.constant 0 : index
    %c0_2 = arith.constant 0 : index
    %1 = vector.load %arg2[%c0_1, %c0_2] : memref<30x64xf32, #tpu.memory_space<vmem>>, vector<30x64xf32>
    %cst = arith.constant dense<0.000000e+00> : vector<256x64xf32>
    %2 = tpu.matmul %0, %1, %cst {dimension_numbers = #tpu.dot_dimension_numbers<[1], [0], [0], [1], [0, 0, 1, 1], [], []>} : vector<256x30xf32>, vector<30x64xf32>, vector<256x64xf32> -> vector<256x64xf32>
    %c0_3 = arith.constant 0 : index
    %c0_4 = arith.constant 0 : index
    %3 = vector.load %arg3[%c0_3, %c0_4] : memref<1x64xf32, #tpu.memory_space<vmem>>, vector<1x64xf32>
    %4 = vector.broadcast %3 : vector<1x64xf32> to vector<256x64xf32>
    %5 = arith.addf %2, %4 : vector<256x64xf32>
    %cst_5 = arith.constant 0.000000e+00 : f32
    %6 = vector.broadcast %cst_5 : f32 to vector<256x64xf32>
    %7 = arith.maximumf %5, %6 : vector<256x64xf32>
    %c0_6 = arith.constant 0 : index
    %c0_7 = arith.constant 0 : index
    %8 = vector.load %arg4[%c0_6, %c0_7] : memref<1x64xf32, #tpu.memory_space<vmem>>, vector<1x64xf32>
    %9 = vector.broadcast %8 : vector<1x64xf32> to vector<256x64xf32>
    %10 = arith.mulf %7, %9 : vector<256x64xf32>
    %cst_8 = arith.constant dense<0.000000e+00> : vector<256xf32>
    %11 = vector.multi_reduction <add>, %10, %cst_8 [1] : vector<256x64xf32> to vector<256xf32>
    %c0_9 = arith.constant 0 : index
    %c0_10 = arith.constant 0 : index
    %12 = memref.load %arg5[%c0_9, %c0_10] : memref<1x1xf32, #tpu.memory_space<smem>>
    %13 = vector.broadcast %12 : f32 to vector<256xf32>
    %14 = arith.addf %11, %13 : vector<256xf32>
    %cst_11 = arith.constant 0.000000e+00 : f32
    %15 = vector.broadcast %cst_11 : f32 to vector<256xf32>
    %16 = arith.subf %15, %14 : vector<256xf32>
    %17 = math.exp %16 : vector<256xf32>
    %cst_12 = arith.constant 1.000000e+00 : f32
    %18 = vector.broadcast %cst_12 : f32 to vector<256xf32>
    %19 = arith.addf %18, %17 : vector<256xf32>
    %cst_13 = arith.constant 1.000000e+00 : f32
    %20 = vector.broadcast %cst_13 : f32 to vector<256xf32>
    %21 = arith.divf %20, %19 : vector<256xf32>
    %22 = vector.shape_cast %21 : vector<256xf32> to vector<1x256xf32>
    %c0_14 = arith.constant 0 : index
    %c0_15 = arith.constant 0 : index
    %23 = vector.load %arg6[%c0_14, %c0_15] : memref<1x256xf32, #tpu.memory_space<vmem>>, vector<1x256xf32>
    tpu.vector_store %arg6[%c0_14, %c0_15], %22 {strides = array<i32>} : memref<1x256xf32, #tpu.memory_space<vmem>>, vector<1x256xf32>,
    return
  }
  func.func @transform_0(%arg0: i32) -> (i32, i32) {
    %c0_i32 = arith.constant 0 : i32
    %c0_i32_0 = arith.constant 0 : i32
    return %arg0, %c0_i32 : i32, i32
  }
  func.func @transform_1(%arg0: i32) -> (i32, i32) {
    %c0_i32 = arith.constant 0 : i32
    %c0_i32_0 = arith.constant 0 : i32
    %c0_i32_1 = arith.constant 0 : i32
    return %c0_i32, %c0_i32_0 : i32, i32
  }
  func.func @transform_2(%arg0: i32) -> (i32, i32) {
    %c0_i32 = arith.constant 0 : i32
    %c0_i32_0 = arith.constant 0 : i32
    %c0_i32_1 = arith.constant 0 : i32
    return %c0_i32, %c0_i32_0 : i32, i32
  }
  func.func @transform_3(%arg0: i32) -> (i32, i32) {
    %c0_i32 = arith.constant 0 : i32
    %c0_i32_0 = arith.constant 0 : i32
    %c0_i32_1 = arith.constant 0 : i32
    return %c0_i32, %c0_i32_0 : i32, i32
  }
  func.func @transform_4(%arg0: i32) -> (i32, i32) {
    %c0_i32 = arith.constant 0 : i32
    %c0_i32_0 = arith.constant 0 : i32
    %c0_i32_1 = arith.constant 0 : i32
    return %c0_i32, %c0_i32_0 : i32, i32
  }
  func.func @transform_5(%arg0: i32) -> (i32, i32) {
    %c0_i32 = arith.constant 0 : i32
    %c0_i32_0 = arith.constant 0 : i32
    return %c0_i32, %arg0 : i32, i32
  }
}

</mosaic_0001>

<llo_original>
// kernel: tpu_custom_call.1
$region0: #{tpu_custom_call.1}
  #allocation0 [shape = 'u32[]', space=smem, size = 0x4, offset = 0x4, fixed_abs, tag = 'smem constant byte address 0x4 - core index']
  #allocation1 [shape = 'u32[144,128]{1,0:T(1,128)}', space=vmem, size = 0x12000, scoped, tag = 'internal scratch']
  #allocation2 [shape = 'f32[1,1]{1,0:T(1,128)S(6)}', space=smem, size = 0x200, scoped, tag = 'scoped memory for tpu_custom_call.1']
  %s0 = inlined_call_operand.vmem [shape: f32[500,30], index: 0, kind: input, shape index: {}]
  %s1 = inlined_call_operand.vmem [shape: f32[30,64], index: 1, kind: input, shape index: {}]
  %s2 = inlined_call_operand.vmem [shape: f32[1,64], index: 2, kind: input, shape index: {}]
  %s3 = inlined_call_operand.vmem [shape: f32[1,64], index: 3, kind: input, shape index: {}]
  %s4 = inlined_call_operand.<no memory space> [shape: f32[1,1], index: 4, kind: input, shape index: {}]
  %s5 = inlined_call_operand.hbm [shape: f32[1,500], index: 5, kind: output, shape index: {}]
  %s6 = sld [smem:[#allocation0]]
  $region53: #{tpu_custom_call.1} parent=0
    _
  %s8 = ssub.s32 1, %s6
  %s9 = scalar_select 0, %s8, %s6
  %10 = sst [smem:[#allocation2]] %s4
  $region1: #{tpu_custom_call.1} parent=0
    #allocation3 [shape = 'u8[2048]{0}', space=vmem, size = 0x800, scoped, tag = 'output window, operand 0']
    #allocation4 [shape = 's32[2]{0}', space=sflag, size = 0x8, scoped, tag = 'scoped memory for tpu_custom_call.1']
    %11 = vsyncpa [#allocation4], 0
    %s12 = scalar_lea.sflag [#allocation4], 1
    %13 = vsyncpa %s12, 0
    loop: start=0, step=1, limit=4
    $region2: #{tpu_custom_call.1} parent=1 // loop_pre_header
      _
    $region3: #{tpu_custom_call.1} parent=1 // loop_header
      %s15 = sphi 0, %s19
      %p16 = scmp.ge.s32.totalorder %s15, 4
      %s25 = sphi 0, %s27
      %s28 = sphi 0, %s25
      %s29 = sphi 0, %s28
      %s45 = sphi 0, %s29
      %s49 = sphi 0, %s49
      %s51 = sphi 0, %s49
      %s52 = sphi 0, %s51
      %s66 = sphi 0, %s52
      %s70 = sphi 0, %s70
      %s72 = sphi 0, %s70
      %s73 = sphi 0, %s72
      %s87 = sphi 0, %s73
      %s91 = sphi 0, %s91
      %s93 = sphi 0, %s91
      %s94 = sphi 0, %s93
      %s108 = sphi 0, %s94
      %s112 = sphi 0, %s112
      %s114 = sphi 0, %s112
      %s115 = sphi 0, %s114
      %s129 = sphi 0, %s115
      %s135 = sphi 0, %s137
      %s138 = sphi 0, %s135
      %s139 = sphi 0, %s138
      %s155 = sphi 0, %s139
    $region4: #{tpu_custom_call.1} parent=1 // loop_header_branch
      %18 = sbr.rel (%p16) target = $region8
    $region5: #{tpu_custom_call.1} parent=1 // loop_body
      %s20 = ssub.s32 %s15, 1
      %s21 = ssub.s32 %s15, 2
      %s22 = sadd.s32 %s15, 1
      %s23 = ssub.s32 %s15, %s22
      %p24 = scmp.eq.s32.totalorder %s23, 0
      %s26 = sadd.s32 %s25, 1
      %s27 = scalar_select %p24, %s25, %s26
      %p30 = pneg %p24
      %p31 = scmp.eq.s32.totalorder %s15, 1
      %p32 = por %p30, %p31
      %p33 = scmp.ne.s32.totalorder %s25, %s28
      %p34 = scmp.eq.s32.totalorder %s15, 0
      %p35 = por %p33, %p34
      %p36 = scmp.ne.s32.totalorder %s25, %s28
      %p37 = scmp.eq.s32.totalorder %s20, 1
      %p38 = por %p36, %p37
      %p39 = scmp.ne.s32.totalorder %s28, %s29
      %p40 = scmp.eq.s32.totalorder %s20, 0
      %p41 = por %p39, %p40
      %p42 = scmp.ne.s32.totalorder %s28, %s29
      %p43 = scmp.eq.s32.totalorder %s21, 1
      %p44 = por %p42, %p43
      %p46 = scmp.ne.s32.totalorder %s29, %s45
      %p47 = scmp.eq.s32.totalorder %s21, 0
      %p48 = por %p46, %p47
      %s50 = sadd.s32 %s49, 1
      %p53 = scmp.eq.s32.totalorder %s15, 1
      %p54 = scmp.ne.s32.totalorder %s49, %s51
      %p55 = scmp.eq.s32.totalorder %s15, 0
      %p56 = por %p54, %p55
      %p57 = scmp.ne.s32.totalorder %s49, %s51
      %p58 = scmp.eq.s32.totalorder %s20, 1
      %p59 = por %p57, %p58
      %p60 = scmp.ne.s32.totalorder %s51, %s52
      %p61 = scmp.eq.s32.totalorder %s20, 0
      %p62 = por %p60, %p61
      %p63 = scmp.ne.s32.totalorder %s51, %s52
      %p64 = scmp.eq.s32.totalorder %s21, 1
      %p65 = por %p63, %p64
      %p67 = scmp.ne.s32.totalorder %s52, %s66
      %p68 = scmp.eq.s32.totalorder %s21, 0
      %p69 = por %p67, %p68
      %s71 = sadd.s32 %s70, 1
      %p74 = scmp.eq.s32.totalorder %s15, 1
      %p75 = scmp.ne.s32.totalorder %s70, %s72
      %p76 = scmp.eq.s32.totalorder %s15, 0
      %p77 = por %p75, %p76
      %p78 = scmp.ne.s32.totalorder %s70, %s72
      %p79 = scmp.eq.s32.totalorder %s20, 1
      %p80 = por %p78, %p79
      %p81 = scmp.ne.s32.totalorder %s72, %s73
      %p82 = scmp.eq.s32.totalorder %s20, 0
      %p83 = por %p81, %p82
      %p84 = scmp.ne.s32.totalorder %s72, %s73
      %p85 = scmp.eq.s32.totalorder %s21, 1
      %p86 = por %p84, %p85
      %p88 = scmp.ne.s32.totalorder %s73, %s87
      %p89 = scmp.eq.s32.totalorder %s21, 0
      %p90 = por %p88, %p89
      %s92 = sadd.s32 %s91, 1
      %p95 = scmp.eq.s32.totalorder %s15, 1
      %p96 = scmp.ne.s32.totalorder %s91, %s93
      %p97 = scmp.eq.s32.totalorder %s15, 0
      %p98 = por %p96, %p97
      %p99 = scmp.ne.s32.totalorder %s91, %s93
      %p100 = scmp.eq.s32.totalorder %s20, 1
      %p101 = por %p99, %p100
      %p102 = scmp.ne.s32.totalorder %s93, %s94
      %p103 = scmp.eq.s32.totalorder %s20, 0
      %p104 = por %p102, %p103
      %p105 = scmp.ne.s32.totalorder %s93, %s94
      %p106 = scmp.eq.s32.totalorder %s21, 1
      %p107 = por %p105, %p106
      %p109 = scmp.ne.s32.totalorder %s94, %s108
      %p110 = scmp.eq.s32.totalorder %s21, 0
      %p111 = por %p109, %p110
      %s113 = sadd.s32 %s112, 1
      %p116 = scmp.eq.s32.totalorder %s15, 1
      %p117 = scmp.ne.s32.totalorder %s112, %s114
      %p118 = scmp.eq.s32.totalorder %s15, 0
      %p119 = por %p117, %p118
      %p120 = scmp.ne.s32.totalorder %s112, %s114
      %p121 = scmp.eq.s32.totalorder %s20, 1
      %p122 = por %p120, %p121
      %p123 = scmp.ne.s32.totalorder %s114, %s115
      %p124 = scmp.eq.s32.totalorder %s20, 0
      %p125 = por %p123, %p124
      %p126 = scmp.ne.s32.totalorder %s114, %s115
      %p127 = scmp.eq.s32.totalorder %s21, 1
      %p128 = por %p126, %p127
      %p130 = scmp.ne.s32.totalorder %s115, %s129
      %p131 = scmp.eq.s32.totalorder %s21, 0
      %p132 = por %p130, %p131
      %s133 = ssub.s32 %s15, %s22
      %p134 = scmp.eq.s32.totalorder %s133, 0
      %s136 = sadd.s32 %s135, 1
      %s137 = scalar_select %p134, %s135, %s136
      %p140 = pneg %p134
      %p141 = scmp.eq.s32.totalorder %s15, 1
      %p142 = por %p140, %p141
      %p143 = scmp.ne.s32.totalorder %s135, %s138
      %p144 = scmp.eq.s32.totalorder %s15, 0
      %p145 = por %p143, %p144
      %p146 = scmp.ne.s32.totalorder %s135, %s138
      %p147 = scmp.eq.s32.totalorder %s20, 1
      %p148 = por %p146, %p147
      %p149 = scmp.ne.s32.totalorder %s138, %s139
      %p150 = scmp.eq.s32.totalorder %s20, 0
      %p151 = por %p149, %p150
      %p152 = scmp.ne.s32.totalorder %s138, %s139
      %p153 = scmp.eq.s32.totalorder %s21, 1
      %p154 = por %p152, %p153
      %p156 = scmp.ne.s32.totalorder %s139, %s155
      %p157 = scmp.eq.s32.totalorder %s21, 0
      %p158 = por %p156, %p157
      %p159 = scmp.le.s32.totalorder 1, %s15
      %p160 = scmp.lt.s32.totalorder %s15, 3
      %p161 = pnand %p159, %p160
      %p162 = pneg %p161
      // Predicated region
      $region9: #{tpu_custom_call.1} parent=5 // pred_check
        _
      $region10: #{tpu_custom_call.1} parent=5 // pred_check_branch
        %164 = sbr.rel (%p161) target = $region12
      $region11: #{tpu_custom_call.1} parent=5 // pred_region
        %s165 = ssub.s32 %s15, 1
        // Predicated region
        $region13: #{tpu_custom_call.1} parent=11 // pred_check
          %p166 = pneg %p62
        $region14: #{tpu_custom_call.1} parent=11 // pred_check_branch
          %168 = sbr.rel (%p166) target = $region16
        $region15: #{tpu_custom_call.1} parent=11 // pred_region
          _
        $region16: #{tpu_custom_call.1} parent=11 // pred_fallthru
          _
        // Predicated region
        $region17: #{tpu_custom_call.1} parent=11 // pred_check
          %p169 = pneg %p83
        $region18: #{tpu_custom_call.1} parent=11 // pred_check_branch
          %171 = sbr.rel (%p169) target = $region20
        $region19: #{tpu_custom_call.1} parent=11 // pred_region
          _
        $region20: #{tpu_custom_call.1} parent=11 // pred_fallthru
          _
        // Predicated region
        $region21: #{tpu_custom_call.1} parent=11 // pred_check
          %p172 = pneg %p104
        $region22: #{tpu_custom_call.1} parent=11 // pred_check_branch
          %174 = sbr.rel (%p172) target = $region24
        $region23: #{tpu_custom_call.1} parent=11 // pred_region
          _
        $region24: #{tpu_custom_call.1} parent=11 // pred_fallthru
          _
        // Predicated region
        $region25: #{tpu_custom_call.1} parent=11 // pred_check
          %p175 = pneg %p125
        $region26: #{tpu_custom_call.1} parent=11 // pred_check_branch
          %177 = sbr.rel (%p175) target = $region28
        $region27: #{tpu_custom_call.1} parent=11 // pred_region
          _
        $region28: #{tpu_custom_call.1} parent=11 // pred_fallthru
          _
      $region12: #{tpu_custom_call.1} parent=5 // pred_fallthru
        _
      %p178 = scmp.lt.s32.totalorder %s15, 2
      // Predicated region
      $region29: #{tpu_custom_call.1} parent=5 // pred_check
        %p179 = pneg %p178
      $region30: #{tpu_custom_call.1} parent=5 // pred_check_branch
        %181 = sbr.rel (%p179) target = $region32
      $region31: #{tpu_custom_call.1} parent=5 // pred_region
        // Predicated region
        $region33: #{tpu_custom_call.1} parent=31 // pred_check
          %p182 = pneg %p35
        $region34: #{tpu_custom_call.1} parent=31 // pred_check_branch
          %184 = sbr.rel (%p182) target = $region36
        $region35: #{tpu_custom_call.1} parent=31 // pred_region
          %s185 = smul.u32 32, %s15
          %s186 = ssub.s32 63, %s185
          %p187 = scmp.lt.s32.totalorder %s186, 32
          %s188 = scalar_select %p187, %s186, 32
          %s189 = smul.u32 128, %s188
          %p190 = scmp.lt.s32.totalorder %s185, 62
          %s191 = scalar_select %p190, %s185, 62
          %s192 = smul.addr %s191, 8
          %s193 = scalar_lea.vmem %s0, %s192
          %s194 = smul.u32 32, %s15
          %s195 = ssub.s32 63, %s194
          %p196 = scmp.lt.s32.totalorder %s195, 32
          %s197 = scalar_select %p196, %s195, 32
          %s198 = smul.u32 128, %s197
        $region36: #{tpu_custom_call.1} parent=31 // pred_fallthru
          _
      $region32: #{tpu_custom_call.1} parent=5 // pred_fallthru
        _
      %p199 = scmp.le.s32.totalorder 1, %s15
      %p200 = scmp.lt.s32.totalorder %s15, 3
      %p201 = pnand %p199, %p200
      %p202 = pneg %p201
      // Predicated region
      $region37: #{tpu_custom_call.1} parent=5 // pred_check
        _
      $region38: #{tpu_custom_call.1} parent=5 // pred_check_branch
        %204 = sbr.rel (%p201) target = $region40
      $region39: #{tpu_custom_call.1} parent=5 // pred_region
        %s205 = ssub.s32 %s15, 1
        %s206 = smul.u32 32, %s20
        %s207 = ssub.s32 63, %s206
        %p208 = scmp.lt.s32.totalorder %s207, 32
        %s209 = scalar_select %p208, %s207, 32
        %s210 = smul.u32 128, %s209
        %p211 = scmp.lt.s32.totalorder %s206, 62
        %s212 = scalar_select %p211, %s206, 62
        %s213 = smul.addr %s212, 8
        %s214 = scalar_lea.vmem %s0, %s213
        %p215 = pneg %p41
        %p216 = pneg %p38
        %p217 = pneg %p62
        %p218 = pneg %p59
        %p219 = pneg %p83
        %p220 = pneg %p80
        %p221 = pneg %p104
        %p222 = pneg %p101
        %p223 = pneg %p125
        %p224 = pneg %p122
        %p225 = pneg %p151
        %p226 = pneg %p148
        %s227 = sand.u32 %s138, 1
        %s228 = scalar_lea.sflag [#allocation4], %s227
        %s229 = sand.u32 %s138, 1
        %s230 = smul.addr %s229, 2
        %s231 = scalar_lea.vmem [#allocation3], %s230
        %s232 = smul.u32 32, %s20
        %s233 = ssub.s32 63, %s232
        %p234 = scmp.lt.s32.totalorder %s233, 32
        %s235 = scalar_select %p234, %s233, 32
        %s236 = smul.u32 128, %s235
        %p237 = scmp.lt.s32.totalorder %s232, 62
        %s238 = scalar_select %p237, %s232, 62
        %s239 = smul.addr %s238, 8
        %s240 = scalar_lea.vmem %s0, %s239
        %s241 = smul.u32 32, %s20
        %s242 = ssub.s32 63, %s241
        %p243 = scmp.lt.s32.totalorder %s242, 32
        %s244 = scalar_select %p243, %s242, 32
        %s245 = smul.u32 128, %s244
        %s246 = smul.u32 2, %s20
        %v247 = vld [vmem:[%s240] sm:$0xff]
        %v248 = vld [vmem:[%s240 + $0x8] sm:$0xff]
        %v249 = vld [vmem:[%s240 + $0x10] sm:$0xff]
        %v250 = vld [vmem:[%s240 + $0x18] sm:$0xff]
        %v251 = vld [vmem:[%s240 + $0x20] sm:$0xff]
        %v252 = vld [vmem:[%s240 + $0x28] sm:$0xff]
        %v253 = vld [vmem:[%s240 + $0x30] sm:$0xff]
        %v254 = vld [vmem:[%s240 + $0x38] sm:$0xff]
        %v255 = vld [vmem:[%s240 + $0x40] sm:$0xff]
        %v256 = vld [vmem:[%s240 + $0x48] sm:$0xff]
        %v257 = vld [vmem:[%s240 + $0x50] sm:$0xff]
        %v258 = vld [vmem:[%s240 + $0x58] sm:$0xff]
        %v259 = vld [vmem:[%s240 + $0x60] sm:$0xff]
        %v260 = vld [vmem:[%s240 + $0x68] sm:$0xff]
        %v261 = vld [vmem:[%s240 + $0x70] sm:$0xff]
        %v262 = vld [vmem:[%s240 + $0x78] sm:$0xff]
        %v263 = vld [vmem:[%s240 + $0x80] sm:$0xff]
        %v264 = vld [vmem:[%s240 + $0x88] sm:$0xff]
        %v265 = vld [vmem:[%s240 + $0x90] sm:$0xff]
        %v266 = vld [vmem:[%s240 + $0x98] sm:$0xff]
        %v267 = vld [vmem:[%s240 + $0xa0] sm:$0xff]
        %v268 = vld [vmem:[%s240 + $0xa8] sm:$0xff]
        %v269 = vld [vmem:[%s240 + $0xb0] sm:$0xff]
        %v270 = vld [vmem:[%s240 + $0xb8] sm:$0xff]
        %v271 = vld [vmem:[%s240 + $0xc0] sm:$0xff]
        %v272 = vld [vmem:[%s240 + $0xc8] sm:$0xff]
        %v273 = vld [vmem:[%s240 + $0xd0] sm:$0xff]
        %v274 = vld [vmem:[%s240 + $0xd8] sm:$0xff]
        %v275 = vld [vmem:[%s240 + $0xe0] sm:$0xff]
        %v276 = vld [vmem:[%s240 + $0xe8] sm:$0xff]
        %v277 = vld [vmem:[%s240 + $0xf0] sm:$0xff]
        %v278 = vld [vmem:[%s240 + $0xf8] sm:$0xff]
        %v279 = vld [vmem:[%s1] sm:$0xff]
        %v280 = vld [vmem:[%s1 + $0x8] sm:$0xff]
        %v281 = vld [vmem:[%s1 + $0x10] sm:$0xff]
        %v282 = vld [vmem:[%s1 + $0x18] sm:$0x3f]
        %v283 = vld [vmem:[%s2] sm:$0x1]
        %v285 = vlaneseq
        %v286 = vshrl.u32 %v285, 7
        %v287 = vsub.s32 0, %v286
        %v288 = vrot.slane %v283, %v287
        %vm290 = vcmask 244736
        %v292 = vsel %vm290, %v247, 0
        %v295 = vsel %vm290, %v248, 0
        %v298 = vsel %vm290, %v249, 0
        %v301 = vsel %vm290, %v250, 0
        %v304 = vsel %vm290, %v251, 0
        %v307 = vsel %vm290, %v252, 0
        %v310 = vsel %vm290, %v253, 0
        %v313 = vsel %vm290, %v254, 0
        %v316 = vsel %vm290, %v255, 0
        %v319 = vsel %vm290, %v256, 0
        %v322 = vsel %vm290, %v257, 0
        %v325 = vsel %vm290, %v258, 0
        %v328 = vsel %vm290, %v259, 0
        %v331 = vsel %vm290, %v260, 0
        %v334 = vsel %vm290, %v261, 0
        %v337 = vsel %vm290, %v262, 0
        %v340 = vsel %vm290, %v263, 0
        %v343 = vsel %vm290, %v264, 0
        %v346 = vsel %vm290, %v265, 0
        %v349 = vsel %vm290, %v266, 0
        %v352 = vsel %vm290, %v267, 0
        %v355 = vsel %vm290, %v268, 0
        %v358 = vsel %vm290, %v269, 0
        %v361 = vsel %vm290, %v270, 0
        %v364 = vsel %vm290, %v271, 0
        %v367 = vsel %vm290, %v272, 0
        %v370 = vsel %vm290, %v273, 0
        %v373 = vsel %vm290, %v274, 0
        %v376 = vsel %vm290, %v275, 0
        %v379 = vsel %vm290, %v276, 0
        %v382 = vsel %vm290, %v277, 0
        %v385 = vsel %vm290, %v278, 0
        %vm387 = vcmask 1045504
        %v389 = vsel %vm387, %v282, 0
        %391 = vmatprep.subr.mxu0 0.0
        %392 = vmatpush1.msra.mxu0 %v279
        %393 = vmatprep.subr.mxu0 0.0
        %394 = vmatpush1.msra.mxu0 %v280
        %395 = vmatprep.subr.mxu0 0.0
        %396 = vmatpush1.msra.mxu0 %v281
        %397 = vmatprep.subr.mxu0 0.0
        %398 = vmatpush1.msra.mxu0 %v389
        %399 = vmatprep.subr.mxu0 0.0
        %400 = vmatpush1.msra.mxu0 0.0
        %401 = vmatprep.subr.mxu0 0.0
        %402 = vmatpush1.msra.mxu0 0.0
        %403 = vmatprep.subr.mxu0 0.0
        %404 = vmatpush1.msra.mxu0 0.0
        %405 = vmatprep.subr.mxu0 0.0
        %406 = vmatpush1.msra.mxu0 0.0
        %407 = vmatprep.subr.mxu0 0.0
        %408 = vmatpush1.msra.mxu0 0.0
        %409 = vmatprep.subr.mxu0 0.0
        %410 = vmatpush1.msra.mxu0 0.0
        %411 = vmatprep.subr.mxu0 0.0
        %412 = vmatpush1.msra.mxu0 0.0
        %413 = vmatprep.subr.mxu0 0.0
        %414 = vmatpush1.msra.mxu0 0.0
        %415 = vmatprep.subr.mxu0 0.0
        %416 = vmatpush1.msra.mxu0 0.0
        %417 = vmatprep.subr.mxu0 0.0
        %418 = vmatpush1.msra.mxu0 0.0
        %419 = vmatprep.subr.mxu0 0.0
        %420 = vmatpush1.msra.mxu0 0.0
        %421 = vmatprep.subr.mxu0 0.0
        %422 = vmatpush1.msra.mxu0 0.0
        %423 = vmatprep.subr.mxu0 0.0
        %424 = vmatpush1.msra.mxu0 0.0
        %425 = vmatprep.subr.mxu0 0.0
        %426 = vmatpush1.msra.mxu0 0.0
        %427 = vmatprep.subr.mxu0 0.0
        %428 = vmatpush1.msra.mxu0 0.0
        %429 = vmatprep.subr.mxu0 0.0
        %430 = vmatpush1.msra.mxu0 0.0
        %431 = vmatprep.subr.mxu0 0.0
        %432 = vmatpush1.msra.mxu0 0.0
        %433 = vmatprep.subr.mxu0 0.0
        %434 = vmatpush1.msra.mxu0 0.0
        %435 = vmatprep.subr.mxu0 0.0
        %436 = vmatpush1.msra.mxu0 0.0
        %437 = vmatprep.subr.mxu0 0.0
        %438 = vmatpush1.msra.mxu0 0.0
        %439 = vmatprep.subr.mxu0 0.0
        %440 = vmatpush1.msra.mxu0 0.0
        %441 = vmatprep.subr.mxu0 0.0
        %442 = vmatpush1.msra.mxu0 0.0
        %443 = vmatprep.subr.mxu0 0.0
        %444 = vmatpush1.msra.mxu0 0.0
        %445 = vmatprep.subr.mxu0 0.0
        %446 = vmatpush1.msra.mxu0 0.0
        %447 = vmatprep.subr.mxu0 0.0
        %448 = vmatpush1.msra.mxu0 0.0
        %449 = vmatprep.subr.mxu0 0.0
        %450 = vmatpush1.msra.mxu0 0.0
        %451 = vmatprep.subr.mxu0 0.0
        %452 = vmatpush1.msra.mxu0 0.0
        %453 = vmatprep.subr.mxu0 0.0
        %454 = vmatpush1.msra.mxu0 0.0
        %455 = vmatprep.mubr.f32.mxu0 0.0
        %456 = vmatmul.mubr.f32.gmra.mrb[0].mxu0 %v292
        %v457 = vpop.f32.mrb[0].mxu0
        %v458 = vadd.f32 %v288, %v457
        %v459 = vpop.f32.mrb[0].mxu0
        %460 = vmatprep.mubr.f32.mxu0 0.0
        %461 = vmatmul.mubr.f32.gmra.mrb[0].mxu0 %v295
        %v462 = vpop.f32.mrb[0].mxu0
        %v463 = vadd.f32 %v288, %v462
        %v464 = vpop.f32.mrb[0].mxu0
        %465 = vmatprep.mubr.f32.mxu0 0.0
        %466 = vmatmul.mubr.f32.gmra.mrb[0].mxu0 %v298
        %v467 = vpop.f32.mrb[0].mxu0
        %v468 = vadd.f32 %v288, %v467
        %v469 = vpop.f32.mrb[0].mxu0
        %470 = vmatprep.mubr.f32.mxu0 0.0
        %471 = vmatmul.mubr.f32.gmra.mrb[0].mxu0 %v301
        %v472 = vpop.f32.mrb[0].mxu0
        %v473 = vadd.f32 %v288, %v472
        %v474 = vpop.f32.mrb[0].mxu0
        %475 = vmatprep.mubr.f32.mxu0 0.0
        %476 = vmatmul.mubr.f32.gmra.mrb[0].mxu0 %v304
        %v477 = vpop.f32.mrb[0].mxu0
        %v478 = vadd.f32 %v288, %v477
        %v479 = vpop.f32.mrb[0].mxu0
        %480 = vmatprep.mubr.f32.mxu0 0.0
        %481 = vmatmul.mubr.f32.gmra.mrb[0].mxu0 %v307
        %v482 = vpop.f32.mrb[0].mxu0
        %v483 = vadd.f32 %v288, %v482
        %v484 = vpop.f32.mrb[0].mxu0
        %485 = vmatprep.mubr.f32.mxu0 0.0
        %486 = vmatmul.mubr.f32.gmra.mrb[0].mxu0 %v310
        %v487 = vpop.f32.mrb[0].mxu0
        %v488 = vadd.f32 %v288, %v487
        %v489 = vpop.f32.mrb[0].mxu0
        %490 = vmatprep.mubr.f32.mxu0 0.0
        %491 = vmatmul.mubr.f32.gmra.mrb[0].mxu0 %v313
        %v492 = vpop.f32.mrb[0].mxu0
        %v493 = vadd.f32 %v288, %v492
        %v494 = vpop.f32.mrb[0].mxu0
        %495 = vmatprep.mubr.f32.mxu0 0.0
        %496 = vmatmul.mubr.f32.gmra.mrb[0].mxu0 %v316
        %v497 = vpop.f32.mrb[0].mxu0
        %v498 = vadd.f32 %v288, %v497
        %v499 = vpop.f32.mrb[0].mxu0
        %500 = vmatprep.mubr.f32.mxu0 0.0
        %501 = vmatmul.mubr.f32.gmra.mrb[0].mxu0 %v319
        %v502 = vpop.f32.mrb[0].mxu0
        %v503 = vadd.f32 %v288, %v502
        %v504 = vpop.f32.mrb[0].mxu0
        %505 = vmatprep.mubr.f32.mxu0 0.0
        %506 = vmatmul.mubr.f32.gmra.mrb[0].mxu0 %v322
        %v507 = vpop.f32.mrb[0].mxu0
        %v508 = vadd.f32 %v288, %v507
        %v509 = vpop.f32.mrb[0].mxu0
        %510 = vmatprep.mubr.f32.mxu0 0.0
        %511 = vmatmul.mubr.f32.gmra.mrb[0].mxu0 %v325
        %v512 = vpop.f32.mrb[0].mxu0
        %v513 = vadd.f32 %v288, %v512
        %v514 = vpop.f32.mrb[0].mxu0
        %515 = vmatprep.mubr.f32.mxu0 0.0
        %516 = vmatmul.mubr.f32.gmra.mrb[0].mxu0 %v328
        %v517 = vpop.f32.mrb[0].mxu0
        %v518 = vadd.f32 %v288, %v517
        %v519 = vpop.f32.mrb[0].mxu0
        %520 = vmatprep.mubr.f32.mxu0 0.0
        %521 = vmatmul.mubr.f32.gmra.mrb[0].mxu0 %v331
        %v522 = vpop.f32.mrb[0].mxu0
        %v523 = vadd.f32 %v288, %v522
        %v524 = vpop.f32.mrb[0].mxu0
        %525 = vmatprep.mubr.f32.mxu0 0.0
        %526 = vmatmul.mubr.f32.gmra.mrb[0].mxu0 %v334
        %v527 = vpop.f32.mrb[0].mxu0
        %v528 = vadd.f32 %v288, %v527
        %v529 = vpop.f32.mrb[0].mxu0
        %530 = vmatprep.mubr.f32.mxu0 0.0
        %531 = vmatmul.mubr.f32.gmra.mrb[0].mxu0 %v337
        %v532 = vpop.f32.mrb[0].mxu0
        %v533 = vadd.f32 %v288, %v532
        %v534 = vpop.f32.mrb[0].mxu0
        %535 = vmatprep.mubr.f32.mxu0 0.0
        %536 = vmatmul.mubr.f32.gmra.mrb[0].mxu0 %v340
        %v537 = vpop.f32.mrb[0].mxu0
        %v538 = vadd.f32 %v288, %v537
        %v539 = vpop.f32.mrb[0].mxu0
        %540 = vmatprep.mubr.f32.mxu0 0.0
        %541 = vmatmul.mubr.f32.gmra.mrb[0].mxu0 %v343
        %v542 = vpop.f32.mrb[0].mxu0
        %v543 = vadd.f32 %v288, %v542
        %v544 = vpop.f32.mrb[0].mxu0
        %545 = vmatprep.mubr.f32.mxu0 0.0
        %546 = vmatmul.mubr.f32.gmra.mrb[0].mxu0 %v346
        %v547 = vpop.f32.mrb[0].mxu0
        %v548 = vadd.f32 %v288, %v547
        %v549 = vpop.f32.mrb[0].mxu0
        %550 = vmatprep.mubr.f32.mxu0 0.0
        %551 = vmatmul.mubr.f32.gmra.mrb[0].mxu0 %v349
        %v552 = vpop.f32.mrb[0].mxu0
        %v553 = vadd.f32 %v288, %v552
        %v554 = vpop.f32.mrb[0].mxu0
        %555 = vmatprep.mubr.f32.mxu0 0.0
        %556 = vmatmul.mubr.f32.gmra.mrb[0].mxu0 %v352
        %v557 = vpop.f32.mrb[0].mxu0
        %v558 = vadd.f32 %v288, %v557
        %v559 = vpop.f32.mrb[0].mxu0
        %560 = vmatprep.mubr.f32.mxu0 0.0
        %561 = vmatmul.mubr.f32.gmra.mrb[0].mxu0 %v355
        %v562 = vpop.f32.mrb[0].mxu0
        %v563 = vadd.f32 %v288, %v562
        %v564 = vpop.f32.mrb[0].mxu0
        %565 = vmatprep.mubr.f32.mxu0 0.0
        %566 = vmatmul.mubr.f32.gmra.mrb[0].mxu0 %v358
        %v567 = vpop.f32.mrb[0].mxu0
        %v568 = vadd.f32 %v288, %v567
        %v569 = vpop.f32.mrb[0].mxu0
        %570 = vmatprep.mubr.f32.mxu0 0.0
        %571 = vmatmul.mubr.f32.gmra.mrb[0].mxu0 %v361
        %v572 = vpop.f32.mrb[0].mxu0
        %v573 = vadd.f32 %v288, %v572
        %v574 = vpop.f32.mrb[0].mxu0
        %575 = vmatprep.mubr.f32.mxu0 0.0
        %576 = vmatmul.mubr.f32.gmra.mrb[0].mxu0 %v364
        %v577 = vpop.f32.mrb[0].mxu0
        %v578 = vadd.f32 %v288, %v577
        %v579 = vpop.f32.mrb[0].mxu0
        %580 = vmatprep.mubr.f32.mxu0 0.0
        %581 = vmatmul.mubr.f32.gmra.mrb[0].mxu0 %v367
        %v582 = vpop.f32.mrb[0].mxu0
        %v583 = vadd.f32 %v288, %v582
        %v584 = vpop.f32.mrb[0].mxu0
        %585 = vmatprep.mubr.f32.mxu0 0.0
        %586 = vmatmul.mubr.f32.gmra.mrb[0].mxu0 %v370
        %v587 = vpop.f32.mrb[0].mxu0
        %v588 = vadd.f32 %v288, %v587
        %v589 = vpop.f32.mrb[0].mxu0
        %590 = vmatprep.mubr.f32.mxu0 0.0
        %591 = vmatmul.mubr.f32.gmra.mrb[0].mxu0 %v373
        %v592 = vpop.f32.mrb[0].mxu0
        %v593 = vadd.f32 %v288, %v592
        %v594 = vpop.f32.mrb[0].mxu0
        %595 = vmatprep.mubr.f32.mxu0 0.0
        %596 = vmatmul.mubr.f32.gmra.mrb[0].mxu0 %v376
        %v597 = vpop.f32.mrb[0].mxu0
        %v598 = vadd.f32 %v288, %v597
        %v599 = vpop.f32.mrb[0].mxu0
        %600 = vmatprep.mubr.f32.mxu0 0.0
        %601 = vmatmul.mubr.f32.gmra.mrb[0].mxu0 %v379
        %v602 = vpop.f32.mrb[0].mxu0
        %v603 = vadd.f32 %v288, %v602
        %v604 = vpop.f32.mrb[0].mxu0
        %605 = vmatprep.mubr.f32.mxu0 0.0
        %606 = vmatmul.mubr.f32.gmra.mrb[0].mxu0 %v382
        %v607 = vpop.f32.mrb[0].mxu0
        %v608 = vadd.f32 %v288, %v607
        %v609 = vpop.f32.mrb[0].mxu0
        %610 = vmatprep.mubr.f32.mxu0 0.0
        %611 = vmatmul.mubr.f32.gmra.mrb[0].mxu0 %v385
        %v612 = vpop.f32.mrb[0].mxu0
        %v613 = vadd.f32 %v288, %v612
        %v614 = vpop.f32.mrb[0].mxu0
        %615 = vdwg.mxu0
        %v616 = vmax.f32 %v458, 0.0
        %v617 = vmax.f32 %v463, 0.0
        %v618 = vmax.f32 %v468, 0.0
        %v619 = vmax.f32 %v473, 0.0
        %v620 = vmax.f32 %v478, 0.0
        %v621 = vmax.f32 %v483, 0.0
        %v622 = vmax.f32 %v488, 0.0
        %v623 = vmax.f32 %v493, 0.0
        %v624 = vmax.f32 %v498, 0.0
        %v625 = vmax.f32 %v503, 0.0
        %v626 = vmax.f32 %v508, 0.0
        %v627 = vmax.f32 %v513, 0.0
        %v628 = vmax.f32 %v518, 0.0
        %v629 = vmax.f32 %v523, 0.0
        %v630 = vmax.f32 %v528, 0.0
        %v631 = vmax.f32 %v533, 0.0
        %v632 = vmax.f32 %v538, 0.0
        %v633 = vmax.f32 %v543, 0.0
        %v634 = vmax.f32 %v548, 0.0
        %v635 = vmax.f32 %v553, 0.0
        %v636 = vmax.f32 %v558, 0.0
        %v637 = vmax.f32 %v563, 0.0
        %v638 = vmax.f32 %v568, 0.0
        %v639 = vmax.f32 %v573, 0.0
        %v640 = vmax.f32 %v578, 0.0
        %v641 = vmax.f32 %v583, 0.0
        %v642 = vmax.f32 %v588, 0.0
        %v643 = vmax.f32 %v593, 0.0
        %v644 = vmax.f32 %v598, 0.0
        %v645 = vmax.f32 %v603, 0.0
        %v646 = vmax.f32 %v608, 0.0
        %v647 = vmax.f32 %v613, 0.0
        %v648 = vld [vmem:[%s3] sm:$0x1]
        %v650 = vlaneseq
        %v651 = vshrl.u32 %v650, 7
        %v652 = vsub.s32 0, %v651
        %v653 = vrot.slane %v648, %v652
        %v655 = vmul.f32 %v616, %v653
        %v656 = vmul.f32 %v617, %v653
        %v657 = vmul.f32 %v618, %v653
        %v658 = vmul.f32 %v619, %v653
        %v659 = vmul.f32 %v620, %v653
        %v660 = vmul.f32 %v621, %v653
        %v661 = vmul.f32 %v622, %v653
        %v662 = vmul.f32 %v623, %v653
        %v663 = vmul.f32 %v624, %v653
        %v664 = vmul.f32 %v625, %v653
        %v665 = vmul.f32 %v626, %v653
        %v666 = vmul.f32 %v627, %v653
        %v667 = vmul.f32 %v628, %v653
        %v668 = vmul.f32 %v629, %v653
        %v669 = vmul.f32 %v630, %v653
        %v670 = vmul.f32 %v631, %v653
        %v671 = vmul.f32 %v632, %v653
        %v672 = vmul.f32 %v633, %v653
        %v673 = vmul.f32 %v634, %v653
        %v674 = vmul.f32 %v635, %v653
        %v675 = vmul.f32 %v636, %v653
        %v676 = vmul.f32 %v637, %v653
        %v677 = vmul.f32 %v638, %v653
        %v678 = vmul.f32 %v639, %v653
        %v679 = vmul.f32 %v640, %v653
        %v680 = vmul.f32 %v641, %v653
        %v681 = vmul.f32 %v642, %v653
        %v682 = vmul.f32 %v643, %v653
        %v683 = vmul.f32 %v644, %v653
        %v684 = vmul.f32 %v645, %v653
        %v685 = vmul.f32 %v646, %v653
        %v686 = vmul.f32 %v647, %v653
        %vm687 = vcmask 523264
        %v688 = vsel %vm687, %v655, 0.0
        %689 = vadd.xlane.f32.xlu0 %v688
        %v690 = vpop.xlane.xlu0 %689
        %v691 = vsel %vm687, %v656, 0.0
        %692 = vadd.xlane.f32.xlu0 %v691
        %v693 = vpop.xlane.xlu0 %692
        %v694 = vsel %vm687, %v657, 0.0
        %695 = vadd.xlane.f32.xlu0 %v694
        %v696 = vpop.xlane.xlu0 %695
        %v697 = vsel %vm687, %v658, 0.0
        %698 = vadd.xlane.f32.xlu0 %v697
        %v699 = vpop.xlane.xlu0 %698
        %v700 = vsel %vm687, %v659, 0.0
        %701 = vadd.xlane.f32.xlu0 %v700
        %v702 = vpop.xlane.xlu0 %701
        %v703 = vsel %vm687, %v660, 0.0
        %704 = vadd.xlane.f32.xlu0 %v703
        %v705 = vpop.xlane.xlu0 %704
        %v706 = vsel %vm687, %v661, 0.0
        %707 = vadd.xlane.f32.xlu0 %v706
        %v708 = vpop.xlane.xlu0 %707
        %v709 = vsel %vm687, %v662, 0.0
        %710 = vadd.xlane.f32.xlu0 %v709
        %v711 = vpop.xlane.xlu0 %710
        %v712 = vsel %vm687, %v663, 0.0
        %713 = vadd.xlane.f32.xlu0 %v712
        %v714 = vpop.xlane.xlu0 %713
        %v715 = vsel %vm687, %v664, 0.0
        %716 = vadd.xlane.f32.xlu0 %v715
        %v717 = vpop.xlane.xlu0 %716
        %v718 = vsel %vm687, %v665, 0.0
        %719 = vadd.xlane.f32.xlu0 %v718
        %v720 = vpop.xlane.xlu0 %719
        %v721 = vsel %vm687, %v666, 0.0
        %722 = vadd.xlane.f32.xlu0 %v721
        %v723 = vpop.xlane.xlu0 %722
        %v724 = vsel %vm687, %v667, 0.0
        %725 = vadd.xlane.f32.xlu0 %v724
        %v726 = vpop.xlane.xlu0 %725
        %v727 = vsel %vm687, %v668, 0.0
        %728 = vadd.xlane.f32.xlu0 %v727
        %v729 = vpop.xlane.xlu0 %728
        %v730 = vsel %vm687, %v669, 0.0
        %731 = vadd.xlane.f32.xlu0 %v730
        %v732 = vpop.xlane.xlu0 %731
        %v733 = vsel %vm687, %v670, 0.0
        %734 = vadd.xlane.f32.xlu0 %v733
        %v735 = vpop.xlane.xlu0 %734
        %v736 = vsel %vm687, %v671, 0.0
        %737 = vadd.xlane.f32.xlu0 %v736
        %v738 = vpop.xlane.xlu0 %737
        %v739 = vsel %vm687, %v672, 0.0
        %740 = vadd.xlane.f32.xlu0 %v739
        %v741 = vpop.xlane.xlu0 %740
        %v742 = vsel %vm687, %v673, 0.0
        %743 = vadd.xlane.f32.xlu0 %v742
        %v744 = vpop.xlane.xlu0 %743
        %v745 = vsel %vm687, %v674, 0.0
        %746 = vadd.xlane.f32.xlu0 %v745
        %v747 = vpop.xlane.xlu0 %746
        %v748 = vsel %vm687, %v675, 0.0
        %749 = vadd.xlane.f32.xlu0 %v748
        %v750 = vpop.xlane.xlu0 %749
        %v751 = vsel %vm687, %v676, 0.0
        %752 = vadd.xlane.f32.xlu0 %v751
        %v753 = vpop.xlane.xlu0 %752
        %v754 = vsel %vm687, %v677, 0.0
        %755 = vadd.xlane.f32.xlu0 %v754
        %v756 = vpop.xlane.xlu0 %755
        %v757 = vsel %vm687, %v678, 0.0
        %758 = vadd.xlane.f32.xlu0 %v757
        %v759 = vpop.xlane.xlu0 %758
        %v760 = vsel %vm687, %v679, 0.0
        %761 = vadd.xlane.f32.xlu0 %v760
        %v762 = vpop.xlane.xlu0 %761
        %v763 = vsel %vm687, %v680, 0.0
        %764 = vadd.xlane.f32.xlu0 %v763
        %v765 = vpop.xlane.xlu0 %764
        %v766 = vsel %vm687, %v681, 0.0
        %767 = vadd.xlane.f32.xlu0 %v766
        %v768 = vpop.xlane.xlu0 %767
        %v769 = vsel %vm687, %v682, 0.0
        %770 = vadd.xlane.f32.xlu0 %v769
        %v771 = vpop.xlane.xlu0 %770
        %v772 = vsel %vm687, %v683, 0.0
        %773 = vadd.xlane.f32.xlu0 %v772
        %v774 = vpop.xlane.xlu0 %773
        %v775 = vsel %vm687, %v684, 0.0
        %776 = vadd.xlane.f32.xlu0 %v775
        %v777 = vpop.xlane.xlu0 %776
        %v778 = vsel %vm687, %v685, 0.0
        %779 = vadd.xlane.f32.xlu0 %v778
        %v780 = vpop.xlane.xlu0 %779
        %v781 = vsel %vm687, %v686, 0.0
        %782 = vadd.xlane.f32.xlu0 %v781
        %v783 = vpop.xlane.xlu0 %782
        %s784 = sld [smem:[#allocation2]]
        %v785 = vstv %s784
        %v786 = vadd.f32 %v690, %v785
        %v787 = vadd.f32 %v693, %v785
        %v788 = vadd.f32 %v696, %v785
        %v789 = vadd.f32 %v699, %v785
        %v790 = vadd.f32 %v702, %v785
        %v791 = vadd.f32 %v705, %v785
        %v792 = vadd.f32 %v708, %v785
        %v793 = vadd.f32 %v711, %v785
        %v794 = vadd.f32 %v714, %v785
        %v795 = vadd.f32 %v717, %v785
        %v796 = vadd.f32 %v720, %v785
        %v797 = vadd.f32 %v723, %v785
        %v798 = vadd.f32 %v726, %v785
        %v799 = vadd.f32 %v729, %v785
        %v800 = vadd.f32 %v732, %v785
        %v801 = vadd.f32 %v735, %v785
        %v802 = vadd.f32 %v738, %v785
        %v803 = vadd.f32 %v741, %v785
        %v804 = vadd.f32 %v744, %v785
        %v805 = vadd.f32 %v747, %v785
        %v806 = vadd.f32 %v750, %v785
        %v807 = vadd.f32 %v753, %v785
        %v808 = vadd.f32 %v756, %v785
        %v809 = vadd.f32 %v759, %v785
        %v810 = vadd.f32 %v762, %v785
        %v811 = vadd.f32 %v765, %v785
        %v812 = vadd.f32 %v768, %v785
        %v813 = vadd.f32 %v771, %v785
        %v814 = vadd.f32 %v774, %v785
        %v815 = vadd.f32 %v777, %v785
        %v816 = vadd.f32 %v780, %v785
        %v817 = vadd.f32 %v783, %v785
        %v818 = vsub.f32 0.0, %v786
        %v819 = vsub.f32 0.0, %v787
        %v820 = vsub.f32 0.0, %v788
        %v821 = vsub.f32 0.0, %v789
        %v822 = vsub.f32 0.0, %v790
        %v823 = vsub.f32 0.0, %v791
        %v824 = vsub.f32 0.0, %v792
        %v825 = vsub.f32 0.0, %v793
        %v826 = vsub.f32 0.0, %v794
        %v827 = vsub.f32 0.0, %v795
        %v828 = vsub.f32 0.0, %v796
        %v829 = vsub.f32 0.0, %v797
        %v830 = vsub.f32 0.0, %v798
        %v831 = vsub.f32 0.0, %v799
        %v832 = vsub.f32 0.0, %v800
        %v833 = vsub.f32 0.0, %v801
        %v834 = vsub.f32 0.0, %v802
        %v835 = vsub.f32 0.0, %v803
        %v836 = vsub.f32 0.0, %v804
        %v837 = vsub.f32 0.0, %v805
        %v838 = vsub.f32 0.0, %v806
        %v839 = vsub.f32 0.0, %v807
        %v840 = vsub.f32 0.0, %v808
        %v841 = vsub.f32 0.0, %v809
        %v842 = vsub.f32 0.0, %v810
        %v843 = vsub.f32 0.0, %v811
        %v844 = vsub.f32 0.0, %v812
        %v845 = vsub.f32 0.0, %v813
        %v846 = vsub.f32 0.0, %v814
        %v847 = vsub.f32 0.0, %v815
        %v848 = vsub.f32 0.0, %v816
        %v849 = vsub.f32 0.0, %v817
        %v850 = vmul.f32 %v818, 1.442695
        %v851 = vpow.pop %v850
        %v852 = vmul.f32 %v819, 1.442695
        %v853 = vpow.pop %v852
        %v854 = vmul.f32 %v820, 1.442695
        %v855 = vpow.pop %v854
        %v856 = vmul.f32 %v821, 1.442695
        %v857 = vpow.pop %v856
        %v858 = vmul.f32 %v822, 1.442695
        %v859 = vpow.pop %v858
        %v860 = vmul.f32 %v823, 1.442695
        %v861 = vpow.pop %v860
        %v862 = vmul.f32 %v824, 1.442695
        %v863 = vpow.pop %v862
        %v864 = vmul.f32 %v825, 1.442695
        %v865 = vpow.pop %v864
        %v866 = vmul.f32 %v826, 1.442695
        %v867 = vpow.pop %v866
        %v868 = vmul.f32 %v827, 1.442695
        %v869 = vpow.pop %v868
        %v870 = vmul.f32 %v828, 1.442695
        %v871 = vpow.pop %v870
        %v872 = vmul.f32 %v829, 1.442695
        %v873 = vpow.pop %v872
        %v874 = vmul.f32 %v830, 1.442695
        %v875 = vpow.pop %v874
        %v876 = vmul.f32 %v831, 1.442695
        %v877 = vpow.pop %v876
        %v878 = vmul.f32 %v832, 1.442695
        %v879 = vpow.pop %v878
        %v880 = vmul.f32 %v833, 1.442695
        %v881 = vpow.pop %v880
        %v882 = vmul.f32 %v834, 1.442695
        %v883 = vpow.pop %v882
        %v884 = vmul.f32 %v835, 1.442695
        %v885 = vpow.pop %v884
        %v886 = vmul.f32 %v836, 1.442695
        %v887 = vpow.pop %v886
        %v888 = vmul.f32 %v837, 1.442695
        %v889 = vpow.pop %v888
        %v890 = vmul.f32 %v838, 1.442695
        %v891 = vpow.pop %v890
        %v892 = vmul.f32 %v839, 1.442695
        %v893 = vpow.pop %v892
        %v894 = vmul.f32 %v840, 1.442695
        %v895 = vpow.pop %v894
        %v896 = vmul.f32 %v841, 1.442695
        %v897 = vpow.pop %v896
        %v898 = vmul.f32 %v842, 1.442695
        %v899 = vpow.pop %v898
        %v900 = vmul.f32 %v843, 1.442695
        %v901 = vpow.pop %v900
        %v902 = vmul.f32 %v844, 1.442695
        %v903 = vpow.pop %v902
        %v904 = vmul.f32 %v845, 1.442695
        %v905 = vpow.pop %v904
        %v906 = vmul.f32 %v846, 1.442695
        %v907 = vpow.pop %v906
        %v908 = vmul.f32 %v847, 1.442695
        %v909 = vpow.pop %v908
        %v910 = vmul.f32 %v848, 1.442695
        %v911 = vpow.pop %v910
        %v912 = vmul.f32 %v849, 1.442695
        %v913 = vpow.pop %v912
        %v914 = vadd.f32 %v851, 1.0
        %v915 = vadd.f32 %v853, 1.0
        %v916 = vadd.f32 %v855, 1.0
        %v917 = vadd.f32 %v857, 1.0
        %v918 = vadd.f32 %v859, 1.0
        %v919 = vadd.f32 %v861, 1.0
        %v920 = vadd.f32 %v863, 1.0
        %v921 = vadd.f32 %v865, 1.0
        %v922 = vadd.f32 %v867, 1.0
        %v923 = vadd.f32 %v869, 1.0
        %v924 = vadd.f32 %v871, 1.0
        %v925 = vadd.f32 %v873, 1.0
        %v926 = vadd.f32 %v875, 1.0
        %v927 = vadd.f32 %v877, 1.0
        %v928 = vadd.f32 %v879, 1.0
        %v929 = vadd.f32 %v881, 1.0
        %v930 = vadd.f32 %v883, 1.0
        %v931 = vadd.f32 %v885, 1.0
        %v932 = vadd.f32 %v887, 1.0
        %v933 = vadd.f32 %v889, 1.0
        %v934 = vadd.f32 %v891, 1.0
        %v935 = vadd.f32 %v893, 1.0
        %v936 = vadd.f32 %v895, 1.0
        %v937 = vadd.f32 %v897, 1.0
        %v938 = vadd.f32 %v899, 1.0
        %v939 = vadd.f32 %v901, 1.0
        %v940 = vadd.f32 %v903, 1.0
        %v941 = vadd.f32 %v905, 1.0
        %v942 = vadd.f32 %v907, 1.0
        %v943 = vadd.f32 %v909, 1.0
        %v944 = vadd.f32 %v911, 1.0
        %v945 = vadd.f32 %v913, 1.0
        %v946 = vrcp.pop %v914
        %v947 = vmul.f32 1.0, %v946
        %v948 = vrcp.pop %v915
        %v949 = vmul.f32 1.0, %v948
        %v950 = vrcp.pop %v916
        %v951 = vmul.f32 1.0, %v950
        %v952 = vrcp.pop %v917
        %v953 = vmul.f32 1.0, %v952
        %v954 = vrcp.pop %v918
        %v955 = vmul.f32 1.0, %v954
        %v956 = vrcp.pop %v919
        %v957 = vmul.f32 1.0, %v956
        %v958 = vrcp.pop %v920
        %v959 = vmul.f32 1.0, %v958
        %v960 = vrcp.pop %v921
        %v961 = vmul.f32 1.0, %v960
        %v962 = vrcp.pop %v922
        %v963 = vmul.f32 1.0, %v962
        %v964 = vrcp.pop %v923
        %v965 = vmul.f32 1.0, %v964
        %v966 = vrcp.pop %v924
        %v967 = vmul.f32 1.0, %v966
        %v968 = vrcp.pop %v925
        %v969 = vmul.f32 1.0, %v968
        %v970 = vrcp.pop %v926
        %v971 = vmul.f32 1.0, %v970
        %v972 = vrcp.pop %v927
        %v973 = vmul.f32 1.0, %v972
        %v974 = vrcp.pop %v928
        %v975 = vmul.f32 1.0, %v974
        %v976 = vrcp.pop %v929
        %v977 = vmul.f32 1.0, %v976
        %v978 = vrcp.pop %v930
        %v979 = vmul.f32 1.0, %v978
        %v980 = vrcp.pop %v931
        %v981 = vmul.f32 1.0, %v980
        %v982 = vrcp.pop %v932
        %v983 = vmul.f32 1.0, %v982
        %v984 = vrcp.pop %v933
        %v985 = vmul.f32 1.0, %v984
        %v986 = vrcp.pop %v934
        %v987 = vmul.f32 1.0, %v986
        %v988 = vrcp.pop %v935
        %v989 = vmul.f32 1.0, %v988
        %v990 = vrcp.pop %v936
        %v991 = vmul.f32 1.0, %v990
        %v992 = vrcp.pop %v937
        %v993 = vmul.f32 1.0, %v992
        %v994 = vrcp.pop %v938
        %v995 = vmul.f32 1.0, %v994
        %v996 = vrcp.pop %v939
        %v997 = vmul.f32 1.0, %v996
        %v998 = vrcp.pop %v940
        %v999 = vmul.f32 1.0, %v998
        %v1000 = vrcp.pop %v941
        %v1001 = vmul.f32 1.0, %v1000
        %v1002 = vrcp.pop %v942
        %v1003 = vmul.f32 1.0, %v1002
        %v1004 = vrcp.pop %v943
        %v1005 = vmul.f32 1.0, %v1004
        %v1006 = vrcp.pop %v944
        %v1007 = vmul.f32 1.0, %v1006
        %v1008 = vrcp.pop %v945
        %v1009 = vmul.f32 1.0, %v1008
        %v1042 = vlaneseq
        %v1043 = vshrl.u32 %v1042, 7
        %v1044 = vsub.s32 0, %v1043
        %v1045 = vrot.slane %v947, %v1044
        %v1046 = vlaneseq
        %v1047 = vshrl.u32 %v1046, 7
        %v1048 = vsub.s32 1, %v1047
        %v1049 = vrot.slane %v947, %v1048
        %v1050 = vlaneseq
        %v1051 = vshrl.u32 %v1050, 7
        %v1052 = vsub.s32 2, %v1051
        %v1053 = vrot.slane %v947, %v1052
        %v1054 = vlaneseq
        %v1055 = vshrl.u32 %v1054, 7
        %v1056 = vsub.s32 3, %v1055
        %v1057 = vrot.slane %v947, %v1056
        %v1058 = vlaneseq
        %v1059 = vshrl.u32 %v1058, 7
        %v1060 = vsub.s32 4, %v1059
        %v1061 = vrot.slane %v947, %v1060
        %v1062 = vlaneseq
        %v1063 = vshrl.u32 %v1062, 7
        %v1064 = vsub.s32 5, %v1063
        %v1065 = vrot.slane %v947, %v1064
        %v1066 = vlaneseq
        %v1067 = vshrl.u32 %v1066, 7
        %v1068 = vsub.s32 6, %v1067
        %v1069 = vrot.slane %v947, %v1068
        %v1070 = vlaneseq
        %v1071 = vshrl.u32 %v1070, 7
        %v1072 = vsub.s32 7, %v1071
        %v1073 = vrot.slane %v947, %v1072
        %v1074 = vlaneseq
        %v1075 = vshrl.u32 %v1074, 7
        %v1076 = vsub.s32 0, %v1075
        %v1077 = vrot.slane %v949, %v1076
        %v1078 = vlaneseq
        %v1079 = vshrl.u32 %v1078, 7
        %v1080 = vsub.s32 1, %v1079
        %v1081 = vrot.slane %v949, %v1080
        %v1082 = vlaneseq
        %v1083 = vshrl.u32 %v1082, 7
        %v1084 = vsub.s32 2, %v1083
        %v1085 = vrot.slane %v949, %v1084
        %v1086 = vlaneseq
        %v1087 = vshrl.u32 %v1086, 7
        %v1088 = vsub.s32 3, %v1087
        %v1089 = vrot.slane %v949, %v1088
        %v1090 = vlaneseq
        %v1091 = vshrl.u32 %v1090, 7
        %v1092 = vsub.s32 4, %v1091
        %v1093 = vrot.slane %v949, %v1092
        %v1094 = vlaneseq
        %v1095 = vshrl.u32 %v1094, 7
        %v1096 = vsub.s32 5, %v1095
        %v1097 = vrot.slane %v949, %v1096
        %v1098 = vlaneseq
        %v1099 = vshrl.u32 %v1098, 7
        %v1100 = vsub.s32 6, %v1099
        %v1101 = vrot.slane %v949, %v1100
        %v1102 = vlaneseq
        %v1103 = vshrl.u32 %v1102, 7
        %v1104 = vsub.s32 7, %v1103
        %v1105 = vrot.slane %v949, %v1104
        %v1106 = vlaneseq
        %v1107 = vshrl.u32 %v1106, 7
        %v1108 = vsub.s32 0, %v1107
        %v1109 = vrot.slane %v951, %v1108
        %v1110 = vlaneseq
        %v1111 = vshrl.u32 %v1110, 7
        %v1112 = vsub.s32 1, %v1111
        %v1113 = vrot.slane %v951, %v1112
        %v1114 = vlaneseq
        %v1115 = vshrl.u32 %v1114, 7
        %v1116 = vsub.s32 2, %v1115
        %v1117 = vrot.slane %v951, %v1116
        %v1118 = vlaneseq
        %v1119 = vshrl.u32 %v1118, 7
        %v1120 = vsub.s32 3, %v1119
        %v1121 = vrot.slane %v951, %v1120
        %v1122 = vlaneseq
        %v1123 = vshrl.u32 %v1122, 7
        %v1124 = vsub.s32 4, %v1123
        %v1125 = vrot.slane %v951, %v1124
        %v1126 = vlaneseq
        %v1127 = vshrl.u32 %v1126, 7
        %v1128 = vsub.s32 5, %v1127
        %v1129 = vrot.slane %v951, %v1128
        %v1130 = vlaneseq
        %v1131 = vshrl.u32 %v1130, 7
        %v1132 = vsub.s32 6, %v1131
        %v1133 = vrot.slane %v951, %v1132
        %v1134 = vlaneseq
        %v1135 = vshrl.u32 %v1134, 7
        %v1136 = vsub.s32 7, %v1135
        %v1137 = vrot.slane %v951, %v1136
        %v1138 = vlaneseq
        %v1139 = vshrl.u32 %v1138, 7
        %v1140 = vsub.s32 0, %v1139
        %v1141 = vrot.slane %v953, %v1140
        %v1142 = vlaneseq
        %v1143 = vshrl.u32 %v1142, 7
        %v1144 = vsub.s32 1, %v1143
        %v1145 = vrot.slane %v953, %v1144
        %v1146 = vlaneseq
        %v1147 = vshrl.u32 %v1146, 7
        %v1148 = vsub.s32 2, %v1147
        %v1149 = vrot.slane %v953, %v1148
        %v1150 = vlaneseq
        %v1151 = vshrl.u32 %v1150, 7
        %v1152 = vsub.s32 3, %v1151
        %v1153 = vrot.slane %v953, %v1152
        %v1154 = vlaneseq
        %v1155 = vshrl.u32 %v1154, 7
        %v1156 = vsub.s32 4, %v1155
        %v1157 = vrot.slane %v953, %v1156
        %v1158 = vlaneseq
        %v1159 = vshrl.u32 %v1158, 7
        %v1160 = vsub.s32 5, %v1159
        %v1161 = vrot.slane %v953, %v1160
        %v1162 = vlaneseq
        %v1163 = vshrl.u32 %v1162, 7
        %v1164 = vsub.s32 6, %v1163
        %v1165 = vrot.slane %v953, %v1164
        %v1166 = vlaneseq
        %v1167 = vshrl.u32 %v1166, 7
        %v1168 = vsub.s32 7, %v1167
        %v1169 = vrot.slane %v953, %v1168
        %v1170 = vlaneseq
        %v1171 = vshrl.u32 %v1170, 7
        %v1172 = vsub.s32 0, %v1171
        %v1173 = vrot.slane %v955, %v1172
        %v1174 = vlaneseq
        %v1175 = vshrl.u32 %v1174, 7
        %v1176 = vsub.s32 1, %v1175
        %v1177 = vrot.slane %v955, %v1176
        %v1178 = vlaneseq
        %v1179 = vshrl.u32 %v1178, 7
        %v1180 = vsub.s32 2, %v1179
        %v1181 = vrot.slane %v955, %v1180
        %v1182 = vlaneseq
        %v1183 = vshrl.u32 %v1182, 7
        %v1184 = vsub.s32 3, %v1183
        %v1185 = vrot.slane %v955, %v1184
        %v1186 = vlaneseq
        %v1187 = vshrl.u32 %v1186, 7
        %v1188 = vsub.s32 4, %v1187
        %v1189 = vrot.slane %v955, %v1188
        %v1190 = vlaneseq
        %v1191 = vshrl.u32 %v1190, 7
        %v1192 = vsub.s32 5, %v1191
        %v1193 = vrot.slane %v955, %v1192
        %v1194 = vlaneseq
        %v1195 = vshrl.u32 %v1194, 7
        %v1196 = vsub.s32 6, %v1195
        %v1197 = vrot.slane %v955, %v1196
        %v1198 = vlaneseq
        %v1199 = vshrl.u32 %v1198, 7
        %v1200 = vsub.s32 7, %v1199
        %v1201 = vrot.slane %v955, %v1200
        %v1202 = vlaneseq
        %v1203 = vshrl.u32 %v1202, 7
        %v1204 = vsub.s32 0, %v1203
        %v1205 = vrot.slane %v957, %v1204
        %v1206 = vlaneseq
        %v1207 = vshrl.u32 %v1206, 7
        %v1208 = vsub.s32 1, %v1207
        %v1209 = vrot.slane %v957, %v1208
        %v1210 = vlaneseq
        %v1211 = vshrl.u32 %v1210, 7
        %v1212 = vsub.s32 2, %v1211
        %v1213 = vrot.slane %v957, %v1212
        %v1214 = vlaneseq
        %v1215 = vshrl.u32 %v1214, 7
        %v1216 = vsub.s32 3, %v1215
        %v1217 = vrot.slane %v957, %v1216
        %v1218 = vlaneseq
        %v1219 = vshrl.u32 %v1218, 7
        %v1220 = vsub.s32 4, %v1219
        %v1221 = vrot.slane %v957, %v1220
        %v1222 = vlaneseq
        %v1223 = vshrl.u32 %v1222, 7
        %v1224 = vsub.s32 5, %v1223
        %v1225 = vrot.slane %v957, %v1224
        %v1226 = vlaneseq
        %v1227 = vshrl.u32 %v1226, 7
        %v1228 = vsub.s32 6, %v1227
        %v1229 = vrot.slane %v957, %v1228
        %v1230 = vlaneseq
        %v1231 = vshrl.u32 %v1230, 7
        %v1232 = vsub.s32 7, %v1231
        %v1233 = vrot.slane %v957, %v1232
        %v1234 = vlaneseq
        %v1235 = vshrl.u32 %v1234, 7
        %v1236 = vsub.s32 0, %v1235
        %v1237 = vrot.slane %v959, %v1236
        %v1238 = vlaneseq
        %v1239 = vshrl.u32 %v1238, 7
        %v1240 = vsub.s32 1, %v1239
        %v1241 = vrot.slane %v959, %v1240
        %v1242 = vlaneseq
        %v1243 = vshrl.u32 %v1242, 7
        %v1244 = vsub.s32 2, %v1243
        %v1245 = vrot.slane %v959, %v1244
        %v1246 = vlaneseq
        %v1247 = vshrl.u32 %v1246, 7
        %v1248 = vsub.s32 3, %v1247
        %v1249 = vrot.slane %v959, %v1248
        %v1250 = vlaneseq
        %v1251 = vshrl.u32 %v1250, 7
        %v1252 = vsub.s32 4, %v1251
        %v1253 = vrot.slane %v959, %v1252
        %v1254 = vlaneseq
        %v1255 = vshrl.u32 %v1254, 7
        %v1256 = vsub.s32 5, %v1255
        %v1257 = vrot.slane %v959, %v1256
        %v1258 = vlaneseq
        %v1259 = vshrl.u32 %v1258, 7
        %v1260 = vsub.s32 6, %v1259
        %v1261 = vrot.slane %v959, %v1260
        %v1262 = vlaneseq
        %v1263 = vshrl.u32 %v1262, 7
        %v1264 = vsub.s32 7, %v1263
        %v1265 = vrot.slane %v959, %v1264
        %v1266 = vlaneseq
        %v1267 = vshrl.u32 %v1266, 7
        %v1268 = vsub.s32 0, %v1267
        %v1269 = vrot.slane %v961, %v1268
        %v1270 = vlaneseq
        %v1271 = vshrl.u32 %v1270, 7
        %v1272 = vsub.s32 1, %v1271
        %v1273 = vrot.slane %v961, %v1272
        %v1274 = vlaneseq
        %v1275 = vshrl.u32 %v1274, 7
        %v1276 = vsub.s32 2, %v1275
        %v1277 = vrot.slane %v961, %v1276
        %v1278 = vlaneseq
        %v1279 = vshrl.u32 %v1278, 7
        %v1280 = vsub.s32 3, %v1279
        %v1281 = vrot.slane %v961, %v1280
        %v1282 = vlaneseq
        %v1283 = vshrl.u32 %v1282, 7
        %v1284 = vsub.s32 4, %v1283
        %v1285 = vrot.slane %v961, %v1284
        %v1286 = vlaneseq
        %v1287 = vshrl.u32 %v1286, 7
        %v1288 = vsub.s32 5, %v1287
        %v1289 = vrot.slane %v961, %v1288
        %v1290 = vlaneseq
        %v1291 = vshrl.u32 %v1290, 7
        %v1292 = vsub.s32 6, %v1291
        %v1293 = vrot.slane %v961, %v1292
        %v1294 = vlaneseq
        %v1295 = vshrl.u32 %v1294, 7
        %v1296 = vsub.s32 7, %v1295
        %v1297 = vrot.slane %v961, %v1296
        %v1298 = vlaneseq
        %v1299 = vshrl.u32 %v1298, 7
        %v1300 = vsub.s32 0, %v1299
        %v1301 = vrot.slane %v963, %v1300
        %v1302 = vlaneseq
        %v1303 = vshrl.u32 %v1302, 7
        %v1304 = vsub.s32 1, %v1303
        %v1305 = vrot.slane %v963, %v1304
        %v1306 = vlaneseq
        %v1307 = vshrl.u32 %v1306, 7
        %v1308 = vsub.s32 2, %v1307
        %v1309 = vrot.slane %v963, %v1308
        %v1310 = vlaneseq
        %v1311 = vshrl.u32 %v1310, 7
        %v1312 = vsub.s32 3, %v1311
        %v1313 = vrot.slane %v963, %v1312
        %v1314 = vlaneseq
        %v1315 = vshrl.u32 %v1314, 7
        %v1316 = vsub.s32 4, %v1315
        %v1317 = vrot.slane %v963, %v1316
        %v1318 = vlaneseq
        %v1319 = vshrl.u32 %v1318, 7
        %v1320 = vsub.s32 5, %v1319
        %v1321 = vrot.slane %v963, %v1320
        %v1322 = vlaneseq
        %v1323 = vshrl.u32 %v1322, 7
        %v1324 = vsub.s32 6, %v1323
        %v1325 = vrot.slane %v963, %v1324
        %v1326 = vlaneseq
        %v1327 = vshrl.u32 %v1326, 7
        %v1328 = vsub.s32 7, %v1327
        %v1329 = vrot.slane %v963, %v1328
        %v1330 = vlaneseq
        %v1331 = vshrl.u32 %v1330, 7
        %v1332 = vsub.s32 0, %v1331
        %v1333 = vrot.slane %v965, %v1332
        %v1334 = vlaneseq
        %v1335 = vshrl.u32 %v1334, 7
        %v1336 = vsub.s32 1, %v1335
        %v1337 = vrot.slane %v965, %v1336
        %v1338 = vlaneseq
        %v1339 = vshrl.u32 %v1338, 7
        %v1340 = vsub.s32 2, %v1339
        %v1341 = vrot.slane %v965, %v1340
        %v1342 = vlaneseq
        %v1343 = vshrl.u32 %v1342, 7
        %v1344 = vsub.s32 3, %v1343
        %v1345 = vrot.slane %v965, %v1344
        %v1346 = vlaneseq
        %v1347 = vshrl.u32 %v1346, 7
        %v1348 = vsub.s32 4, %v1347
        %v1349 = vrot.slane %v965, %v1348
        %v1350 = vlaneseq
        %v1351 = vshrl.u32 %v1350, 7
        %v1352 = vsub.s32 5, %v1351
        %v1353 = vrot.slane %v965, %v1352
        %v1354 = vlaneseq
        %v1355 = vshrl.u32 %v1354, 7
        %v1356 = vsub.s32 6, %v1355
        %v1357 = vrot.slane %v965, %v1356
        %v1358 = vlaneseq
        %v1359 = vshrl.u32 %v1358, 7
        %v1360 = vsub.s32 7, %v1359
        %v1361 = vrot.slane %v965, %v1360
        %v1362 = vlaneseq
        %v1363 = vshrl.u32 %v1362, 7
        %v1364 = vsub.s32 0, %v1363
        %v1365 = vrot.slane %v967, %v1364
        %v1366 = vlaneseq
        %v1367 = vshrl.u32 %v1366, 7
        %v1368 = vsub.s32 1, %v1367
        %v1369 = vrot.slane %v967, %v1368
        %v1370 = vlaneseq
        %v1371 = vshrl.u32 %v1370, 7
        %v1372 = vsub.s32 2, %v1371
        %v1373 = vrot.slane %v967, %v1372
        %v1374 = vlaneseq
        %v1375 = vshrl.u32 %v1374, 7
        %v1376 = vsub.s32 3, %v1375
        %v1377 = vrot.slane %v967, %v1376
        %v1378 = vlaneseq
        %v1379 = vshrl.u32 %v1378, 7
        %v1380 = vsub.s32 4, %v1379
        %v1381 = vrot.slane %v967, %v1380
        %v1382 = vlaneseq
        %v1383 = vshrl.u32 %v1382, 7
        %v1384 = vsub.s32 5, %v1383
        %v1385 = vrot.slane %v967, %v1384
        %v1386 = vlaneseq
        %v1387 = vshrl.u32 %v1386, 7
        %v1388 = vsub.s32 6, %v1387
        %v1389 = vrot.slane %v967, %v1388
        %v1390 = vlaneseq
        %v1391 = vshrl.u32 %v1390, 7
        %v1392 = vsub.s32 7, %v1391
        %v1393 = vrot.slane %v967, %v1392
        %v1394 = vlaneseq
        %v1395 = vshrl.u32 %v1394, 7
        %v1396 = vsub.s32 0, %v1395
        %v1397 = vrot.slane %v969, %v1396
        %v1398 = vlaneseq
        %v1399 = vshrl.u32 %v1398, 7
        %v1400 = vsub.s32 1, %v1399
        %v1401 = vrot.slane %v969, %v1400
        %v1402 = vlaneseq
        %v1403 = vshrl.u32 %v1402, 7
        %v1404 = vsub.s32 2, %v1403
        %v1405 = vrot.slane %v969, %v1404
        %v1406 = vlaneseq
        %v1407 = vshrl.u32 %v1406, 7
        %v1408 = vsub.s32 3, %v1407
        %v1409 = vrot.slane %v969, %v1408
        %v1410 = vlaneseq
        %v1411 = vshrl.u32 %v1410, 7
        %v1412 = vsub.s32 4, %v1411
        %v1413 = vrot.slane %v969, %v1412
        %v1414 = vlaneseq
        %v1415 = vshrl.u32 %v1414, 7
        %v1416 = vsub.s32 5, %v1415
        %v1417 = vrot.slane %v969, %v1416
        %v1418 = vlaneseq
        %v1419 = vshrl.u32 %v1418, 7
        %v1420 = vsub.s32 6, %v1419
        %v1421 = vrot.slane %v969, %v1420
        %v1422 = vlaneseq
        %v1423 = vshrl.u32 %v1422, 7
        %v1424 = vsub.s32 7, %v1423
        %v1425 = vrot.slane %v969, %v1424
        %v1426 = vlaneseq
        %v1427 = vshrl.u32 %v1426, 7
        %v1428 = vsub.s32 0, %v1427
        %v1429 = vrot.slane %v971, %v1428
        %v1430 = vlaneseq
        %v1431 = vshrl.u32 %v1430, 7
        %v1432 = vsub.s32 1, %v1431
        %v1433 = vrot.slane %v971, %v1432
        %v1434 = vlaneseq
        %v1435 = vshrl.u32 %v1434, 7
        %v1436 = vsub.s32 2, %v1435
        %v1437 = vrot.slane %v971, %v1436
        %v1438 = vlaneseq
        %v1439 = vshrl.u32 %v1438, 7
        %v1440 = vsub.s32 3, %v1439
        %v1441 = vrot.slane %v971, %v1440
        %v1442 = vlaneseq
        %v1443 = vshrl.u32 %v1442, 7
        %v1444 = vsub.s32 4, %v1443
        %v1445 = vrot.slane %v971, %v1444
        %v1446 = vlaneseq
        %v1447 = vshrl.u32 %v1446, 7
        %v1448 = vsub.s32 5, %v1447
        %v1449 = vrot.slane %v971, %v1448
        %v1450 = vlaneseq
        %v1451 = vshrl.u32 %v1450, 7
        %v1452 = vsub.s32 6, %v1451
        %v1453 = vrot.slane %v971, %v1452
        %v1454 = vlaneseq
        %v1455 = vshrl.u32 %v1454, 7
        %v1456 = vsub.s32 7, %v1455
        %v1457 = vrot.slane %v971, %v1456
        %v1458 = vlaneseq
        %v1459 = vshrl.u32 %v1458, 7
        %v1460 = vsub.s32 0, %v1459
        %v1461 = vrot.slane %v973, %v1460
        %v1462 = vlaneseq
        %v1463 = vshrl.u32 %v1462, 7
        %v1464 = vsub.s32 1, %v1463
        %v1465 = vrot.slane %v973, %v1464
        %v1466 = vlaneseq
        %v1467 = vshrl.u32 %v1466, 7
        %v1468 = vsub.s32 2, %v1467
        %v1469 = vrot.slane %v973, %v1468
        %v1470 = vlaneseq
        %v1471 = vshrl.u32 %v1470, 7
        %v1472 = vsub.s32 3, %v1471
        %v1473 = vrot.slane %v973, %v1472
        %v1474 = vlaneseq
        %v1475 = vshrl.u32 %v1474, 7
        %v1476 = vsub.s32 4, %v1475
        %v1477 = vrot.slane %v973, %v1476
        %v1478 = vlaneseq
        %v1479 = vshrl.u32 %v1478, 7
        %v1480 = vsub.s32 5, %v1479
        %v1481 = vrot.slane %v973, %v1480
        %v1482 = vlaneseq
        %v1483 = vshrl.u32 %v1482, 7
        %v1484 = vsub.s32 6, %v1483
        %v1485 = vrot.slane %v973, %v1484
        %v1486 = vlaneseq
        %v1487 = vshrl.u32 %v1486, 7
        %v1488 = vsub.s32 7, %v1487
        %v1489 = vrot.slane %v973, %v1488
        %v1490 = vlaneseq
        %v1491 = vshrl.u32 %v1490, 7
        %v1492 = vsub.s32 0, %v1491
        %v1493 = vrot.slane %v975, %v1492
        %v1494 = vlaneseq
        %v1495 = vshrl.u32 %v1494, 7
        %v1496 = vsub.s32 1, %v1495
        %v1497 = vrot.slane %v975, %v1496
        %v1498 = vlaneseq
        %v1499 = vshrl.u32 %v1498, 7
        %v1500 = vsub.s32 2, %v1499
        %v1501 = vrot.slane %v975, %v1500
        %v1502 = vlaneseq
        %v1503 = vshrl.u32 %v1502, 7
        %v1504 = vsub.s32 3, %v1503
        %v1505 = vrot.slane %v975, %v1504
        %v1506 = vlaneseq
        %v1507 = vshrl.u32 %v1506, 7
        %v1508 = vsub.s32 4, %v1507
        %v1509 = vrot.slane %v975, %v1508
        %v1510 = vlaneseq
        %v1511 = vshrl.u32 %v1510, 7
        %v1512 = vsub.s32 5, %v1511
        %v1513 = vrot.slane %v975, %v1512
        %v1514 = vlaneseq
        %v1515 = vshrl.u32 %v1514, 7
        %v1516 = vsub.s32 6, %v1515
        %v1517 = vrot.slane %v975, %v1516
        %v1518 = vlaneseq
        %v1519 = vshrl.u32 %v1518, 7
        %v1520 = vsub.s32 7, %v1519
        %v1521 = vrot.slane %v975, %v1520
        %v1522 = vlaneseq
        %v1523 = vshrl.u32 %v1522, 7
        %v1524 = vsub.s32 0, %v1523
        %v1525 = vrot.slane %v977, %v1524
        %v1526 = vlaneseq
        %v1527 = vshrl.u32 %v1526, 7
        %v1528 = vsub.s32 1, %v1527
        %v1529 = vrot.slane %v977, %v1528
        %v1530 = vlaneseq
        %v1531 = vshrl.u32 %v1530, 7
        %v1532 = vsub.s32 2, %v1531
        %v1533 = vrot.slane %v977, %v1532
        %v1534 = vlaneseq
        %v1535 = vshrl.u32 %v1534, 7
        %v1536 = vsub.s32 3, %v1535
        %v1537 = vrot.slane %v977, %v1536
        %v1538 = vlaneseq
        %v1539 = vshrl.u32 %v1538, 7
        %v1540 = vsub.s32 4, %v1539
        %v1541 = vrot.slane %v977, %v1540
        %v1542 = vlaneseq
        %v1543 = vshrl.u32 %v1542, 7
        %v1544 = vsub.s32 5, %v1543
        %v1545 = vrot.slane %v977, %v1544
        %v1546 = vlaneseq
        %v1547 = vshrl.u32 %v1546, 7
        %v1548 = vsub.s32 6, %v1547
        %v1549 = vrot.slane %v977, %v1548
        %v1550 = vlaneseq
        %v1551 = vshrl.u32 %v1550, 7
        %v1552 = vsub.s32 7, %v1551
        %v1553 = vrot.slane %v977, %v1552
        %v1554 = vlaneseq
        %v1555 = vshrl.u32 %v1554, 7
        %v1556 = vsub.s32 0, %v1555
        %v1557 = vrot.slane %v979, %v1556
        %v1558 = vlaneseq
        %v1559 = vshrl.u32 %v1558, 7
        %v1560 = vsub.s32 1, %v1559
        %v1561 = vrot.slane %v979, %v1560
        %v1562 = vlaneseq
        %v1563 = vshrl.u32 %v1562, 7
        %v1564 = vsub.s32 2, %v1563
        %v1565 = vrot.slane %v979, %v1564
        %v1566 = vlaneseq
        %v1567 = vshrl.u32 %v1566, 7
        %v1568 = vsub.s32 3, %v1567
        %v1569 = vrot.slane %v979, %v1568
        %v1570 = vlaneseq
        %v1571 = vshrl.u32 %v1570, 7
        %v1572 = vsub.s32 4, %v1571
        %v1573 = vrot.slane %v979, %v1572
        %v1574 = vlaneseq
        %v1575 = vshrl.u32 %v1574, 7
        %v1576 = vsub.s32 5, %v1575
        %v1577 = vrot.slane %v979, %v1576
        %v1578 = vlaneseq
        %v1579 = vshrl.u32 %v1578, 7
        %v1580 = vsub.s32 6, %v1579
        %v1581 = vrot.slane %v979, %v1580
        %v1582 = vlaneseq
        %v1583 = vshrl.u32 %v1582, 7
        %v1584 = vsub.s32 7, %v1583
        %v1585 = vrot.slane %v979, %v1584
        %v1586 = vlaneseq
        %v1587 = vshrl.u32 %v1586, 7
        %v1588 = vsub.s32 0, %v1587
        %v1589 = vrot.slane %v981, %v1588
        %v1590 = vlaneseq
        %v1591 = vshrl.u32 %v1590, 7
        %v1592 = vsub.s32 1, %v1591
        %v1593 = vrot.slane %v981, %v1592
        %v1594 = vlaneseq
        %v1595 = vshrl.u32 %v1594, 7
        %v1596 = vsub.s32 2, %v1595
        %v1597 = vrot.slane %v981, %v1596
        %v1598 = vlaneseq
        %v1599 = vshrl.u32 %v1598, 7
        %v1600 = vsub.s32 3, %v1599
        %v1601 = vrot.slane %v981, %v1600
        %v1602 = vlaneseq
        %v1603 = vshrl.u32 %v1602, 7
        %v1604 = vsub.s32 4, %v1603
        %v1605 = vrot.slane %v981, %v1604
        %v1606 = vlaneseq
        %v1607 = vshrl.u32 %v1606, 7
        %v1608 = vsub.s32 5, %v1607
        %v1609 = vrot.slane %v981, %v1608
        %v1610 = vlaneseq
        %v1611 = vshrl.u32 %v1610, 7
        %v1612 = vsub.s32 6, %v1611
        %v1613 = vrot.slane %v981, %v1612
        %v1614 = vlaneseq
        %v1615 = vshrl.u32 %v1614, 7
        %v1616 = vsub.s32 7, %v1615
        %v1617 = vrot.slane %v981, %v1616
        %v1618 = vlaneseq
        %v1619 = vshrl.u32 %v1618, 7
        %v1620 = vsub.s32 0, %v1619
        %v1621 = vrot.slane %v983, %v1620
        %v1622 = vlaneseq
        %v1623 = vshrl.u32 %v1622, 7
        %v1624 = vsub.s32 1, %v1623
        %v1625 = vrot.slane %v983, %v1624
        %v1626 = vlaneseq
        %v1627 = vshrl.u32 %v1626, 7
        %v1628 = vsub.s32 2, %v1627
        %v1629 = vrot.slane %v983, %v1628
        %v1630 = vlaneseq
        %v1631 = vshrl.u32 %v1630, 7
        %v1632 = vsub.s32 3, %v1631
        %v1633 = vrot.slane %v983, %v1632
        %v1634 = vlaneseq
        %v1635 = vshrl.u32 %v1634, 7
        %v1636 = vsub.s32 4, %v1635
        %v1637 = vrot.slane %v983, %v1636
        %v1638 = vlaneseq
        %v1639 = vshrl.u32 %v1638, 7
        %v1640 = vsub.s32 5, %v1639
        %v1641 = vrot.slane %v983, %v1640
        %v1642 = vlaneseq
        %v1643 = vshrl.u32 %v1642, 7
        %v1644 = vsub.s32 6, %v1643
        %v1645 = vrot.slane %v983, %v1644
        %v1646 = vlaneseq
        %v1647 = vshrl.u32 %v1646, 7
        %v1648 = vsub.s32 7, %v1647
        %v1649 = vrot.slane %v983, %v1648
        %v1650 = vlaneseq
        %v1651 = vshrl.u32 %v1650, 7
        %v1652 = vsub.s32 0, %v1651
        %v1653 = vrot.slane %v985, %v1652
        %v1654 = vlaneseq
        %v1655 = vshrl.u32 %v1654, 7
        %v1656 = vsub.s32 1, %v1655
        %v1657 = vrot.slane %v985, %v1656
        %v1658 = vlaneseq
        %v1659 = vshrl.u32 %v1658, 7
        %v1660 = vsub.s32 2, %v1659
        %v1661 = vrot.slane %v985, %v1660
        %v1662 = vlaneseq
        %v1663 = vshrl.u32 %v1662, 7
        %v1664 = vsub.s32 3, %v1663
        %v1665 = vrot.slane %v985, %v1664
        %v1666 = vlaneseq
        %v1667 = vshrl.u32 %v1666, 7
        %v1668 = vsub.s32 4, %v1667
        %v1669 = vrot.slane %v985, %v1668
        %v1670 = vlaneseq
        %v1671 = vshrl.u32 %v1670, 7
        %v1672 = vsub.s32 5, %v1671
        %v1673 = vrot.slane %v985, %v1672
        %v1674 = vlaneseq
        %v1675 = vshrl.u32 %v1674, 7
        %v1676 = vsub.s32 6, %v1675
        %v1677 = vrot.slane %v985, %v1676
        %v1678 = vlaneseq
        %v1679 = vshrl.u32 %v1678, 7
        %v1680 = vsub.s32 7, %v1679
        %v1681 = vrot.slane %v985, %v1680
        %v1682 = vlaneseq
        %v1683 = vshrl.u32 %v1682, 7
        %v1684 = vsub.s32 0, %v1683
        %v1685 = vrot.slane %v987, %v1684
        %v1686 = vlaneseq
        %v1687 = vshrl.u32 %v1686, 7
        %v1688 = vsub.s32 1, %v1687
        %v1689 = vrot.slane %v987, %v1688
        %v1690 = vlaneseq
        %v1691 = vshrl.u32 %v1690, 7
        %v1692 = vsub.s32 2, %v1691
        %v1693 = vrot.slane %v987, %v1692
        %v1694 = vlaneseq
        %v1695 = vshrl.u32 %v1694, 7
        %v1696 = vsub.s32 3, %v1695
        %v1697 = vrot.slane %v987, %v1696
        %v1698 = vlaneseq
        %v1699 = vshrl.u32 %v1698, 7
        %v1700 = vsub.s32 4, %v1699
        %v1701 = vrot.slane %v987, %v1700
        %v1702 = vlaneseq
        %v1703 = vshrl.u32 %v1702, 7
        %v1704 = vsub.s32 5, %v1703
        %v1705 = vrot.slane %v987, %v1704
        %v1706 = vlaneseq
        %v1707 = vshrl.u32 %v1706, 7
        %v1708 = vsub.s32 6, %v1707
        %v1709 = vrot.slane %v987, %v1708
        %v1710 = vlaneseq
        %v1711 = vshrl.u32 %v1710, 7
        %v1712 = vsub.s32 7, %v1711
        %v1713 = vrot.slane %v987, %v1712
        %v1714 = vlaneseq
        %v1715 = vshrl.u32 %v1714, 7
        %v1716 = vsub.s32 0, %v1715
        %v1717 = vrot.slane %v989, %v1716
        %v1718 = vlaneseq
        %v1719 = vshrl.u32 %v1718, 7
        %v1720 = vsub.s32 1, %v1719
        %v1721 = vrot.slane %v989, %v1720
        %v1722 = vlaneseq
        %v1723 = vshrl.u32 %v1722, 7
        %v1724 = vsub.s32 2, %v1723
        %v1725 = vrot.slane %v989, %v1724
        %v1726 = vlaneseq
        %v1727 = vshrl.u32 %v1726, 7
        %v1728 = vsub.s32 3, %v1727
        %v1729 = vrot.slane %v989, %v1728
        %v1730 = vlaneseq
        %v1731 = vshrl.u32 %v1730, 7
        %v1732 = vsub.s32 4, %v1731
        %v1733 = vrot.slane %v989, %v1732
        %v1734 = vlaneseq
        %v1735 = vshrl.u32 %v1734, 7
        %v1736 = vsub.s32 5, %v1735
        %v1737 = vrot.slane %v989, %v1736
        %v1738 = vlaneseq
        %v1739 = vshrl.u32 %v1738, 7
        %v1740 = vsub.s32 6, %v1739
        %v1741 = vrot.slane %v989, %v1740
        %v1742 = vlaneseq
        %v1743 = vshrl.u32 %v1742, 7
        %v1744 = vsub.s32 7, %v1743
        %v1745 = vrot.slane %v989, %v1744
        %v1746 = vlaneseq
        %v1747 = vshrl.u32 %v1746, 7
        %v1748 = vsub.s32 0, %v1747
        %v1749 = vrot.slane %v991, %v1748
        %v1750 = vlaneseq
        %v1751 = vshrl.u32 %v1750, 7
        %v1752 = vsub.s32 1, %v1751
        %v1753 = vrot.slane %v991, %v1752
        %v1754 = vlaneseq
        %v1755 = vshrl.u32 %v1754, 7
        %v1756 = vsub.s32 2, %v1755
        %v1757 = vrot.slane %v991, %v1756
        %v1758 = vlaneseq
        %v1759 = vshrl.u32 %v1758, 7
        %v1760 = vsub.s32 3, %v1759
        %v1761 = vrot.slane %v991, %v1760
        %v1762 = vlaneseq
        %v1763 = vshrl.u32 %v1762, 7
        %v1764 = vsub.s32 4, %v1763
        %v1765 = vrot.slane %v991, %v1764
        %v1766 = vlaneseq
        %v1767 = vshrl.u32 %v1766, 7
        %v1768 = vsub.s32 5, %v1767
        %v1769 = vrot.slane %v991, %v1768
        %v1770 = vlaneseq
        %v1771 = vshrl.u32 %v1770, 7
        %v1772 = vsub.s32 6, %v1771
        %v1773 = vrot.slane %v991, %v1772
        %v1774 = vlaneseq
        %v1775 = vshrl.u32 %v1774, 7
        %v1776 = vsub.s32 7, %v1775
        %v1777 = vrot.slane %v991, %v1776
        %v1778 = vlaneseq
        %v1779 = vshrl.u32 %v1778, 7
        %v1780 = vsub.s32 0, %v1779
        %v1781 = vrot.slane %v993, %v1780
        %v1782 = vlaneseq
        %v1783 = vshrl.u32 %v1782, 7
        %v1784 = vsub.s32 1, %v1783
        %v1785 = vrot.slane %v993, %v1784
        %v1786 = vlaneseq
        %v1787 = vshrl.u32 %v1786, 7
        %v1788 = vsub.s32 2, %v1787
        %v1789 = vrot.slane %v993, %v1788
        %v1790 = vlaneseq
        %v1791 = vshrl.u32 %v1790, 7
        %v1792 = vsub.s32 3, %v1791
        %v1793 = vrot.slane %v993, %v1792
        %v1794 = vlaneseq
        %v1795 = vshrl.u32 %v1794, 7
        %v1796 = vsub.s32 4, %v1795
        %v1797 = vrot.slane %v993, %v1796
        %v1798 = vlaneseq
        %v1799 = vshrl.u32 %v1798, 7
        %v1800 = vsub.s32 5, %v1799
        %v1801 = vrot.slane %v993, %v1800
        %v1802 = vlaneseq
        %v1803 = vshrl.u32 %v1802, 7
        %v1804 = vsub.s32 6, %v1803
        %v1805 = vrot.slane %v993, %v1804
        %v1806 = vlaneseq
        %v1807 = vshrl.u32 %v1806, 7
        %v1808 = vsub.s32 7, %v1807
        %v1809 = vrot.slane %v993, %v1808
        %v1810 = vlaneseq
        %v1811 = vshrl.u32 %v1810, 7
        %v1812 = vsub.s32 0, %v1811
        %v1813 = vrot.slane %v995, %v1812
        %v1814 = vlaneseq
        %v1815 = vshrl.u32 %v1814, 7
        %v1816 = vsub.s32 1, %v1815
        %v1817 = vrot.slane %v995, %v1816
        %v1818 = vlaneseq
        %v1819 = vshrl.u32 %v1818, 7
        %v1820 = vsub.s32 2, %v1819
        %v1821 = vrot.slane %v995, %v1820
        %v1822 = vlaneseq
        %v1823 = vshrl.u32 %v1822, 7
        %v1824 = vsub.s32 3, %v1823
        %v1825 = vrot.slane %v995, %v1824
        %v1826 = vlaneseq
        %v1827 = vshrl.u32 %v1826, 7
        %v1828 = vsub.s32 4, %v1827
        %v1829 = vrot.slane %v995, %v1828
        %v1830 = vlaneseq
        %v1831 = vshrl.u32 %v1830, 7
        %v1832 = vsub.s32 5, %v1831
        %v1833 = vrot.slane %v995, %v1832
        %v1834 = vlaneseq
        %v1835 = vshrl.u32 %v1834, 7
        %v1836 = vsub.s32 6, %v1835
        %v1837 = vrot.slane %v995, %v1836
        %v1838 = vlaneseq
        %v1839 = vshrl.u32 %v1838, 7
        %v1840 = vsub.s32 7, %v1839
        %v1841 = vrot.slane %v995, %v1840
        %v1842 = vlaneseq
        %v1843 = vshrl.u32 %v1842, 7
        %v1844 = vsub.s32 0, %v1843
        %v1845 = vrot.slane %v997, %v1844
        %v1846 = vlaneseq
        %v1847 = vshrl.u32 %v1846, 7
        %v1848 = vsub.s32 1, %v1847
        %v1849 = vrot.slane %v997, %v1848
        %v1850 = vlaneseq
        %v1851 = vshrl.u32 %v1850, 7
        %v1852 = vsub.s32 2, %v1851
        %v1853 = vrot.slane %v997, %v1852
        %v1854 = vlaneseq
        %v1855 = vshrl.u32 %v1854, 7
        %v1856 = vsub.s32 3, %v1855
        %v1857 = vrot.slane %v997, %v1856
        %v1858 = vlaneseq
        %v1859 = vshrl.u32 %v1858, 7
        %v1860 = vsub.s32 4, %v1859
        %v1861 = vrot.slane %v997, %v1860
        %v1862 = vlaneseq
        %v1863 = vshrl.u32 %v1862, 7
        %v1864 = vsub.s32 5, %v1863
        %v1865 = vrot.slane %v997, %v1864
        %v1866 = vlaneseq
        %v1867 = vshrl.u32 %v1866, 7
        %v1868 = vsub.s32 6, %v1867
        %v1869 = vrot.slane %v997, %v1868
        %v1870 = vlaneseq
        %v1871 = vshrl.u32 %v1870, 7
        %v1872 = vsub.s32 7, %v1871
        %v1873 = vrot.slane %v997, %v1872
        %v1874 = vlaneseq
        %v1875 = vshrl.u32 %v1874, 7
        %v1876 = vsub.s32 0, %v1875
        %v1877 = vrot.slane %v999, %v1876
        %v1878 = vlaneseq
        %v1879 = vshrl.u32 %v1878, 7
        %v1880 = vsub.s32 1, %v1879
        %v1881 = vrot.slane %v999, %v1880
        %v1882 = vlaneseq
        %v1883 = vshrl.u32 %v1882, 7
        %v1884 = vsub.s32 2, %v1883
        %v1885 = vrot.slane %v999, %v1884
        %v1886 = vlaneseq
        %v1887 = vshrl.u32 %v1886, 7
        %v1888 = vsub.s32 3, %v1887
        %v1889 = vrot.slane %v999, %v1888
        %v1890 = vlaneseq
        %v1891 = vshrl.u32 %v1890, 7
        %v1892 = vsub.s32 4, %v1891
        %v1893 = vrot.slane %v999, %v1892
        %v1894 = vlaneseq
        %v1895 = vshrl.u32 %v1894, 7
        %v1896 = vsub.s32 5, %v1895
        %v1897 = vrot.slane %v999, %v1896
        %v1898 = vlaneseq
        %v1899 = vshrl.u32 %v1898, 7
        %v1900 = vsub.s32 6, %v1899
        %v1901 = vrot.slane %v999, %v1900
        %v1902 = vlaneseq
        %v1903 = vshrl.u32 %v1902, 7
        %v1904 = vsub.s32 7, %v1903
        %v1905 = vrot.slane %v999, %v1904
        %v1906 = vlaneseq
        %v1907 = vshrl.u32 %v1906, 7
        %v1908 = vsub.s32 0, %v1907
        %v1909 = vrot.slane %v1001, %v1908
        %v1910 = vlaneseq
        %v1911 = vshrl.u32 %v1910, 7
        %v1912 = vsub.s32 1, %v1911
        %v1913 = vrot.slane %v1001, %v1912
        %v1914 = vlaneseq
        %v1915 = vshrl.u32 %v1914, 7
        %v1916 = vsub.s32 2, %v1915
        %v1917 = vrot.slane %v1001, %v1916
        %v1918 = vlaneseq
        %v1919 = vshrl.u32 %v1918, 7
        %v1920 = vsub.s32 3, %v1919
        %v1921 = vrot.slane %v1001, %v1920
        %v1922 = vlaneseq
        %v1923 = vshrl.u32 %v1922, 7
        %v1924 = vsub.s32 4, %v1923
        %v1925 = vrot.slane %v1001, %v1924
        %v1926 = vlaneseq
        %v1927 = vshrl.u32 %v1926, 7
        %v1928 = vsub.s32 5, %v1927
        %v1929 = vrot.slane %v1001, %v1928
        %v1930 = vlaneseq
        %v1931 = vshrl.u32 %v1930, 7
        %v1932 = vsub.s32 6, %v1931
        %v1933 = vrot.slane %v1001, %v1932
        %v1934 = vlaneseq
        %v1935 = vshrl.u32 %v1934, 7
        %v1936 = vsub.s32 7, %v1935
        %v1937 = vrot.slane %v1001, %v1936
        %v1938 = vlaneseq
        %v1939 = vshrl.u32 %v1938, 7
        %v1940 = vsub.s32 0, %v1939
        %v1941 = vrot.slane %v1003, %v1940
        %v1942 = vlaneseq
        %v1943 = vshrl.u32 %v1942, 7
        %v1944 = vsub.s32 1, %v1943
        %v1945 = vrot.slane %v1003, %v1944
        %v1946 = vlaneseq
        %v1947 = vshrl.u32 %v1946, 7
        %v1948 = vsub.s32 2, %v1947
        %v1949 = vrot.slane %v1003, %v1948
        %v1950 = vlaneseq
        %v1951 = vshrl.u32 %v1950, 7
        %v1952 = vsub.s32 3, %v1951
        %v1953 = vrot.slane %v1003, %v1952
        %v1954 = vlaneseq
        %v1955 = vshrl.u32 %v1954, 7
        %v1956 = vsub.s32 4, %v1955
        %v1957 = vrot.slane %v1003, %v1956
        %v1958 = vlaneseq
        %v1959 = vshrl.u32 %v1958, 7
        %v1960 = vsub.s32 5, %v1959
        %v1961 = vrot.slane %v1003, %v1960
        %v1962 = vlaneseq
        %v1963 = vshrl.u32 %v1962, 7
        %v1964 = vsub.s32 6, %v1963
        %v1965 = vrot.slane %v1003, %v1964
        %v1966 = vlaneseq
        %v1967 = vshrl.u32 %v1966, 7
        %v1968 = vsub.s32 7, %v1967
        %v1969 = vrot.slane %v1003, %v1968
        %v1970 = vlaneseq
        %v1971 = vshrl.u32 %v1970, 7
        %v1972 = vsub.s32 0, %v1971
        %v1973 = vrot.slane %v1005, %v1972
        %v1974 = vlaneseq
        %v1975 = vshrl.u32 %v1974, 7
        %v1976 = vsub.s32 1, %v1975
        %v1977 = vrot.slane %v1005, %v1976
        %v1978 = vlaneseq
        %v1979 = vshrl.u32 %v1978, 7
        %v1980 = vsub.s32 2, %v1979
        %v1981 = vrot.slane %v1005, %v1980
        %v1982 = vlaneseq
        %v1983 = vshrl.u32 %v1982, 7
        %v1984 = vsub.s32 3, %v1983
        %v1985 = vrot.slane %v1005, %v1984
        %v1986 = vlaneseq
        %v1987 = vshrl.u32 %v1986, 7
        %v1988 = vsub.s32 4, %v1987
        %v1989 = vrot.slane %v1005, %v1988
        %v1990 = vlaneseq
        %v1991 = vshrl.u32 %v1990, 7
        %v1992 = vsub.s32 5, %v1991
        %v1993 = vrot.slane %v1005, %v1992
        %v1994 = vlaneseq
        %v1995 = vshrl.u32 %v1994, 7
        %v1996 = vsub.s32 6, %v1995
        %v1997 = vrot.slane %v1005, %v1996
        %v1998 = vlaneseq
        %v1999 = vshrl.u32 %v1998, 7
        %v2000 = vsub.s32 7, %v1999
        %v2001 = vrot.slane %v1005, %v2000
        %v2002 = vlaneseq
        %v2003 = vshrl.u32 %v2002, 7
        %v2004 = vsub.s32 0, %v2003
        %v2005 = vrot.slane %v1007, %v2004
        %v2006 = vlaneseq
        %v2007 = vshrl.u32 %v2006, 7
        %v2008 = vsub.s32 1, %v2007
        %v2009 = vrot.slane %v1007, %v2008
        %v2010 = vlaneseq
        %v2011 = vshrl.u32 %v2010, 7
        %v2012 = vsub.s32 2, %v2011
        %v2013 = vrot.slane %v1007, %v2012
        %v2014 = vlaneseq
        %v2015 = vshrl.u32 %v2014, 7
        %v2016 = vsub.s32 3, %v2015
        %v2017 = vrot.slane %v1007, %v2016
        %v2018 = vlaneseq
        %v2019 = vshrl.u32 %v2018, 7
        %v2020 = vsub.s32 4, %v2019
        %v2021 = vrot.slane %v1007, %v2020
        %v2022 = vlaneseq
        %v2023 = vshrl.u32 %v2022, 7
        %v2024 = vsub.s32 5, %v2023
        %v2025 = vrot.slane %v1007, %v2024
        %v2026 = vlaneseq
        %v2027 = vshrl.u32 %v2026, 7
        %v2028 = vsub.s32 6, %v2027
        %v2029 = vrot.slane %v1007, %v2028
        %v2030 = vlaneseq
        %v2031 = vshrl.u32 %v2030, 7
        %v2032 = vsub.s32 7, %v2031
        %v2033 = vrot.slane %v1007, %v2032
        %v2034 = vlaneseq
        %v2035 = vshrl.u32 %v2034, 7
        %v2036 = vsub.s32 0, %v2035
        %v2037 = vrot.slane %v1009, %v2036
        %v2038 = vlaneseq
        %v2039 = vshrl.u32 %v2038, 7
        %v2040 = vsub.s32 1, %v2039
        %v2041 = vrot.slane %v1009, %v2040
        %v2042 = vlaneseq
        %v2043 = vshrl.u32 %v2042, 7
        %v2044 = vsub.s32 2, %v2043
        %v2045 = vrot.slane %v1009, %v2044
        %v2046 = vlaneseq
        %v2047 = vshrl.u32 %v2046, 7
        %v2048 = vsub.s32 3, %v2047
        %v2049 = vrot.slane %v1009, %v2048
        %v2050 = vlaneseq
        %v2051 = vshrl.u32 %v2050, 7
        %v2052 = vsub.s32 4, %v2051
        %v2053 = vrot.slane %v1009, %v2052
        %v2054 = vlaneseq
        %v2055 = vshrl.u32 %v2054, 7
        %v2056 = vsub.s32 5, %v2055
        %v2057 = vrot.slane %v1009, %v2056
        %v2058 = vlaneseq
        %v2059 = vshrl.u32 %v2058, 7
        %v2060 = vsub.s32 6, %v2059
        %v2061 = vrot.slane %v1009, %v2060
        %v2062 = vlaneseq
        %v2063 = vshrl.u32 %v2062, 7
        %v2064 = vsub.s32 7, %v2063
        %v2065 = vrot.slane %v1009, %v2064
        %v2066 = vcombine.low %v1045, %v1049
        %v2067 = vcombine.low %v1053, %v1057
        %v2068 = vcombine.low %v1061, %v1065
        %v2069 = vcombine.low %v1069, %v1073
        %v2071 = vunpack.c.l.s4 1966171168
        %v2072 = vunpack.c.0.s8 %v2071
        %v2073 = vlaneseq
        %v2074 = vshrl.u32 %v2073, 7
        %v2075 = vsub.s32 %v2072, %v2074
        %v2076 = vrot.slane %v2066, %v2075
        %v2078 = vunpack.c.l.s4 1966171168
        %v2079 = vunpack.c.0.s8 %v2078
        %v2080 = vlaneseq
        %v2081 = vshrl.u32 %v2080, 7
        %v2082 = vsub.s32 %v2079, %v2081
        %v2083 = vrot.slane %v2067, %v2082
        %v2085 = vunpack.c.l.s4 1966171168
        %v2086 = vunpack.c.0.s8 %v2085
        %v2087 = vlaneseq
        %v2088 = vshrl.u32 %v2087, 7
        %v2089 = vsub.s32 %v2086, %v2088
        %v2090 = vrot.slane %v2068, %v2089
        %v2092 = vunpack.c.l.s4 1966171168
        %v2093 = vunpack.c.0.s8 %v2092
        %v2094 = vlaneseq
        %v2095 = vshrl.u32 %v2094, 7
        %v2096 = vsub.s32 %v2093, %v2095
        %v2097 = vrot.slane %v2069, %v2096
        %v2098 = vcombine.low %v2076, %v2083
        %v2099 = vcombine.low %v2090, %v2097
        %v2101 = vunpack.c.l.s4 1966171168
        %v2102 = vunpack.c.0.s8 %v2101
        %v2103 = vlaneseq
        %v2104 = vshrl.u32 %v2103, 7
        %v2105 = vsub.s32 %v2102, %v2104
        %v2106 = vrot.slane %v2098, %v2105
        %v2108 = vunpack.c.l.s4 1966171168
        %v2109 = vunpack.c.0.s8 %v2108
        %v2110 = vlaneseq
        %v2111 = vshrl.u32 %v2110, 7
        %v2112 = vsub.s32 %v2109, %v2111
        %v2113 = vrot.slane %v2099, %v2112
        %v2114 = vcombine.low %v2106, %v2113
        %v2115 = vcombine.low %v1077, %v1081
        %v2116 = vcombine.low %v1085, %v1089
        %v2117 = vcombine.low %v1093, %v1097
        %v2118 = vcombine.low %v1101, %v1105
        %v2120 = vunpack.c.l.s4 1966171168
        %v2121 = vunpack.c.0.s8 %v2120
        %v2122 = vlaneseq
        %v2123 = vshrl.u32 %v2122, 7
        %v2124 = vsub.s32 %v2121, %v2123
        %v2125 = vrot.slane %v2115, %v2124
        %v2127 = vunpack.c.l.s4 1966171168
        %v2128 = vunpack.c.0.s8 %v2127
        %v2129 = vlaneseq
        %v2130 = vshrl.u32 %v2129, 7
        %v2131 = vsub.s32 %v2128, %v2130
        %v2132 = vrot.slane %v2116, %v2131
        %v2134 = vunpack.c.l.s4 1966171168
        %v2135 = vunpack.c.0.s8 %v2134
        %v2136 = vlaneseq
        %v2137 = vshrl.u32 %v2136, 7
        %v2138 = vsub.s32 %v2135, %v2137
        %v2139 = vrot.slane %v2117, %v2138
        %v2141 = vunpack.c.l.s4 1966171168
        %v2142 = vunpack.c.0.s8 %v2141
        %v2143 = vlaneseq
        %v2144 = vshrl.u32 %v2143, 7
        %v2145 = vsub.s32 %v2142, %v2144
        %v2146 = vrot.slane %v2118, %v2145
        %v2147 = vcombine.low %v2125, %v2132
        %v2148 = vcombine.low %v2139, %v2146
        %v2150 = vunpack.c.l.s4 1966171168
        %v2151 = vunpack.c.0.s8 %v2150
        %v2152 = vlaneseq
        %v2153 = vshrl.u32 %v2152, 7
        %v2154 = vsub.s32 %v2151, %v2153
        %v2155 = vrot.slane %v2147, %v2154
        %v2157 = vunpack.c.l.s4 1966171168
        %v2158 = vunpack.c.0.s8 %v2157
        %v2159 = vlaneseq
        %v2160 = vshrl.u32 %v2159, 7
        %v2161 = vsub.s32 %v2158, %v2160
        %v2162 = vrot.slane %v2148, %v2161
        %v2163 = vcombine.low %v2155, %v2162
        %v2164 = vcombine.low %v1109, %v1113
        %v2165 = vcombine.low %v1117, %v1121
        %v2166 = vcombine.low %v1125, %v1129
        %v2167 = vcombine.low %v1133, %v1137
        %v2169 = vunpack.c.l.s4 1966171168
        %v2170 = vunpack.c.0.s8 %v2169
        %v2171 = vlaneseq
        %v2172 = vshrl.u32 %v2171, 7
        %v2173 = vsub.s32 %v2170, %v2172
        %v2174 = vrot.slane %v2164, %v2173
        %v2176 = vunpack.c.l.s4 1966171168
        %v2177 = vunpack.c.0.s8 %v2176
        %v2178 = vlaneseq
        %v2179 = vshrl.u32 %v2178, 7
        %v2180 = vsub.s32 %v2177, %v2179
        %v2181 = vrot.slane %v2165, %v2180
        %v2183 = vunpack.c.l.s4 1966171168
        %v2184 = vunpack.c.0.s8 %v2183
        %v2185 = vlaneseq
        %v2186 = vshrl.u32 %v2185, 7
        %v2187 = vsub.s32 %v2184, %v2186
        %v2188 = vrot.slane %v2166, %v2187
        %v2190 = vunpack.c.l.s4 1966171168
        %v2191 = vunpack.c.0.s8 %v2190
        %v2192 = vlaneseq
        %v2193 = vshrl.u32 %v2192, 7
        %v2194 = vsub.s32 %v2191, %v2193
        %v2195 = vrot.slane %v2167, %v2194
        %v2196 = vcombine.low %v2174, %v2181
        %v2197 = vcombine.low %v2188, %v2195
        %v2199 = vunpack.c.l.s4 1966171168
        %v2200 = vunpack.c.0.s8 %v2199
        %v2201 = vlaneseq
        %v2202 = vshrl.u32 %v2201, 7
        %v2203 = vsub.s32 %v2200, %v2202
        %v2204 = vrot.slane %v2196, %v2203
        %v2206 = vunpack.c.l.s4 1966171168
        %v2207 = vunpack.c.0.s8 %v2206
        %v2208 = vlaneseq
        %v2209 = vshrl.u32 %v2208, 7
        %v2210 = vsub.s32 %v2207, %v2209
        %v2211 = vrot.slane %v2197, %v2210
        %v2212 = vcombine.low %v2204, %v2211
        %v2213 = vcombine.low %v1141, %v1145
        %v2214 = vcombine.low %v1149, %v1153
        %v2215 = vcombine.low %v1157, %v1161
        %v2216 = vcombine.low %v1165, %v1169
        %v2218 = vunpack.c.l.s4 1966171168
        %v2219 = vunpack.c.0.s8 %v2218
        %v2220 = vlaneseq
        %v2221 = vshrl.u32 %v2220, 7
        %v2222 = vsub.s32 %v2219, %v2221
        %v2223 = vrot.slane %v2213, %v2222
        %v2225 = vunpack.c.l.s4 1966171168
        %v2226 = vunpack.c.0.s8 %v2225
        %v2227 = vlaneseq
        %v2228 = vshrl.u32 %v2227, 7
        %v2229 = vsub.s32 %v2226, %v2228
        %v2230 = vrot.slane %v2214, %v2229
        %v2232 = vunpack.c.l.s4 1966171168
        %v2233 = vunpack.c.0.s8 %v2232
        %v2234 = vlaneseq
        %v2235 = vshrl.u32 %v2234, 7
        %v2236 = vsub.s32 %v2233, %v2235
        %v2237 = vrot.slane %v2215, %v2236
        %v2239 = vunpack.c.l.s4 1966171168
        %v2240 = vunpack.c.0.s8 %v2239
        %v2241 = vlaneseq
        %v2242 = vshrl.u32 %v2241, 7
        %v2243 = vsub.s32 %v2240, %v2242
        %v2244 = vrot.slane %v2216, %v2243
        %v2245 = vcombine.low %v2223, %v2230
        %v2246 = vcombine.low %v2237, %v2244
        %v2248 = vunpack.c.l.s4 1966171168
        %v2249 = vunpack.c.0.s8 %v2248
        %v2250 = vlaneseq
        %v2251 = vshrl.u32 %v2250, 7
        %v2252 = vsub.s32 %v2249, %v2251
        %v2253 = vrot.slane %v2245, %v2252
        %v2255 = vunpack.c.l.s4 1966171168
        %v2256 = vunpack.c.0.s8 %v2255
        %v2257 = vlaneseq
        %v2258 = vshrl.u32 %v2257, 7
        %v2259 = vsub.s32 %v2256, %v2258
        %v2260 = vrot.slane %v2246, %v2259
        %v2261 = vcombine.low %v2253, %v2260
        %v2262 = vcombine.low %v1173, %v1177
        %v2263 = vcombine.low %v1181, %v1185
        %v2264 = vcombine.low %v1189, %v1193
        %v2265 = vcombine.low %v1197, %v1201
        %v2267 = vunpack.c.l.s4 1966171168
        %v2268 = vunpack.c.0.s8 %v2267
        %v2269 = vlaneseq
        %v2270 = vshrl.u32 %v2269, 7
        %v2271 = vsub.s32 %v2268, %v2270
        %v2272 = vrot.slane %v2262, %v2271
        %v2274 = vunpack.c.l.s4 1966171168
        %v2275 = vunpack.c.0.s8 %v2274
        %v2276 = vlaneseq
        %v2277 = vshrl.u32 %v2276, 7
        %v2278 = vsub.s32 %v2275, %v2277
        %v2279 = vrot.slane %v2263, %v2278
        %v2281 = vunpack.c.l.s4 1966171168
        %v2282 = vunpack.c.0.s8 %v2281
        %v2283 = vlaneseq
        %v2284 = vshrl.u32 %v2283, 7
        %v2285 = vsub.s32 %v2282, %v2284
        %v2286 = vrot.slane %v2264, %v2285
        %v2288 = vunpack.c.l.s4 1966171168
        %v2289 = vunpack.c.0.s8 %v2288
        %v2290 = vlaneseq
        %v2291 = vshrl.u32 %v2290, 7
        %v2292 = vsub.s32 %v2289, %v2291
        %v2293 = vrot.slane %v2265, %v2292
        %v2294 = vcombine.low %v2272, %v2279
        %v2295 = vcombine.low %v2286, %v2293
        %v2297 = vunpack.c.l.s4 1966171168
        %v2298 = vunpack.c.0.s8 %v2297
        %v2299 = vlaneseq
        %v2300 = vshrl.u32 %v2299, 7
        %v2301 = vsub.s32 %v2298, %v2300
        %v2302 = vrot.slane %v2294, %v2301
        %v2304 = vunpack.c.l.s4 1966171168
        %v2305 = vunpack.c.0.s8 %v2304
        %v2306 = vlaneseq
        %v2307 = vshrl.u32 %v2306, 7
        %v2308 = vsub.s32 %v2305, %v2307
        %v2309 = vrot.slane %v2295, %v2308
        %v2310 = vcombine.low %v2302, %v2309
        %v2311 = vcombine.low %v1205, %v1209
        %v2312 = vcombine.low %v1213, %v1217
        %v2313 = vcombine.low %v1221, %v1225
        %v2314 = vcombine.low %v1229, %v1233
        %v2316 = vunpack.c.l.s4 1966171168
        %v2317 = vunpack.c.0.s8 %v2316
        %v2318 = vlaneseq
        %v2319 = vshrl.u32 %v2318, 7
        %v2320 = vsub.s32 %v2317, %v2319
        %v2321 = vrot.slane %v2311, %v2320
        %v2323 = vunpack.c.l.s4 1966171168
        %v2324 = vunpack.c.0.s8 %v2323
        %v2325 = vlaneseq
        %v2326 = vshrl.u32 %v2325, 7
        %v2327 = vsub.s32 %v2324, %v2326
        %v2328 = vrot.slane %v2312, %v2327
        %v2330 = vunpack.c.l.s4 1966171168
        %v2331 = vunpack.c.0.s8 %v2330
        %v2332 = vlaneseq
        %v2333 = vshrl.u32 %v2332, 7
        %v2334 = vsub.s32 %v2331, %v2333
        %v2335 = vrot.slane %v2313, %v2334
        %v2337 = vunpack.c.l.s4 1966171168
        %v2338 = vunpack.c.0.s8 %v2337
        %v2339 = vlaneseq
        %v2340 = vshrl.u32 %v2339, 7
        %v2341 = vsub.s32 %v2338, %v2340
        %v2342 = vrot.slane %v2314, %v2341
        %v2343 = vcombine.low %v2321, %v2328
        %v2344 = vcombine.low %v2335, %v2342
        %v2346 = vunpack.c.l.s4 1966171168
        %v2347 = vunpack.c.0.s8 %v2346
        %v2348 = vlaneseq
        %v2349 = vshrl.u32 %v2348, 7
        %v2350 = vsub.s32 %v2347, %v2349
        %v2351 = vrot.slane %v2343, %v2350
        %v2353 = vunpack.c.l.s4 1966171168
        %v2354 = vunpack.c.0.s8 %v2353
        %v2355 = vlaneseq
        %v2356 = vshrl.u32 %v2355, 7
        %v2357 = vsub.s32 %v2354, %v2356
        %v2358 = vrot.slane %v2344, %v2357
        %v2359 = vcombine.low %v2351, %v2358
        %v2360 = vcombine.low %v1237, %v1241
        %v2361 = vcombine.low %v1245, %v1249
        %v2362 = vcombine.low %v1253, %v1257
        %v2363 = vcombine.low %v1261, %v1265
        %v2365 = vunpack.c.l.s4 1966171168
        %v2366 = vunpack.c.0.s8 %v2365
        %v2367 = vlaneseq
        %v2368 = vshrl.u32 %v2367, 7
        %v2369 = vsub.s32 %v2366, %v2368
        %v2370 = vrot.slane %v2360, %v2369
        %v2372 = vunpack.c.l.s4 1966171168
        %v2373 = vunpack.c.0.s8 %v2372
        %v2374 = vlaneseq
        %v2375 = vshrl.u32 %v2374, 7
        %v2376 = vsub.s32 %v2373, %v2375
        %v2377 = vrot.slane %v2361, %v2376
        %v2379 = vunpack.c.l.s4 1966171168
        %v2380 = vunpack.c.0.s8 %v2379
        %v2381 = vlaneseq
        %v2382 = vshrl.u32 %v2381, 7
        %v2383 = vsub.s32 %v2380, %v2382
        %v2384 = vrot.slane %v2362, %v2383
        %v2386 = vunpack.c.l.s4 1966171168
        %v2387 = vunpack.c.0.s8 %v2386
        %v2388 = vlaneseq
        %v2389 = vshrl.u32 %v2388, 7
        %v2390 = vsub.s32 %v2387, %v2389
        %v2391 = vrot.slane %v2363, %v2390
        %v2392 = vcombine.low %v2370, %v2377
        %v2393 = vcombine.low %v2384, %v2391
        %v2395 = vunpack.c.l.s4 1966171168
        %v2396 = vunpack.c.0.s8 %v2395
        %v2397 = vlaneseq
        %v2398 = vshrl.u32 %v2397, 7
        %v2399 = vsub.s32 %v2396, %v2398
        %v2400 = vrot.slane %v2392, %v2399
        %v2402 = vunpack.c.l.s4 1966171168
        %v2403 = vunpack.c.0.s8 %v2402
        %v2404 = vlaneseq
        %v2405 = vshrl.u32 %v2404, 7
        %v2406 = vsub.s32 %v2403, %v2405
        %v2407 = vrot.slane %v2393, %v2406
        %v2408 = vcombine.low %v2400, %v2407
        %v2409 = vcombine.low %v1269, %v1273
        %v2410 = vcombine.low %v1277, %v1281
        %v2411 = vcombine.low %v1285, %v1289
        %v2412 = vcombine.low %v1293, %v1297
        %v2414 = vunpack.c.l.s4 1966171168
        %v2415 = vunpack.c.0.s8 %v2414
        %v2416 = vlaneseq
        %v2417 = vshrl.u32 %v2416, 7
        %v2418 = vsub.s32 %v2415, %v2417
        %v2419 = vrot.slane %v2409, %v2418
        %v2421 = vunpack.c.l.s4 1966171168
        %v2422 = vunpack.c.0.s8 %v2421
        %v2423 = vlaneseq
        %v2424 = vshrl.u32 %v2423, 7
        %v2425 = vsub.s32 %v2422, %v2424
        %v2426 = vrot.slane %v2410, %v2425
        %v2428 = vunpack.c.l.s4 1966171168
        %v2429 = vunpack.c.0.s8 %v2428
        %v2430 = vlaneseq
        %v2431 = vshrl.u32 %v2430, 7
        %v2432 = vsub.s32 %v2429, %v2431
        %v2433 = vrot.slane %v2411, %v2432
        %v2435 = vunpack.c.l.s4 1966171168
        %v2436 = vunpack.c.0.s8 %v2435
        %v2437 = vlaneseq
        %v2438 = vshrl.u32 %v2437, 7
        %v2439 = vsub.s32 %v2436, %v2438
        %v2440 = vrot.slane %v2412, %v2439
        %v2441 = vcombine.low %v2419, %v2426
        %v2442 = vcombine.low %v2433, %v2440
        %v2444 = vunpack.c.l.s4 1966171168
        %v2445 = vunpack.c.0.s8 %v2444
        %v2446 = vlaneseq
        %v2447 = vshrl.u32 %v2446, 7
        %v2448 = vsub.s32 %v2445, %v2447
        %v2449 = vrot.slane %v2441, %v2448
        %v2451 = vunpack.c.l.s4 1966171168
        %v2452 = vunpack.c.0.s8 %v2451
        %v2453 = vlaneseq
        %v2454 = vshrl.u32 %v2453, 7
        %v2455 = vsub.s32 %v2452, %v2454
        %v2456 = vrot.slane %v2442, %v2455
        %v2457 = vcombine.low %v2449, %v2456
        %v2458 = vcombine.low %v1301, %v1305
        %v2459 = vcombine.low %v1309, %v1313
        %v2460 = vcombine.low %v1317, %v1321
        %v2461 = vcombine.low %v1325, %v1329
        %v2463 = vunpack.c.l.s4 1966171168
        %v2464 = vunpack.c.0.s8 %v2463
        %v2465 = vlaneseq
        %v2466 = vshrl.u32 %v2465, 7
        %v2467 = vsub.s32 %v2464, %v2466
        %v2468 = vrot.slane %v2458, %v2467
        %v2470 = vunpack.c.l.s4 1966171168
        %v2471 = vunpack.c.0.s8 %v2470
        %v2472 = vlaneseq
        %v2473 = vshrl.u32 %v2472, 7
        %v2474 = vsub.s32 %v2471, %v2473
        %v2475 = vrot.slane %v2459, %v2474
        %v2477 = vunpack.c.l.s4 1966171168
        %v2478 = vunpack.c.0.s8 %v2477
        %v2479 = vlaneseq
        %v2480 = vshrl.u32 %v2479, 7
        %v2481 = vsub.s32 %v2478, %v2480
        %v2482 = vrot.slane %v2460, %v2481
        %v2484 = vunpack.c.l.s4 1966171168
        %v2485 = vunpack.c.0.s8 %v2484
        %v2486 = vlaneseq
        %v2487 = vshrl.u32 %v2486, 7
        %v2488 = vsub.s32 %v2485, %v2487
        %v2489 = vrot.slane %v2461, %v2488
        %v2490 = vcombine.low %v2468, %v2475
        %v2491 = vcombine.low %v2482, %v2489
        %v2493 = vunpack.c.l.s4 1966171168
        %v2494 = vunpack.c.0.s8 %v2493
        %v2495 = vlaneseq
        %v2496 = vshrl.u32 %v2495, 7
        %v2497 = vsub.s32 %v2494, %v2496
        %v2498 = vrot.slane %v2490, %v2497
        %v2500 = vunpack.c.l.s4 1966171168
        %v2501 = vunpack.c.0.s8 %v2500
        %v2502 = vlaneseq
        %v2503 = vshrl.u32 %v2502, 7
        %v2504 = vsub.s32 %v2501, %v2503
        %v2505 = vrot.slane %v2491, %v2504
        %v2506 = vcombine.low %v2498, %v2505
        %v2507 = vcombine.low %v1333, %v1337
        %v2508 = vcombine.low %v1341, %v1345
        %v2509 = vcombine.low %v1349, %v1353
        %v2510 = vcombine.low %v1357, %v1361
        %v2512 = vunpack.c.l.s4 1966171168
        %v2513 = vunpack.c.0.s8 %v2512
        %v2514 = vlaneseq
        %v2515 = vshrl.u32 %v2514, 7
        %v2516 = vsub.s32 %v2513, %v2515
        %v2517 = vrot.slane %v2507, %v2516
        %v2519 = vunpack.c.l.s4 1966171168
        %v2520 = vunpack.c.0.s8 %v2519
        %v2521 = vlaneseq
        %v2522 = vshrl.u32 %v2521, 7
        %v2523 = vsub.s32 %v2520, %v2522
        %v2524 = vrot.slane %v2508, %v2523
        %v2526 = vunpack.c.l.s4 1966171168
        %v2527 = vunpack.c.0.s8 %v2526
        %v2528 = vlaneseq
        %v2529 = vshrl.u32 %v2528, 7
        %v2530 = vsub.s32 %v2527, %v2529
        %v2531 = vrot.slane %v2509, %v2530
        %v2533 = vunpack.c.l.s4 1966171168
        %v2534 = vunpack.c.0.s8 %v2533
        %v2535 = vlaneseq
        %v2536 = vshrl.u32 %v2535, 7
        %v2537 = vsub.s32 %v2534, %v2536
        %v2538 = vrot.slane %v2510, %v2537
        %v2539 = vcombine.low %v2517, %v2524
        %v2540 = vcombine.low %v2531, %v2538
        %v2542 = vunpack.c.l.s4 1966171168
        %v2543 = vunpack.c.0.s8 %v2542
        %v2544 = vlaneseq
        %v2545 = vshrl.u32 %v2544, 7
        %v2546 = vsub.s32 %v2543, %v2545
        %v2547 = vrot.slane %v2539, %v2546
        %v2549 = vunpack.c.l.s4 1966171168
        %v2550 = vunpack.c.0.s8 %v2549
        %v2551 = vlaneseq
        %v2552 = vshrl.u32 %v2551, 7
        %v2553 = vsub.s32 %v2550, %v2552
        %v2554 = vrot.slane %v2540, %v2553
        %v2555 = vcombine.low %v2547, %v2554
        %v2556 = vcombine.low %v1365, %v1369
        %v2557 = vcombine.low %v1373, %v1377
        %v2558 = vcombine.low %v1381, %v1385
        %v2559 = vcombine.low %v1389, %v1393
        %v2561 = vunpack.c.l.s4 1966171168
        %v2562 = vunpack.c.0.s8 %v2561
        %v2563 = vlaneseq
        %v2564 = vshrl.u32 %v2563, 7
        %v2565 = vsub.s32 %v2562, %v2564
        %v2566 = vrot.slane %v2556, %v2565
        %v2568 = vunpack.c.l.s4 1966171168
        %v2569 = vunpack.c.0.s8 %v2568
        %v2570 = vlaneseq
        %v2571 = vshrl.u32 %v2570, 7
        %v2572 = vsub.s32 %v2569, %v2571
        %v2573 = vrot.slane %v2557, %v2572
        %v2575 = vunpack.c.l.s4 1966171168
        %v2576 = vunpack.c.0.s8 %v2575
        %v2577 = vlaneseq
        %v2578 = vshrl.u32 %v2577, 7
        %v2579 = vsub.s32 %v2576, %v2578
        %v2580 = vrot.slane %v2558, %v2579
        %v2582 = vunpack.c.l.s4 1966171168
        %v2583 = vunpack.c.0.s8 %v2582
        %v2584 = vlaneseq
        %v2585 = vshrl.u32 %v2584, 7
        %v2586 = vsub.s32 %v2583, %v2585
        %v2587 = vrot.slane %v2559, %v2586
        %v2588 = vcombine.low %v2566, %v2573
        %v2589 = vcombine.low %v2580, %v2587
        %v2591 = vunpack.c.l.s4 1966171168
        %v2592 = vunpack.c.0.s8 %v2591
        %v2593 = vlaneseq
        %v2594 = vshrl.u32 %v2593, 7
        %v2595 = vsub.s32 %v2592, %v2594
        %v2596 = vrot.slane %v2588, %v2595
        %v2598 = vunpack.c.l.s4 1966171168
        %v2599 = vunpack.c.0.s8 %v2598
        %v2600 = vlaneseq
        %v2601 = vshrl.u32 %v2600, 7
        %v2602 = vsub.s32 %v2599, %v2601
        %v2603 = vrot.slane %v2589, %v2602
        %v2604 = vcombine.low %v2596, %v2603
        %v2605 = vcombine.low %v1397, %v1401
        %v2606 = vcombine.low %v1405, %v1409
        %v2607 = vcombine.low %v1413, %v1417
        %v2608 = vcombine.low %v1421, %v1425
        %v2610 = vunpack.c.l.s4 1966171168
        %v2611 = vunpack.c.0.s8 %v2610
        %v2612 = vlaneseq
        %v2613 = vshrl.u32 %v2612, 7
        %v2614 = vsub.s32 %v2611, %v2613
        %v2615 = vrot.slane %v2605, %v2614
        %v2617 = vunpack.c.l.s4 1966171168
        %v2618 = vunpack.c.0.s8 %v2617
        %v2619 = vlaneseq
        %v2620 = vshrl.u32 %v2619, 7
        %v2621 = vsub.s32 %v2618, %v2620
        %v2622 = vrot.slane %v2606, %v2621
        %v2624 = vunpack.c.l.s4 1966171168
        %v2625 = vunpack.c.0.s8 %v2624
        %v2626 = vlaneseq
        %v2627 = vshrl.u32 %v2626, 7
        %v2628 = vsub.s32 %v2625, %v2627
        %v2629 = vrot.slane %v2607, %v2628
        %v2631 = vunpack.c.l.s4 1966171168
        %v2632 = vunpack.c.0.s8 %v2631
        %v2633 = vlaneseq
        %v2634 = vshrl.u32 %v2633, 7
        %v2635 = vsub.s32 %v2632, %v2634
        %v2636 = vrot.slane %v2608, %v2635
        %v2637 = vcombine.low %v2615, %v2622
        %v2638 = vcombine.low %v2629, %v2636
        %v2640 = vunpack.c.l.s4 1966171168
        %v2641 = vunpack.c.0.s8 %v2640
        %v2642 = vlaneseq
        %v2643 = vshrl.u32 %v2642, 7
        %v2644 = vsub.s32 %v2641, %v2643
        %v2645 = vrot.slane %v2637, %v2644
        %v2647 = vunpack.c.l.s4 1966171168
        %v2648 = vunpack.c.0.s8 %v2647
        %v2649 = vlaneseq
        %v2650 = vshrl.u32 %v2649, 7
        %v2651 = vsub.s32 %v2648, %v2650
        %v2652 = vrot.slane %v2638, %v2651
        %v2653 = vcombine.low %v2645, %v2652
        %v2654 = vcombine.low %v1429, %v1433
        %v2655 = vcombine.low %v1437, %v1441
        %v2656 = vcombine.low %v1445, %v1449
        %v2657 = vcombine.low %v1453, %v1457
        %v2659 = vunpack.c.l.s4 1966171168
        %v2660 = vunpack.c.0.s8 %v2659
        %v2661 = vlaneseq
        %v2662 = vshrl.u32 %v2661, 7
        %v2663 = vsub.s32 %v2660, %v2662
        %v2664 = vrot.slane %v2654, %v2663
        %v2666 = vunpack.c.l.s4 1966171168
        %v2667 = vunpack.c.0.s8 %v2666
        %v2668 = vlaneseq
        %v2669 = vshrl.u32 %v2668, 7
        %v2670 = vsub.s32 %v2667, %v2669
        %v2671 = vrot.slane %v2655, %v2670
        %v2673 = vunpack.c.l.s4 1966171168
        %v2674 = vunpack.c.0.s8 %v2673
        %v2675 = vlaneseq
        %v2676 = vshrl.u32 %v2675, 7
        %v2677 = vsub.s32 %v2674, %v2676
        %v2678 = vrot.slane %v2656, %v2677
        %v2680 = vunpack.c.l.s4 1966171168
        %v2681 = vunpack.c.0.s8 %v2680
        %v2682 = vlaneseq
        %v2683 = vshrl.u32 %v2682, 7
        %v2684 = vsub.s32 %v2681, %v2683
        %v2685 = vrot.slane %v2657, %v2684
        %v2686 = vcombine.low %v2664, %v2671
        %v2687 = vcombine.low %v2678, %v2685
        %v2689 = vunpack.c.l.s4 1966171168
        %v2690 = vunpack.c.0.s8 %v2689
        %v2691 = vlaneseq
        %v2692 = vshrl.u32 %v2691, 7
        %v2693 = vsub.s32 %v2690, %v2692
        %v2694 = vrot.slane %v2686, %v2693
        %v2696 = vunpack.c.l.s4 1966171168
        %v2697 = vunpack.c.0.s8 %v2696
        %v2698 = vlaneseq
        %v2699 = vshrl.u32 %v2698, 7
        %v2700 = vsub.s32 %v2697, %v2699
        %v2701 = vrot.slane %v2687, %v2700
        %v2702 = vcombine.low %v2694, %v2701
        %v2703 = vcombine.low %v1461, %v1465
        %v2704 = vcombine.low %v1469, %v1473
        %v2705 = vcombine.low %v1477, %v1481
        %v2706 = vcombine.low %v1485, %v1489
        %v2708 = vunpack.c.l.s4 1966171168
        %v2709 = vunpack.c.0.s8 %v2708
        %v2710 = vlaneseq
        %v2711 = vshrl.u32 %v2710, 7
        %v2712 = vsub.s32 %v2709, %v2711
        %v2713 = vrot.slane %v2703, %v2712
        %v2715 = vunpack.c.l.s4 1966171168
        %v2716 = vunpack.c.0.s8 %v2715
        %v2717 = vlaneseq
        %v2718 = vshrl.u32 %v2717, 7
        %v2719 = vsub.s32 %v2716, %v2718
        %v2720 = vrot.slane %v2704, %v2719
        %v2722 = vunpack.c.l.s4 1966171168
        %v2723 = vunpack.c.0.s8 %v2722
        %v2724 = vlaneseq
        %v2725 = vshrl.u32 %v2724, 7
        %v2726 = vsub.s32 %v2723, %v2725
        %v2727 = vrot.slane %v2705, %v2726
        %v2729 = vunpack.c.l.s4 1966171168
        %v2730 = vunpack.c.0.s8 %v2729
        %v2731 = vlaneseq
        %v2732 = vshrl.u32 %v2731, 7
        %v2733 = vsub.s32 %v2730, %v2732
        %v2734 = vrot.slane %v2706, %v2733
        %v2735 = vcombine.low %v2713, %v2720
        %v2736 = vcombine.low %v2727, %v2734
        %v2738 = vunpack.c.l.s4 1966171168
        %v2739 = vunpack.c.0.s8 %v2738
        %v2740 = vlaneseq
        %v2741 = vshrl.u32 %v2740, 7
        %v2742 = vsub.s32 %v2739, %v2741
        %v2743 = vrot.slane %v2735, %v2742
        %v2745 = vunpack.c.l.s4 1966171168
        %v2746 = vunpack.c.0.s8 %v2745
        %v2747 = vlaneseq
        %v2748 = vshrl.u32 %v2747, 7
        %v2749 = vsub.s32 %v2746, %v2748
        %v2750 = vrot.slane %v2736, %v2749
        %v2751 = vcombine.low %v2743, %v2750
        %v2752 = vcombine.low %v1493, %v1497
        %v2753 = vcombine.low %v1501, %v1505
        %v2754 = vcombine.low %v1509, %v1513
        %v2755 = vcombine.low %v1517, %v1521
        %v2757 = vunpack.c.l.s4 1966171168
        %v2758 = vunpack.c.0.s8 %v2757
        %v2759 = vlaneseq
        %v2760 = vshrl.u32 %v2759, 7
        %v2761 = vsub.s32 %v2758, %v2760
        %v2762 = vrot.slane %v2752, %v2761
        %v2764 = vunpack.c.l.s4 1966171168
        %v2765 = vunpack.c.0.s8 %v2764
        %v2766 = vlaneseq
        %v2767 = vshrl.u32 %v2766, 7
        %v2768 = vsub.s32 %v2765, %v2767
        %v2769 = vrot.slane %v2753, %v2768
        %v2771 = vunpack.c.l.s4 1966171168
        %v2772 = vunpack.c.0.s8 %v2771
        %v2773 = vlaneseq
        %v2774 = vshrl.u32 %v2773, 7
        %v2775 = vsub.s32 %v2772, %v2774
        %v2776 = vrot.slane %v2754, %v2775
        %v2778 = vunpack.c.l.s4 1966171168
        %v2779 = vunpack.c.0.s8 %v2778
        %v2780 = vlaneseq
        %v2781 = vshrl.u32 %v2780, 7
        %v2782 = vsub.s32 %v2779, %v2781
        %v2783 = vrot.slane %v2755, %v2782
        %v2784 = vcombine.low %v2762, %v2769
        %v2785 = vcombine.low %v2776, %v2783
        %v2787 = vunpack.c.l.s4 1966171168
        %v2788 = vunpack.c.0.s8 %v2787
        %v2789 = vlaneseq
        %v2790 = vshrl.u32 %v2789, 7
        %v2791 = vsub.s32 %v2788, %v2790
        %v2792 = vrot.slane %v2784, %v2791
        %v2794 = vunpack.c.l.s4 1966171168
        %v2795 = vunpack.c.0.s8 %v2794
        %v2796 = vlaneseq
        %v2797 = vshrl.u32 %v2796, 7
        %v2798 = vsub.s32 %v2795, %v2797
        %v2799 = vrot.slane %v2785, %v2798
        %v2800 = vcombine.low %v2792, %v2799
        %v2801 = vcombine.low %v1525, %v1529
        %v2802 = vcombine.low %v1533, %v1537
        %v2803 = vcombine.low %v1541, %v1545
        %v2804 = vcombine.low %v1549, %v1553
        %v2806 = vunpack.c.l.s4 1966171168
        %v2807 = vunpack.c.0.s8 %v2806
        %v2808 = vlaneseq
        %v2809 = vshrl.u32 %v2808, 7
        %v2810 = vsub.s32 %v2807, %v2809
        %v2811 = vrot.slane %v2801, %v2810
        %v2813 = vunpack.c.l.s4 1966171168
        %v2814 = vunpack.c.0.s8 %v2813
        %v2815 = vlaneseq
        %v2816 = vshrl.u32 %v2815, 7
        %v2817 = vsub.s32 %v2814, %v2816
        %v2818 = vrot.slane %v2802, %v2817
        %v2820 = vunpack.c.l.s4 1966171168
        %v2821 = vunpack.c.0.s8 %v2820
        %v2822 = vlaneseq
        %v2823 = vshrl.u32 %v2822, 7
        %v2824 = vsub.s32 %v2821, %v2823
        %v2825 = vrot.slane %v2803, %v2824
        %v2827 = vunpack.c.l.s4 1966171168
        %v2828 = vunpack.c.0.s8 %v2827
        %v2829 = vlaneseq
        %v2830 = vshrl.u32 %v2829, 7
        %v2831 = vsub.s32 %v2828, %v2830
        %v2832 = vrot.slane %v2804, %v2831
        %v2833 = vcombine.low %v2811, %v2818
        %v2834 = vcombine.low %v2825, %v2832
        %v2836 = vunpack.c.l.s4 1966171168
        %v2837 = vunpack.c.0.s8 %v2836
        %v2838 = vlaneseq
        %v2839 = vshrl.u32 %v2838, 7
        %v2840 = vsub.s32 %v2837, %v2839
        %v2841 = vrot.slane %v2833, %v2840
        %v2843 = vunpack.c.l.s4 1966171168
        %v2844 = vunpack.c.0.s8 %v2843
        %v2845 = vlaneseq
        %v2846 = vshrl.u32 %v2845, 7
        %v2847 = vsub.s32 %v2844, %v2846
        %v2848 = vrot.slane %v2834, %v2847
        %v2849 = vcombine.low %v2841, %v2848
        %v2850 = vcombine.low %v1557, %v1561
        %v2851 = vcombine.low %v1565, %v1569
        %v2852 = vcombine.low %v1573, %v1577
        %v2853 = vcombine.low %v1581, %v1585
        %v2855 = vunpack.c.l.s4 1966171168
        %v2856 = vunpack.c.0.s8 %v2855
        %v2857 = vlaneseq
        %v2858 = vshrl.u32 %v2857, 7
        %v2859 = vsub.s32 %v2856, %v2858
        %v2860 = vrot.slane %v2850, %v2859
        %v2862 = vunpack.c.l.s4 1966171168
        %v2863 = vunpack.c.0.s8 %v2862
        %v2864 = vlaneseq
        %v2865 = vshrl.u32 %v2864, 7
        %v2866 = vsub.s32 %v2863, %v2865
        %v2867 = vrot.slane %v2851, %v2866
        %v2869 = vunpack.c.l.s4 1966171168
        %v2870 = vunpack.c.0.s8 %v2869
        %v2871 = vlaneseq
        %v2872 = vshrl.u32 %v2871, 7
        %v2873 = vsub.s32 %v2870, %v2872
        %v2874 = vrot.slane %v2852, %v2873
        %v2876 = vunpack.c.l.s4 1966171168
        %v2877 = vunpack.c.0.s8 %v2876
        %v2878 = vlaneseq
        %v2879 = vshrl.u32 %v2878, 7
        %v2880 = vsub.s32 %v2877, %v2879
        %v2881 = vrot.slane %v2853, %v2880
        %v2882 = vcombine.low %v2860, %v2867
        %v2883 = vcombine.low %v2874, %v2881
        %v2885 = vunpack.c.l.s4 1966171168
        %v2886 = vunpack.c.0.s8 %v2885
        %v2887 = vlaneseq
        %v2888 = vshrl.u32 %v2887, 7
        %v2889 = vsub.s32 %v2886, %v2888
        %v2890 = vrot.slane %v2882, %v2889
        %v2892 = vunpack.c.l.s4 1966171168
        %v2893 = vunpack.c.0.s8 %v2892
        %v2894 = vlaneseq
        %v2895 = vshrl.u32 %v2894, 7
        %v2896 = vsub.s32 %v2893, %v2895
        %v2897 = vrot.slane %v2883, %v2896
        %v2898 = vcombine.low %v2890, %v2897
        %v2899 = vcombine.low %v1589, %v1593
        %v2900 = vcombine.low %v1597, %v1601
        %v2901 = vcombine.low %v1605, %v1609
        %v2902 = vcombine.low %v1613, %v1617
        %v2904 = vunpack.c.l.s4 1966171168
        %v2905 = vunpack.c.0.s8 %v2904
        %v2906 = vlaneseq
        %v2907 = vshrl.u32 %v2906, 7
        %v2908 = vsub.s32 %v2905, %v2907
        %v2909 = vrot.slane %v2899, %v2908
        %v2911 = vunpack.c.l.s4 1966171168
        %v2912 = vunpack.c.0.s8 %v2911
        %v2913 = vlaneseq
        %v2914 = vshrl.u32 %v2913, 7
        %v2915 = vsub.s32 %v2912, %v2914
        %v2916 = vrot.slane %v2900, %v2915
        %v2918 = vunpack.c.l.s4 1966171168
        %v2919 = vunpack.c.0.s8 %v2918
        %v2920 = vlaneseq
        %v2921 = vshrl.u32 %v2920, 7
        %v2922 = vsub.s32 %v2919, %v2921
        %v2923 = vrot.slane %v2901, %v2922
        %v2925 = vunpack.c.l.s4 1966171168
        %v2926 = vunpack.c.0.s8 %v2925
        %v2927 = vlaneseq
        %v2928 = vshrl.u32 %v2927, 7
        %v2929 = vsub.s32 %v2926, %v2928
        %v2930 = vrot.slane %v2902, %v2929
        %v2931 = vcombine.low %v2909, %v2916
        %v2932 = vcombine.low %v2923, %v2930
        %v2934 = vunpack.c.l.s4 1966171168
        %v2935 = vunpack.c.0.s8 %v2934
        %v2936 = vlaneseq
        %v2937 = vshrl.u32 %v2936, 7
        %v2938 = vsub.s32 %v2935, %v2937
        %v2939 = vrot.slane %v2931, %v2938
        %v2941 = vunpack.c.l.s4 1966171168
        %v2942 = vunpack.c.0.s8 %v2941
        %v2943 = vlaneseq
        %v2944 = vshrl.u32 %v2943, 7
        %v2945 = vsub.s32 %v2942, %v2944
        %v2946 = vrot.slane %v2932, %v2945
        %v2947 = vcombine.low %v2939, %v2946
        %v2948 = vcombine.low %v1621, %v1625
        %v2949 = vcombine.low %v1629, %v1633
        %v2950 = vcombine.low %v1637, %v1641
        %v2951 = vcombine.low %v1645, %v1649
        %v2953 = vunpack.c.l.s4 1966171168
        %v2954 = vunpack.c.0.s8 %v2953
        %v2955 = vlaneseq
        %v2956 = vshrl.u32 %v2955, 7
        %v2957 = vsub.s32 %v2954, %v2956
        %v2958 = vrot.slane %v2948, %v2957
        %v2960 = vunpack.c.l.s4 1966171168
        %v2961 = vunpack.c.0.s8 %v2960
        %v2962 = vlaneseq
        %v2963 = vshrl.u32 %v2962, 7
        %v2964 = vsub.s32 %v2961, %v2963
        %v2965 = vrot.slane %v2949, %v2964
        %v2967 = vunpack.c.l.s4 1966171168
        %v2968 = vunpack.c.0.s8 %v2967
        %v2969 = vlaneseq
        %v2970 = vshrl.u32 %v2969, 7
        %v2971 = vsub.s32 %v2968, %v2970
        %v2972 = vrot.slane %v2950, %v2971
        %v2974 = vunpack.c.l.s4 1966171168
        %v2975 = vunpack.c.0.s8 %v2974
        %v2976 = vlaneseq
        %v2977 = vshrl.u32 %v2976, 7
        %v2978 = vsub.s32 %v2975, %v2977
        %v2979 = vrot.slane %v2951, %v2978
        %v2980 = vcombine.low %v2958, %v2965
        %v2981 = vcombine.low %v2972, %v2979
        %v2983 = vunpack.c.l.s4 1966171168
        %v2984 = vunpack.c.0.s8 %v2983
        %v2985 = vlaneseq
        %v2986 = vshrl.u32 %v2985, 7
        %v2987 = vsub.s32 %v2984, %v2986
        %v2988 = vrot.slane %v2980, %v2987
        %v2990 = vunpack.c.l.s4 1966171168
        %v2991 = vunpack.c.0.s8 %v2990
        %v2992 = vlaneseq
        %v2993 = vshrl.u32 %v2992, 7
        %v2994 = vsub.s32 %v2991, %v2993
        %v2995 = vrot.slane %v2981, %v2994
        %v2996 = vcombine.low %v2988, %v2995
        %v2997 = vcombine.low %v1653, %v1657
        %v2998 = vcombine.low %v1661, %v1665
        %v2999 = vcombine.low %v1669, %v1673
        %v3000 = vcombine.low %v1677, %v1681
        %v3002 = vunpack.c.l.s4 1966171168
        %v3003 = vunpack.c.0.s8 %v3002
        %v3004 = vlaneseq
        %v3005 = vshrl.u32 %v3004, 7
        %v3006 = vsub.s32 %v3003, %v3005
        %v3007 = vrot.slane %v2997, %v3006
        %v3009 = vunpack.c.l.s4 1966171168
        %v3010 = vunpack.c.0.s8 %v3009
        %v3011 = vlaneseq
        %v3012 = vshrl.u32 %v3011, 7
        %v3013 = vsub.s32 %v3010, %v3012
        %v3014 = vrot.slane %v2998, %v3013
        %v3016 = vunpack.c.l.s4 1966171168
        %v3017 = vunpack.c.0.s8 %v3016
        %v3018 = vlaneseq
        %v3019 = vshrl.u32 %v3018, 7
        %v3020 = vsub.s32 %v3017, %v3019
        %v3021 = vrot.slane %v2999, %v3020
        %v3023 = vunpack.c.l.s4 1966171168
        %v3024 = vunpack.c.0.s8 %v3023
        %v3025 = vlaneseq
        %v3026 = vshrl.u32 %v3025, 7
        %v3027 = vsub.s32 %v3024, %v3026
        %v3028 = vrot.slane %v3000, %v3027
        %v3029 = vcombine.low %v3007, %v3014
        %v3030 = vcombine.low %v3021, %v3028
        %v3032 = vunpack.c.l.s4 1966171168
        %v3033 = vunpack.c.0.s8 %v3032
        %v3034 = vlaneseq
        %v3035 = vshrl.u32 %v3034, 7
        %v3036 = vsub.s32 %v3033, %v3035
        %v3037 = vrot.slane %v3029, %v3036
        %v3039 = vunpack.c.l.s4 1966171168
        %v3040 = vunpack.c.0.s8 %v3039
        %v3041 = vlaneseq
        %v3042 = vshrl.u32 %v3041, 7
        %v3043 = vsub.s32 %v3040, %v3042
        %v3044 = vrot.slane %v3030, %v3043
        %v3045 = vcombine.low %v3037, %v3044
        %v3046 = vcombine.low %v1685, %v1689
        %v3047 = vcombine.low %v1693, %v1697
        %v3048 = vcombine.low %v1701, %v1705
        %v3049 = vcombine.low %v1709, %v1713
        %v3051 = vunpack.c.l.s4 1966171168
        %v3052 = vunpack.c.0.s8 %v3051
        %v3053 = vlaneseq
        %v3054 = vshrl.u32 %v3053, 7
        %v3055 = vsub.s32 %v3052, %v3054
        %v3056 = vrot.slane %v3046, %v3055
        %v3058 = vunpack.c.l.s4 1966171168
        %v3059 = vunpack.c.0.s8 %v3058
        %v3060 = vlaneseq
        %v3061 = vshrl.u32 %v3060, 7
        %v3062 = vsub.s32 %v3059, %v3061
        %v3063 = vrot.slane %v3047, %v3062
        %v3065 = vunpack.c.l.s4 1966171168
        %v3066 = vunpack.c.0.s8 %v3065
        %v3067 = vlaneseq
        %v3068 = vshrl.u32 %v3067, 7
        %v3069 = vsub.s32 %v3066, %v3068
        %v3070 = vrot.slane %v3048, %v3069
        %v3072 = vunpack.c.l.s4 1966171168
        %v3073 = vunpack.c.0.s8 %v3072
        %v3074 = vlaneseq
        %v3075 = vshrl.u32 %v3074, 7
        %v3076 = vsub.s32 %v3073, %v3075
        %v3077 = vrot.slane %v3049, %v3076
        %v3078 = vcombine.low %v3056, %v3063
        %v3079 = vcombine.low %v3070, %v3077
        %v3081 = vunpack.c.l.s4 1966171168
        %v3082 = vunpack.c.0.s8 %v3081
        %v3083 = vlaneseq
        %v3084 = vshrl.u32 %v3083, 7
        %v3085 = vsub.s32 %v3082, %v3084
        %v3086 = vrot.slane %v3078, %v3085
        %v3088 = vunpack.c.l.s4 1966171168
        %v3089 = vunpack.c.0.s8 %v3088
        %v3090 = vlaneseq
        %v3091 = vshrl.u32 %v3090, 7
        %v3092 = vsub.s32 %v3089, %v3091
        %v3093 = vrot.slane %v3079, %v3092
        %v3094 = vcombine.low %v3086, %v3093
        %v3095 = vcombine.low %v1717, %v1721
        %v3096 = vcombine.low %v1725, %v1729
        %v3097 = vcombine.low %v1733, %v1737
        %v3098 = vcombine.low %v1741, %v1745
        %v3100 = vunpack.c.l.s4 1966171168
        %v3101 = vunpack.c.0.s8 %v3100
        %v3102 = vlaneseq
        %v3103 = vshrl.u32 %v3102, 7
        %v3104 = vsub.s32 %v3101, %v3103
        %v3105 = vrot.slane %v3095, %v3104
        %v3107 = vunpack.c.l.s4 1966171168
        %v3108 = vunpack.c.0.s8 %v3107
        %v3109 = vlaneseq
        %v3110 = vshrl.u32 %v3109, 7
        %v3111 = vsub.s32 %v3108, %v3110
        %v3112 = vrot.slane %v3096, %v3111
        %v3114 = vunpack.c.l.s4 1966171168
        %v3115 = vunpack.c.0.s8 %v3114
        %v3116 = vlaneseq
        %v3117 = vshrl.u32 %v3116, 7
        %v3118 = vsub.s32 %v3115, %v3117
        %v3119 = vrot.slane %v3097, %v3118
        %v3121 = vunpack.c.l.s4 1966171168
        %v3122 = vunpack.c.0.s8 %v3121
        %v3123 = vlaneseq
        %v3124 = vshrl.u32 %v3123, 7
        %v3125 = vsub.s32 %v3122, %v3124
        %v3126 = vrot.slane %v3098, %v3125
        %v3127 = vcombine.low %v3105, %v3112
        %v3128 = vcombine.low %v3119, %v3126
        %v3130 = vunpack.c.l.s4 1966171168
        %v3131 = vunpack.c.0.s8 %v3130
        %v3132 = vlaneseq
        %v3133 = vshrl.u32 %v3132, 7
        %v3134 = vsub.s32 %v3131, %v3133
        %v3135 = vrot.slane %v3127, %v3134
        %v3137 = vunpack.c.l.s4 1966171168
        %v3138 = vunpack.c.0.s8 %v3137
        %v3139 = vlaneseq
        %v3140 = vshrl.u32 %v3139, 7
        %v3141 = vsub.s32 %v3138, %v3140
        %v3142 = vrot.slane %v3128, %v3141
        %v3143 = vcombine.low %v3135, %v3142
        %v3144 = vcombine.low %v1749, %v1753
        %v3145 = vcombine.low %v1757, %v1761
        %v3146 = vcombine.low %v1765, %v1769
        %v3147 = vcombine.low %v1773, %v1777
        %v3149 = vunpack.c.l.s4 1966171168
        %v3150 = vunpack.c.0.s8 %v3149
        %v3151 = vlaneseq
        %v3152 = vshrl.u32 %v3151, 7
        %v3153 = vsub.s32 %v3150, %v3152
        %v3154 = vrot.slane %v3144, %v3153
        %v3156 = vunpack.c.l.s4 1966171168
        %v3157 = vunpack.c.0.s8 %v3156
        %v3158 = vlaneseq
        %v3159 = vshrl.u32 %v3158, 7
        %v3160 = vsub.s32 %v3157, %v3159
        %v3161 = vrot.slane %v3145, %v3160
        %v3163 = vunpack.c.l.s4 1966171168
        %v3164 = vunpack.c.0.s8 %v3163
        %v3165 = vlaneseq
        %v3166 = vshrl.u32 %v3165, 7
        %v3167 = vsub.s32 %v3164, %v3166
        %v3168 = vrot.slane %v3146, %v3167
        %v3170 = vunpack.c.l.s4 1966171168
        %v3171 = vunpack.c.0.s8 %v3170
        %v3172 = vlaneseq
        %v3173 = vshrl.u32 %v3172, 7
        %v3174 = vsub.s32 %v3171, %v3173
        %v3175 = vrot.slane %v3147, %v3174
        %v3176 = vcombine.low %v3154, %v3161
        %v3177 = vcombine.low %v3168, %v3175
        %v3179 = vunpack.c.l.s4 1966171168
        %v3180 = vunpack.c.0.s8 %v3179
        %v3181 = vlaneseq
        %v3182 = vshrl.u32 %v3181, 7
        %v3183 = vsub.s32 %v3180, %v3182
        %v3184 = vrot.slane %v3176, %v3183
        %v3186 = vunpack.c.l.s4 1966171168
        %v3187 = vunpack.c.0.s8 %v3186
        %v3188 = vlaneseq
        %v3189 = vshrl.u32 %v3188, 7
        %v3190 = vsub.s32 %v3187, %v3189
        %v3191 = vrot.slane %v3177, %v3190
        %v3192 = vcombine.low %v3184, %v3191
        %v3193 = vcombine.low %v1781, %v1785
        %v3194 = vcombine.low %v1789, %v1793
        %v3195 = vcombine.low %v1797, %v1801
        %v3196 = vcombine.low %v1805, %v1809
        %v3198 = vunpack.c.l.s4 1966171168
        %v3199 = vunpack.c.0.s8 %v3198
        %v3200 = vlaneseq
        %v3201 = vshrl.u32 %v3200, 7
        %v3202 = vsub.s32 %v3199, %v3201
        %v3203 = vrot.slane %v3193, %v3202
        %v3205 = vunpack.c.l.s4 1966171168
        %v3206 = vunpack.c.0.s8 %v3205
        %v3207 = vlaneseq
        %v3208 = vshrl.u32 %v3207, 7
        %v3209 = vsub.s32 %v3206, %v3208
        %v3210 = vrot.slane %v3194, %v3209
        %v3212 = vunpack.c.l.s4 1966171168
        %v3213 = vunpack.c.0.s8 %v3212
        %v3214 = vlaneseq
        %v3215 = vshrl.u32 %v3214, 7
        %v3216 = vsub.s32 %v3213, %v3215
        %v3217 = vrot.slane %v3195, %v3216
        %v3219 = vunpack.c.l.s4 1966171168
        %v3220 = vunpack.c.0.s8 %v3219
        %v3221 = vlaneseq
        %v3222 = vshrl.u32 %v3221, 7
        %v3223 = vsub.s32 %v3220, %v3222
        %v3224 = vrot.slane %v3196, %v3223
        %v3225 = vcombine.low %v3203, %v3210
        %v3226 = vcombine.low %v3217, %v3224
        %v3228 = vunpack.c.l.s4 1966171168
        %v3229 = vunpack.c.0.s8 %v3228
        %v3230 = vlaneseq
        %v3231 = vshrl.u32 %v3230, 7
        %v3232 = vsub.s32 %v3229, %v3231
        %v3233 = vrot.slane %v3225, %v3232
        %v3235 = vunpack.c.l.s4 1966171168
        %v3236 = vunpack.c.0.s8 %v3235
        %v3237 = vlaneseq
        %v3238 = vshrl.u32 %v3237, 7
        %v3239 = vsub.s32 %v3236, %v3238
        %v3240 = vrot.slane %v3226, %v3239
        %v3241 = vcombine.low %v3233, %v3240
        %v3242 = vcombine.low %v1813, %v1817
        %v3243 = vcombine.low %v1821, %v1825
        %v3244 = vcombine.low %v1829, %v1833
        %v3245 = vcombine.low %v1837, %v1841
        %v3247 = vunpack.c.l.s4 1966171168
        %v3248 = vunpack.c.0.s8 %v3247
        %v3249 = vlaneseq
        %v3250 = vshrl.u32 %v3249, 7
        %v3251 = vsub.s32 %v3248, %v3250
        %v3252 = vrot.slane %v3242, %v3251
        %v3254 = vunpack.c.l.s4 1966171168
        %v3255 = vunpack.c.0.s8 %v3254
        %v3256 = vlaneseq
        %v3257 = vshrl.u32 %v3256, 7
        %v3258 = vsub.s32 %v3255, %v3257
        %v3259 = vrot.slane %v3243, %v3258
        %v3261 = vunpack.c.l.s4 1966171168
        %v3262 = vunpack.c.0.s8 %v3261
        %v3263 = vlaneseq
        %v3264 = vshrl.u32 %v3263, 7
        %v3265 = vsub.s32 %v3262, %v3264
        %v3266 = vrot.slane %v3244, %v3265
        %v3268 = vunpack.c.l.s4 1966171168
        %v3269 = vunpack.c.0.s8 %v3268
        %v3270 = vlaneseq
        %v3271 = vshrl.u32 %v3270, 7
        %v3272 = vsub.s32 %v3269, %v3271
        %v3273 = vrot.slane %v3245, %v3272
        %v3274 = vcombine.low %v3252, %v3259
        %v3275 = vcombine.low %v3266, %v3273
        %v3277 = vunpack.c.l.s4 1966171168
        %v3278 = vunpack.c.0.s8 %v3277
        %v3279 = vlaneseq
        %v3280 = vshrl.u32 %v3279, 7
        %v3281 = vsub.s32 %v3278, %v3280
        %v3282 = vrot.slane %v3274, %v3281
        %v3284 = vunpack.c.l.s4 1966171168
        %v3285 = vunpack.c.0.s8 %v3284
        %v3286 = vlaneseq
        %v3287 = vshrl.u32 %v3286, 7
        %v3288 = vsub.s32 %v3285, %v3287
        %v3289 = vrot.slane %v3275, %v3288
        %v3290 = vcombine.low %v3282, %v3289
        %v3291 = vcombine.low %v1845, %v1849
        %v3292 = vcombine.low %v1853, %v1857
        %v3293 = vcombine.low %v1861, %v1865
        %v3294 = vcombine.low %v1869, %v1873
        %v3296 = vunpack.c.l.s4 1966171168
        %v3297 = vunpack.c.0.s8 %v3296
        %v3298 = vlaneseq
        %v3299 = vshrl.u32 %v3298, 7
        %v3300 = vsub.s32 %v3297, %v3299
        %v3301 = vrot.slane %v3291, %v3300
        %v3303 = vunpack.c.l.s4 1966171168
        %v3304 = vunpack.c.0.s8 %v3303
        %v3305 = vlaneseq
        %v3306 = vshrl.u32 %v3305, 7
        %v3307 = vsub.s32 %v3304, %v3306
        %v3308 = vrot.slane %v3292, %v3307
        %v3310 = vunpack.c.l.s4 1966171168
        %v3311 = vunpack.c.0.s8 %v3310
        %v3312 = vlaneseq
        %v3313 = vshrl.u32 %v3312, 7
        %v3314 = vsub.s32 %v3311, %v3313
        %v3315 = vrot.slane %v3293, %v3314
        %v3317 = vunpack.c.l.s4 1966171168
        %v3318 = vunpack.c.0.s8 %v3317
        %v3319 = vlaneseq
        %v3320 = vshrl.u32 %v3319, 7
        %v3321 = vsub.s32 %v3318, %v3320
        %v3322 = vrot.slane %v3294, %v3321
        %v3323 = vcombine.low %v3301, %v3308
        %v3324 = vcombine.low %v3315, %v3322
        %v3326 = vunpack.c.l.s4 1966171168
        %v3327 = vunpack.c.0.s8 %v3326
        %v3328 = vlaneseq
        %v3329 = vshrl.u32 %v3328, 7
        %v3330 = vsub.s32 %v3327, %v3329
        %v3331 = vrot.slane %v3323, %v3330
        %v3333 = vunpack.c.l.s4 1966171168
        %v3334 = vunpack.c.0.s8 %v3333
        %v3335 = vlaneseq
        %v3336 = vshrl.u32 %v3335, 7
        %v3337 = vsub.s32 %v3334, %v3336
        %v3338 = vrot.slane %v3324, %v3337
        %v3339 = vcombine.low %v3331, %v3338
        %v3340 = vcombine.low %v1877, %v1881
        %v3341 = vcombine.low %v1885, %v1889
        %v3342 = vcombine.low %v1893, %v1897
        %v3343 = vcombine.low %v1901, %v1905
        %v3345 = vunpack.c.l.s4 1966171168
        %v3346 = vunpack.c.0.s8 %v3345
        %v3347 = vlaneseq
        %v3348 = vshrl.u32 %v3347, 7
        %v3349 = vsub.s32 %v3346, %v3348
        %v3350 = vrot.slane %v3340, %v3349
        %v3352 = vunpack.c.l.s4 1966171168
        %v3353 = vunpack.c.0.s8 %v3352
        %v3354 = vlaneseq
        %v3355 = vshrl.u32 %v3354, 7
        %v3356 = vsub.s32 %v3353, %v3355
        %v3357 = vrot.slane %v3341, %v3356
        %v3359 = vunpack.c.l.s4 1966171168
        %v3360 = vunpack.c.0.s8 %v3359
        %v3361 = vlaneseq
        %v3362 = vshrl.u32 %v3361, 7
        %v3363 = vsub.s32 %v3360, %v3362
        %v3364 = vrot.slane %v3342, %v3363
        %v3366 = vunpack.c.l.s4 1966171168
        %v3367 = vunpack.c.0.s8 %v3366
        %v3368 = vlaneseq
        %v3369 = vshrl.u32 %v3368, 7
        %v3370 = vsub.s32 %v3367, %v3369
        %v3371 = vrot.slane %v3343, %v3370
        %v3372 = vcombine.low %v3350, %v3357
        %v3373 = vcombine.low %v3364, %v3371
        %v3375 = vunpack.c.l.s4 1966171168
        %v3376 = vunpack.c.0.s8 %v3375
        %v3377 = vlaneseq
        %v3378 = vshrl.u32 %v3377, 7
        %v3379 = vsub.s32 %v3376, %v3378
        %v3380 = vrot.slane %v3372, %v3379
        %v3382 = vunpack.c.l.s4 1966171168
        %v3383 = vunpack.c.0.s8 %v3382
        %v3384 = vlaneseq
        %v3385 = vshrl.u32 %v3384, 7
        %v3386 = vsub.s32 %v3383, %v3385
        %v3387 = vrot.slane %v3373, %v3386
        %v3388 = vcombine.low %v3380, %v3387
        %v3389 = vcombine.low %v1909, %v1913
        %v3390 = vcombine.low %v1917, %v1921
        %v3391 = vcombine.low %v1925, %v1929
        %v3392 = vcombine.low %v1933, %v1937
        %v3394 = vunpack.c.l.s4 1966171168
        %v3395 = vunpack.c.0.s8 %v3394
        %v3396 = vlaneseq
        %v3397 = vshrl.u32 %v3396, 7
        %v3398 = vsub.s32 %v3395, %v3397
        %v3399 = vrot.slane %v3389, %v3398
        %v3401 = vunpack.c.l.s4 1966171168
        %v3402 = vunpack.c.0.s8 %v3401
        %v3403 = vlaneseq
        %v3404 = vshrl.u32 %v3403, 7
        %v3405 = vsub.s32 %v3402, %v3404
        %v3406 = vrot.slane %v3390, %v3405
        %v3408 = vunpack.c.l.s4 1966171168
        %v3409 = vunpack.c.0.s8 %v3408
        %v3410 = vlaneseq
        %v3411 = vshrl.u32 %v3410, 7
        %v3412 = vsub.s32 %v3409, %v3411
        %v3413 = vrot.slane %v3391, %v3412
        %v3415 = vunpack.c.l.s4 1966171168
        %v3416 = vunpack.c.0.s8 %v3415
        %v3417 = vlaneseq
        %v3418 = vshrl.u32 %v3417, 7
        %v3419 = vsub.s32 %v3416, %v3418
        %v3420 = vrot.slane %v3392, %v3419
        %v3421 = vcombine.low %v3399, %v3406
        %v3422 = vcombine.low %v3413, %v3420
        %v3424 = vunpack.c.l.s4 1966171168
        %v3425 = vunpack.c.0.s8 %v3424
        %v3426 = vlaneseq
        %v3427 = vshrl.u32 %v3426, 7
        %v3428 = vsub.s32 %v3425, %v3427
        %v3429 = vrot.slane %v3421, %v3428
        %v3431 = vunpack.c.l.s4 1966171168
        %v3432 = vunpack.c.0.s8 %v3431
        %v3433 = vlaneseq
        %v3434 = vshrl.u32 %v3433, 7
        %v3435 = vsub.s32 %v3432, %v3434
        %v3436 = vrot.slane %v3422, %v3435
        %v3437 = vcombine.low %v3429, %v3436
        %v3438 = vcombine.low %v1941, %v1945
        %v3439 = vcombine.low %v1949, %v1953
        %v3440 = vcombine.low %v1957, %v1961
        %v3441 = vcombine.low %v1965, %v1969
        %v3443 = vunpack.c.l.s4 1966171168
        %v3444 = vunpack.c.0.s8 %v3443
        %v3445 = vlaneseq
        %v3446 = vshrl.u32 %v3445, 7
        %v3447 = vsub.s32 %v3444, %v3446
        %v3448 = vrot.slane %v3438, %v3447
        %v3450 = vunpack.c.l.s4 1966171168
        %v3451 = vunpack.c.0.s8 %v3450
        %v3452 = vlaneseq
        %v3453 = vshrl.u32 %v3452, 7
        %v3454 = vsub.s32 %v3451, %v3453
        %v3455 = vrot.slane %v3439, %v3454
        %v3457 = vunpack.c.l.s4 1966171168
        %v3458 = vunpack.c.0.s8 %v3457
        %v3459 = vlaneseq
        %v3460 = vshrl.u32 %v3459, 7
        %v3461 = vsub.s32 %v3458, %v3460
        %v3462 = vrot.slane %v3440, %v3461
        %v3464 = vunpack.c.l.s4 1966171168
        %v3465 = vunpack.c.0.s8 %v3464
        %v3466 = vlaneseq
        %v3467 = vshrl.u32 %v3466, 7
        %v3468 = vsub.s32 %v3465, %v3467
        %v3469 = vrot.slane %v3441, %v3468
        %v3470 = vcombine.low %v3448, %v3455
        %v3471 = vcombine.low %v3462, %v3469
        %v3473 = vunpack.c.l.s4 1966171168
        %v3474 = vunpack.c.0.s8 %v3473
        %v3475 = vlaneseq
        %v3476 = vshrl.u32 %v3475, 7
        %v3477 = vsub.s32 %v3474, %v3476
        %v3478 = vrot.slane %v3470, %v3477
        %v3480 = vunpack.c.l.s4 1966171168
        %v3481 = vunpack.c.0.s8 %v3480
        %v3482 = vlaneseq
        %v3483 = vshrl.u32 %v3482, 7
        %v3484 = vsub.s32 %v3481, %v3483
        %v3485 = vrot.slane %v3471, %v3484
        %v3486 = vcombine.low %v3478, %v3485
        %v3487 = vcombine.low %v1973, %v1977
        %v3488 = vcombine.low %v1981, %v1985
        %v3489 = vcombine.low %v1989, %v1993
        %v3490 = vcombine.low %v1997, %v2001
        %v3492 = vunpack.c.l.s4 1966171168
        %v3493 = vunpack.c.0.s8 %v3492
        %v3494 = vlaneseq
        %v3495 = vshrl.u32 %v3494, 7
        %v3496 = vsub.s32 %v3493, %v3495
        %v3497 = vrot.slane %v3487, %v3496
        %v3499 = vunpack.c.l.s4 1966171168
        %v3500 = vunpack.c.0.s8 %v3499
        %v3501 = vlaneseq
        %v3502 = vshrl.u32 %v3501, 7
        %v3503 = vsub.s32 %v3500, %v3502
        %v3504 = vrot.slane %v3488, %v3503
        %v3506 = vunpack.c.l.s4 1966171168
        %v3507 = vunpack.c.0.s8 %v3506
        %v3508 = vlaneseq
        %v3509 = vshrl.u32 %v3508, 7
        %v3510 = vsub.s32 %v3507, %v3509
        %v3511 = vrot.slane %v3489, %v3510
        %v3513 = vunpack.c.l.s4 1966171168
        %v3514 = vunpack.c.0.s8 %v3513
        %v3515 = vlaneseq
        %v3516 = vshrl.u32 %v3515, 7
        %v3517 = vsub.s32 %v3514, %v3516
        %v3518 = vrot.slane %v3490, %v3517
        %v3519 = vcombine.low %v3497, %v3504
        %v3520 = vcombine.low %v3511, %v3518
        %v3522 = vunpack.c.l.s4 1966171168
        %v3523 = vunpack.c.0.s8 %v3522
        %v3524 = vlaneseq
        %v3525 = vshrl.u32 %v3524, 7
        %v3526 = vsub.s32 %v3523, %v3525
        %v3527 = vrot.slane %v3519, %v3526
        %v3529 = vunpack.c.l.s4 1966171168
        %v3530 = vunpack.c.0.s8 %v3529
        %v3531 = vlaneseq
        %v3532 = vshrl.u32 %v3531, 7
        %v3533 = vsub.s32 %v3530, %v3532
        %v3534 = vrot.slane %v3520, %v3533
        %v3535 = vcombine.low %v3527, %v3534
        %v3536 = vcombine.low %v2005, %v2009
        %v3537 = vcombine.low %v2013, %v2017
        %v3538 = vcombine.low %v2021, %v2025
        %v3539 = vcombine.low %v2029, %v2033
        %v3541 = vunpack.c.l.s4 1966171168
        %v3542 = vunpack.c.0.s8 %v3541
        %v3543 = vlaneseq
        %v3544 = vshrl.u32 %v3543, 7
        %v3545 = vsub.s32 %v3542, %v3544
        %v3546 = vrot.slane %v3536, %v3545
        %v3548 = vunpack.c.l.s4 1966171168
        %v3549 = vunpack.c.0.s8 %v3548
        %v3550 = vlaneseq
        %v3551 = vshrl.u32 %v3550, 7
        %v3552 = vsub.s32 %v3549, %v3551
        %v3553 = vrot.slane %v3537, %v3552
        %v3555 = vunpack.c.l.s4 1966171168
        %v3556 = vunpack.c.0.s8 %v3555
        %v3557 = vlaneseq
        %v3558 = vshrl.u32 %v3557, 7
        %v3559 = vsub.s32 %v3556, %v3558
        %v3560 = vrot.slane %v3538, %v3559
        %v3562 = vunpack.c.l.s4 1966171168
        %v3563 = vunpack.c.0.s8 %v3562
        %v3564 = vlaneseq
        %v3565 = vshrl.u32 %v3564, 7
        %v3566 = vsub.s32 %v3563, %v3565
        %v3567 = vrot.slane %v3539, %v3566
        %v3568 = vcombine.low %v3546, %v3553
        %v3569 = vcombine.low %v3560, %v3567
        %v3571 = vunpack.c.l.s4 1966171168
        %v3572 = vunpack.c.0.s8 %v3571
        %v3573 = vlaneseq
        %v3574 = vshrl.u32 %v3573, 7
        %v3575 = vsub.s32 %v3572, %v3574
        %v3576 = vrot.slane %v3568, %v3575
        %v3578 = vunpack.c.l.s4 1966171168
        %v3579 = vunpack.c.0.s8 %v3578
        %v3580 = vlaneseq
        %v3581 = vshrl.u32 %v3580, 7
        %v3582 = vsub.s32 %v3579, %v3581
        %v3583 = vrot.slane %v3569, %v3582
        %v3584 = vcombine.low %v3576, %v3583
        %v3585 = vcombine.low %v2037, %v2041
        %v3586 = vcombine.low %v2045, %v2049
        %v3587 = vcombine.low %v2053, %v2057
        %v3588 = vcombine.low %v2061, %v2065
        %v3590 = vunpack.c.l.s4 1966171168
        %v3591 = vunpack.c.0.s8 %v3590
        %v3592 = vlaneseq
        %v3593 = vshrl.u32 %v3592, 7
        %v3594 = vsub.s32 %v3591, %v3593
        %v3595 = vrot.slane %v3585, %v3594
        %v3597 = vunpack.c.l.s4 1966171168
        %v3598 = vunpack.c.0.s8 %v3597
        %v3599 = vlaneseq
        %v3600 = vshrl.u32 %v3599, 7
        %v3601 = vsub.s32 %v3598, %v3600
        %v3602 = vrot.slane %v3586, %v3601
        %v3604 = vunpack.c.l.s4 1966171168
        %v3605 = vunpack.c.0.s8 %v3604
        %v3606 = vlaneseq
        %v3607 = vshrl.u32 %v3606, 7
        %v3608 = vsub.s32 %v3605, %v3607
        %v3609 = vrot.slane %v3587, %v3608
        %v3611 = vunpack.c.l.s4 1966171168
        %v3612 = vunpack.c.0.s8 %v3611
        %v3613 = vlaneseq
        %v3614 = vshrl.u32 %v3613, 7
        %v3615 = vsub.s32 %v3612, %v3614
        %v3616 = vrot.slane %v3588, %v3615
        %v3617 = vcombine.low %v3595, %v3602
        %v3618 = vcombine.low %v3609, %v3616
        %v3620 = vunpack.c.l.s4 1966171168
        %v3621 = vunpack.c.0.s8 %v3620
        %v3622 = vlaneseq
        %v3623 = vshrl.u32 %v3622, 7
        %v3624 = vsub.s32 %v3621, %v3623
        %v3625 = vrot.slane %v3617, %v3624
        %v3627 = vunpack.c.l.s4 1966171168
        %v3628 = vunpack.c.0.s8 %v3627
        %v3629 = vlaneseq
        %v3630 = vshrl.u32 %v3629, 7
        %v3631 = vsub.s32 %v3628, %v3630
        %v3632 = vrot.slane %v3618, %v3631
        %v3633 = vcombine.low %v3625, %v3632
        %3634 = vset.pattern.permute.xlu0 0
        %3635 = vperm.xlu0 %3634, %v2114
        %v3636 = vpop.permute.xlu0 %3635
        %3637 = vset.pattern.permute.xlu0 0
        %3638 = vperm.xlu0 %3637, %v2163
        %v3639 = vpop.permute.xlu0 %3638
        %3640 = vset.pattern.permute.xlu0 0
        %3641 = vperm.xlu0 %3640, %v2212
        %v3642 = vpop.permute.xlu0 %3641
        %3643 = vset.pattern.permute.xlu0 0
        %3644 = vperm.xlu0 %3643, %v2261
        %v3645 = vpop.permute.xlu0 %3644
        %3646 = vset.pattern.permute.xlu0 0
        %3647 = vperm.xlu0 %3646, %v2310
        %v3648 = vpop.permute.xlu0 %3647
        %3649 = vset.pattern.permute.xlu0 0
        %3650 = vperm.xlu0 %3649, %v2359
        %v3651 = vpop.permute.xlu0 %3650
        %3652 = vset.pattern.permute.xlu0 0
        %3653 = vperm.xlu0 %3652, %v2408
        %v3654 = vpop.permute.xlu0 %3653
        %3655 = vset.pattern.permute.xlu0 0
        %3656 = vperm.xlu0 %3655, %v2457
        %v3657 = vpop.permute.xlu0 %3656
        %3658 = vset.pattern.permute.xlu0 0
        %3659 = vperm.xlu0 %3658, %v2506
        %v3660 = vpop.permute.xlu0 %3659
        %3661 = vset.pattern.permute.xlu0 0
        %3662 = vperm.xlu0 %3661, %v2555
        %v3663 = vpop.permute.xlu0 %3662
        %3664 = vset.pattern.permute.xlu0 0
        %3665 = vperm.xlu0 %3664, %v2604
        %v3666 = vpop.permute.xlu0 %3665
        %3667 = vset.pattern.permute.xlu0 0
        %3668 = vperm.xlu0 %3667, %v2653
        %v3669 = vpop.permute.xlu0 %3668
        %3670 = vset.pattern.permute.xlu0 0
        %3671 = vperm.xlu0 %3670, %v2702
        %v3672 = vpop.permute.xlu0 %3671
        %3673 = vset.pattern.permute.xlu0 0
        %3674 = vperm.xlu0 %3673, %v2751
        %v3675 = vpop.permute.xlu0 %3674
        %3676 = vset.pattern.permute.xlu0 0
        %3677 = vperm.xlu0 %3676, %v2800
        %v3678 = vpop.permute.xlu0 %3677
        %3679 = vset.pattern.permute.xlu0 0
        %3680 = vperm.xlu0 %3679, %v2849
        %v3681 = vpop.permute.xlu0 %3680
        %3682 = vset.pattern.permute.xlu0 0
        %3683 = vperm.xlu0 %3682, %v2898
        %v3684 = vpop.permute.xlu0 %3683
        %3685 = vset.pattern.permute.xlu0 0
        %3686 = vperm.xlu0 %3685, %v2947
        %v3687 = vpop.permute.xlu0 %3686
        %3688 = vset.pattern.permute.xlu0 0
        %3689 = vperm.xlu0 %3688, %v2996
        %v3690 = vpop.permute.xlu0 %3689
        %3691 = vset.pattern.permute.xlu0 0
        %3692 = vperm.xlu0 %3691, %v3045
        %v3693 = vpop.permute.xlu0 %3692
        %3694 = vset.pattern.permute.xlu0 0
        %3695 = vperm.xlu0 %3694, %v3094
        %v3696 = vpop.permute.xlu0 %3695
        %3697 = vset.pattern.permute.xlu0 0
        %3698 = vperm.xlu0 %3697, %v3143
        %v3699 = vpop.permute.xlu0 %3698
        %3700 = vset.pattern.permute.xlu0 0
        %3701 = vperm.xlu0 %3700, %v3192
        %v3702 = vpop.permute.xlu0 %3701
        %3703 = vset.pattern.permute.xlu0 0
        %3704 = vperm.xlu0 %3703, %v3241
        %v3705 = vpop.permute.xlu0 %3704
        %3706 = vset.pattern.permute.xlu0 0
        %3707 = vperm.xlu0 %3706, %v3290
        %v3708 = vpop.permute.xlu0 %3707
        %3709 = vset.pattern.permute.xlu0 0
        %3710 = vperm.xlu0 %3709, %v3339
        %v3711 = vpop.permute.xlu0 %3710
        %3712 = vset.pattern.permute.xlu0 0
        %3713 = vperm.xlu0 %3712, %v3388
        %v3714 = vpop.permute.xlu0 %3713
        %3715 = vset.pattern.permute.xlu0 0
        %3716 = vperm.xlu0 %3715, %v3437
        %v3717 = vpop.permute.xlu0 %3716
        %3718 = vset.pattern.permute.xlu0 0
        %3719 = vperm.xlu0 %3718, %v3486
        %v3720 = vpop.permute.xlu0 %3719
        %3721 = vset.pattern.permute.xlu0 0
        %3722 = vperm.xlu0 %3721, %v3535
        %v3723 = vpop.permute.xlu0 %3722
        %3724 = vset.pattern.permute.xlu0 0
        %3725 = vperm.xlu0 %3724, %v3584
        %v3726 = vpop.permute.xlu0 %3725
        %3727 = vset.pattern.permute.xlu0 0
        %3728 = vperm.xlu0 %3727, %v3633
        %v3729 = vpop.permute.xlu0 %3728
        %v3730 = vlaneseq
        %v3731 = vand.u32 %v3730, 127
        %v3732 = vlaneseq
        %v3733 = vshrl.u32 %v3732, 7
        %v3734 = vsub.s32 %v3731, %v3733
        %v3735 = vrot.slane %v3636, %v3734
        %v3736 = vadd.s32 %v3731, 4294967288
        %v3737 = vlaneseq
        %v3738 = vshrl.u32 %v3737, 7
        %v3739 = vsub.s32 %v3736, %v3738
        %v3740 = vrot.slane %v3639, %v3739
        %vm3741 = vcmask 130112
        %v3742 = vsel %vm3741, %v3740, %v3735
        %v3743 = vadd.s32 %v3731, 4294967280
        %v3744 = vlaneseq
        %v3745 = vshrl.u32 %v3744, 7
        %v3746 = vsub.s32 %v3743, %v3745
        %v3747 = vrot.slane %v3642, %v3746
        %vm3748 = vcmask 195712
        %v3749 = vsel %vm3748, %v3747, %v3742
        %v3750 = vadd.s32 %v3731, 4294967272
        %v3751 = vlaneseq
        %v3752 = vshrl.u32 %v3751, 7
        %v3753 = vsub.s32 %v3750, %v3752
        %v3754 = vrot.slane %v3645, %v3753
        %vm3755 = vcmask 261312
        %v3756 = vsel %vm3755, %v3754, %v3749
        %v3757 = vadd.s32 %v3731, 4294967264
        %v3758 = vlaneseq
        %v3759 = vshrl.u32 %v3758, 7
        %v3760 = vsub.s32 %v3757, %v3759
        %v3761 = vrot.slane %v3648, %v3760
        %vm3762 = vcmask 326912
        %v3763 = vsel %vm3762, %v3761, %v3756
        %v3764 = vadd.s32 %v3731, 4294967256
        %v3765 = vlaneseq
        %v3766 = vshrl.u32 %v3765, 7
        %v3767 = vsub.s32 %v3764, %v3766
        %v3768 = vrot.slane %v3651, %v3767
        %vm3769 = vcmask 392512
        %v3770 = vsel %vm3769, %v3768, %v3763
        %v3771 = vadd.s32 %v3731, 4294967248
        %v3772 = vlaneseq
        %v3773 = vshrl.u32 %v3772, 7
        %v3774 = vsub.s32 %v3771, %v3773
        %v3775 = vrot.slane %v3654, %v3774
        %vm3776 = vcmask 458112
        %v3777 = vsel %vm3776, %v3775, %v3770
        %v3778 = vadd.s32 %v3731, 4294967240
        %v3779 = vlaneseq
        %v3780 = vshrl.u32 %v3779, 7
        %v3781 = vsub.s32 %v3778, %v3780
        %v3782 = vrot.slane %v3657, %v3781
        %vm3783 = vcmask 523712
        %v3784 = vsel %vm3783, %v3782, %v3777
        %v3785 = vadd.s32 %v3731, 4294967232
        %v3786 = vlaneseq
        %v3787 = vshrl.u32 %v3786, 7
        %v3788 = vsub.s32 %v3785, %v3787
        %v3789 = vrot.slane %v3660, %v3788
        %vm3790 = vcmask 589312
        %v3791 = vsel %vm3790, %v3789, %v3784
        %v3792 = vadd.s32 %v3731, 4294967224
        %v3793 = vlaneseq
        %v3794 = vshrl.u32 %v3793, 7
        %v3795 = vsub.s32 %v3792, %v3794
        %v3796 = vrot.slane %v3663, %v3795
        %vm3797 = vcmask 654912
        %v3798 = vsel %vm3797, %v3796, %v3791
        %v3799 = vadd.s32 %v3731, 4294967216
        %v3800 = vlaneseq
        %v3801 = vshrl.u32 %v3800, 7
        %v3802 = vsub.s32 %v3799, %v3801
        %v3803 = vrot.slane %v3666, %v3802
        %vm3804 = vcmask 720512
        %v3805 = vsel %vm3804, %v3803, %v3798
        %v3806 = vadd.s32 %v3731, 4294967208
        %v3807 = vlaneseq
        %v3808 = vshrl.u32 %v3807, 7
        %v3809 = vsub.s32 %v3806, %v3808
        %v3810 = vrot.slane %v3669, %v3809
        %vm3811 = vcmask 786112
        %v3812 = vsel %vm3811, %v3810, %v3805
        %v3813 = vadd.s32 %v3731, 4294967200
        %v3814 = vlaneseq
        %v3815 = vshrl.u32 %v3814, 7
        %v3816 = vsub.s32 %v3813, %v3815
        %v3817 = vrot.slane %v3672, %v3816
        %vm3818 = vcmask 851712
        %v3819 = vsel %vm3818, %v3817, %v3812
        %v3820 = vadd.s32 %v3731, 4294967192
        %v3821 = vlaneseq
        %v3822 = vshrl.u32 %v3821, 7
        %v3823 = vsub.s32 %v3820, %v3822
        %v3824 = vrot.slane %v3675, %v3823
        %vm3825 = vcmask 917312
        %v3826 = vsel %vm3825, %v3824, %v3819
        %v3827 = vadd.s32 %v3731, 4294967184
        %v3828 = vlaneseq
        %v3829 = vshrl.u32 %v3828, 7
        %v3830 = vsub.s32 %v3827, %v3829
        %v3831 = vrot.slane %v3678, %v3830
        %vm3832 = vcmask 982912
        %v3833 = vsel %vm3832, %v3831, %v3826
        %v3834 = vadd.s32 %v3731, 4294967176
        %v3835 = vlaneseq
        %v3836 = vshrl.u32 %v3835, 7
        %v3837 = vsub.s32 %v3834, %v3836
        %v3838 = vrot.slane %v3681, %v3837
        %vm3839 = vcmask 1048512
        %v3840 = vsel %vm3839, %v3838, %v3833
        %v3841 = vlaneseq
        %v3842 = vshrl.u32 %v3841, 7
        %v3843 = vsub.s32 %v3731, %v3842
        %v3844 = vrot.slane %v3684, %v3843
        %v3845 = vlaneseq
        %v3846 = vshrl.u32 %v3845, 7
        %v3847 = vsub.s32 %v3736, %v3846
        %v3848 = vrot.slane %v3687, %v3847
        %v3849 = vsel %vm3741, %v3848, %v3844
        %v3850 = vlaneseq
        %v3851 = vshrl.u32 %v3850, 7
        %v3852 = vsub.s32 %v3743, %v3851
        %v3853 = vrot.slane %v3690, %v3852
        %v3854 = vsel %vm3748, %v3853, %v3849
        %v3855 = vlaneseq
        %v3856 = vshrl.u32 %v3855, 7
        %v3857 = vsub.s32 %v3750, %v3856
        %v3858 = vrot.slane %v3693, %v3857
        %v3859 = vsel %vm3755, %v3858, %v3854
        %v3860 = vlaneseq
        %v3861 = vshrl.u32 %v3860, 7
        %v3862 = vsub.s32 %v3757, %v3861
        %v3863 = vrot.slane %v3696, %v3862
        %v3864 = vsel %vm3762, %v3863, %v3859
        %v3865 = vlaneseq
        %v3866 = vshrl.u32 %v3865, 7
        %v3867 = vsub.s32 %v3764, %v3866
        %v3868 = vrot.slane %v3699, %v3867
        %v3869 = vsel %vm3769, %v3868, %v3864
        %v3870 = vlaneseq
        %v3871 = vshrl.u32 %v3870, 7
        %v3872 = vsub.s32 %v3771, %v3871
        %v3873 = vrot.slane %v3702, %v3872
        %v3874 = vsel %vm3776, %v3873, %v3869
        %v3875 = vlaneseq
        %v3876 = vshrl.u32 %v3875, 7
        %v3877 = vsub.s32 %v3778, %v3876
        %v3878 = vrot.slane %v3705, %v3877
        %v3879 = vsel %vm3783, %v3878, %v3874
        %v3880 = vlaneseq
        %v3881 = vshrl.u32 %v3880, 7
        %v3882 = vsub.s32 %v3785, %v3881
        %v3883 = vrot.slane %v3708, %v3882
        %v3884 = vsel %vm3790, %v3883, %v3879
        %v3885 = vlaneseq
        %v3886 = vshrl.u32 %v3885, 7
        %v3887 = vsub.s32 %v3792, %v3886
        %v3888 = vrot.slane %v3711, %v3887
        %v3889 = vsel %vm3797, %v3888, %v3884
        %v3890 = vlaneseq
        %v3891 = vshrl.u32 %v3890, 7
        %v3892 = vsub.s32 %v3799, %v3891
        %v3893 = vrot.slane %v3714, %v3892
        %v3894 = vsel %vm3804, %v3893, %v3889
        %v3895 = vlaneseq
        %v3896 = vshrl.u32 %v3895, 7
        %v3897 = vsub.s32 %v3806, %v3896
        %v3898 = vrot.slane %v3717, %v3897
        %v3899 = vsel %vm3811, %v3898, %v3894
        %v3900 = vlaneseq
        %v3901 = vshrl.u32 %v3900, 7
        %v3902 = vsub.s32 %v3813, %v3901
        %v3903 = vrot.slane %v3720, %v3902
        %v3904 = vsel %vm3818, %v3903, %v3899
        %v3905 = vlaneseq
        %v3906 = vshrl.u32 %v3905, 7
        %v3907 = vsub.s32 %v3820, %v3906
        %v3908 = vrot.slane %v3723, %v3907
        %v3909 = vsel %vm3825, %v3908, %v3904
        %v3910 = vlaneseq
        %v3911 = vshrl.u32 %v3910, 7
        %v3912 = vsub.s32 %v3827, %v3911
        %v3913 = vrot.slane %v3726, %v3912
        %v3914 = vsel %vm3832, %v3913, %v3909
        %v3915 = vlaneseq
        %v3916 = vshrl.u32 %v3915, 7
        %v3917 = vsub.s32 %v3834, %v3916
        %v3918 = vrot.slane %v3729, %v3917
        %v3919 = vsel %vm3839, %v3918, %v3914
        %v3920 = vcombine.low %v3840, %v3919
        %v3922 = vunpack.c.l.s4 1966171168
        %v3923 = vunpack.c.0.s8 %v3922
        %v3924 = vlaneseq
        %v3925 = vshrl.u32 %v3924, 7
        %v3926 = vsub.s32 %v3923, %v3925
        %v3927 = vrot.slane %v3920, %v3926
        %v3929 = vunpack.c.l.s4 1966171168
        %v3930 = vunpack.c.0.s8 %v3929
        %v3931 = vlaneseq
        %v3932 = vshrl.u32 %v3931, 7
        %v3933 = vsub.s32 %v3930, %v3932
        %v3934 = vrot.slane %v3927, %v3933
        %v3936 = vlaneseq
        %vm3937 = vcmp.ge.s32.totalorder %v3936, 0
        %vm3938 = vcmp.lt.s32.totalorder %v3936, 256
        %vm3939 = vmand %vm3937, %vm3938
        %3940 = vst.msk [vmem:[%s231] sm:$0x3] %vm3939, %v3934
        %s3941 = sand.u32 %s138, 1
        %s3942 = scalar_lea.sflag [#allocation4], %s3941
        %s3943 = sand.u32 %s138, 1
        %s3944 = smul.addr %s3943, 2
        %s3945 = scalar_lea.vmem [#allocation3], %s3944
        // Predicated region
        $region41: #{tpu_custom_call.1} parent=39 // pred_check
          %p3946 = pneg %p148
        $region42: #{tpu_custom_call.1} parent=39 // pred_check_branch
          %3948 = sbr.rel (%p3946) target = $region44
        $region43: #{tpu_custom_call.1} parent=39 // pred_region
          %s3949 = smul.u32 2, %s20
          %s3951 = ssub.s32 32, 32
          %3952 = vsyncadd %s3942, %s3951
          %s3953 = smul.addr %s3949, 16
          %s3954 = scalar_lea.hbm %s5, %s3953
          %s3956 = sshll.u32 %s3945, 4
          %s3957 = int_to_ptr.vmem [resolvable:$true] %s3956
          %3959 = dma.vmem_to_hbm [thread:$0]  %s3957, 32, %s3954, %s3942
        $region44: #{tpu_custom_call.1} parent=39 // pred_fallthru
          _
      $region40: #{tpu_custom_call.1} parent=5 // pred_fallthru
        _
      %p3960 = scmp.le.s32.totalorder 2, %s15
      // Predicated region
      $region45: #{tpu_custom_call.1} parent=5 // pred_check
        %p3961 = pneg %p3960
      $region46: #{tpu_custom_call.1} parent=5 // pred_check_branch
        %3963 = sbr.rel (%p3961) target = $region48
      $region47: #{tpu_custom_call.1} parent=5 // pred_region
        %s3964 = ssub.s32 %s15, 2
        // Predicated region
        $region49: #{tpu_custom_call.1} parent=47 // pred_check
          %p3965 = pneg %p154
        $region50: #{tpu_custom_call.1} parent=47 // pred_check_branch
          %3967 = sbr.rel (%p3965) target = $region52
        $region51: #{tpu_custom_call.1} parent=47 // pred_region
          %s3968 = sand.u32 %s139, 1
          %s3969 = scalar_lea.sflag [#allocation4], %s3968
          %s3970 = sand.u32 %s139, 1
          %s3971 = smul.addr %s3970, 2
          %s3972 = scalar_lea.vmem [#allocation3], %s3971
          %3973 = dma.done %s3969, 32
        $region52: #{tpu_custom_call.1} parent=47 // pred_fallthru
          _
      $region48: #{tpu_custom_call.1} parent=5 // pred_fallthru
        _
    $region6: #{tpu_custom_call.1} parent=1 // loop_footer
      %s19 = sadd.s32 1, %s15
    $region7: #{tpu_custom_call.1} parent=1 // loop_footer_branch
      %14 = sbr.rel target = $region3
    $region8: #{tpu_custom_call.1} parent=1 // loop_exit
      _
    %3974 = vsyncpa [#allocation4], 1
    %s3975 = scalar_lea.sflag [#allocation4], 1
    %3976 = vsyncpa %s3975, 1

</llo_original>
